<compile_context>
chip_gen: v6e
topology: v6e:2x2x1
jax: 0.10.0
libtpu: 0.0.40
codegen_flags: <defaults>
</compile_context>

<pallas_src>
import functools
import math

import jax
import jax.numpy as jnp
import numpy as np
from jax.experimental import pallas as pl
from jax.experimental.pallas import tpu as pltpu


def lstm_lm_kernel(emb_ref, pre_g_ref, pre_b_ref,
                   w_ih_ref, w_hh_ref, b_ref,
                   post_g_ref, post_b_ref,
                   fc_wt_ref, fc_b_ref,
                   logits_ref, buf_ref, xg_ref,
                   *, seq_len, batch_pad):
    """All refs live in VMEM (small model, no grid).

    emb_ref:    (T*Bp, D) bf16   scaled embeddings, time-major, batch padded to Bp
    pre_*/post_*: (1, D) f32     LayerNorm gamma/beta
    w_ih_ref:   (L, D, 4D) bf16  fused input->gate weights, "x @ W", gate order (i|f|g|o)
    w_hh_ref:   (L, D, 4D) bf16  fused hidden->gate weights
    b_ref:      (L, 1, 4D) f32   combined bias b_ih + b_hh
    fc_wt_ref:  (D, Vp) bf16     tied output projection (embedding.T), vocab padded to 128k
    fc_b_ref:   (1, Vp) f32
    logits_ref: (T*Bp, Vp) f32   output
    buf_ref:    (T*Bp, D) bf16   scratch: current layer's activations (matmul operand dtype)
    xg_ref:     (T*Bp, 4D) f32   scratch: hoisted x @ W_ih_all + b for the current layer
    """
    N, D = buf_ref.shape
    L = w_ih_ref.shape[0]
    T, Bp = seq_len, batch_pad
    eps = 1e-5

    def layer_norm(v, g, b):                       # f32 statistics
        mu = jnp.mean(v, axis=-1, keepdims=True)
        var = jnp.mean(jnp.square(v - mu), axis=-1, keepdims=True)
        return (v - mu) * jax.lax.rsqrt(var + eps) * g + b

    # prenorm (input_dropout = identity); store bf16 activations for the MXU.
    x0 = layer_norm(emb_ref[...].astype(jnp.float32), pre_g_ref[...], pre_b_ref[...])
    buf_ref[...] = x0.astype(buf_ref.dtype)

    # Stacked LSTM, torch.nn.LSTM gate order (i, f, g, o), gates fused along 4D.
    for l in range(L):
        # Hoisted input projection for the whole sequence: one big (N, D)@(D, 4D)
        # MXU op + bias, off the serial critical path.
        xg_ref[...] = (jnp.dot(buf_ref[...], w_ih_ref[l],
                               preferred_element_type=jnp.float32)
                       + b_ref[l])
        wh = w_hh_ref[l]                           # (D, 4D) bf16, loaded once per layer

        def step(t, carry):
            h, c = carry                           # f32 recurrent state
            row = pl.multiple_of(t * Bp, Bp)       # sublane-aligned (Bp multiple of 8)
            gates = (xg_ref[pl.ds(row, Bp), :]
                     + jnp.dot(h.astype(wh.dtype), wh,
                               preferred_element_type=jnp.float32))  # (Bp, 4D) f32
            i_g = jax.nn.sigmoid(gates[:, 0 * D:1 * D])
            f_g = jax.nn.sigmoid(gates[:, 1 * D:2 * D])
            g_g = jnp.tanh(gates[:, 2 * D:3 * D])
            o_g = jax.nn.sigmoid(gates[:, 3 * D:4 * D])
            c_new = f_g * c + i_g * g_g
            h_new = o_g * jnp.tanh(c_new)
            # Safe in-place overwrite: slot t of the previous layer was consumed
            # by the hoisted projection above.
            buf_ref[pl.ds(row, Bp), :] = h_new.astype(buf_ref.dtype)
            return h_new, c_new

        h0 = jnp.zeros((Bp, D), jnp.float32)
        c0 = jnp.zeros((Bp, D), jnp.float32)
        # T is static and small: fully unroll so the scheduler can overlap the
        # h @ W_hh push of step t+1 with the elementwise tail of step t.
        jax.lax.fori_loop(0, T, step, (h0, c0), unroll=True)

    # postnorm (output_dropout = identity) + tied projection, lane-dense Vp.
    out = layer_norm(buf_ref[...].astype(jnp.float32),
                     post_g_ref[...], post_b_ref[...])
    logits_ref[...] = (jnp.dot(out.astype(fc_wt_ref.dtype), fc_wt_ref[...],
                               preferred_element_type=jnp.float32)
                       + fc_b_ref[...])


def init_params(key, vocab_size, d_model, num_layers):
    ks = jax.random.split(key, 9)
    k = 1.0 / math.sqrt(d_model)
    emb = jax.random.normal(ks[0], (vocab_size, d_model), jnp.float32) * 0.1
    return dict(
        emb=emb,
        pre_g=1.0 + 0.1 * jax.random.normal(ks[1], (1, d_model), jnp.float32),
        pre_b=0.1 * jax.random.normal(ks[2], (1, d_model), jnp.float32),
        post_g=1.0 + 0.1 * jax.random.normal(ks[3], (1, d_model), jnp.float32),
        post_b=0.1 * jax.random.normal(ks[4], (1, d_model), jnp.float32),
        # Fused gate weights, "x @ W" orientation, columns ordered (i|f|g|o).
        w_ih=jax.random.uniform(ks[5], (num_layers, d_model, 4 * d_model),
                                jnp.float32, -k, k),
        w_hh=jax.random.uniform(ks[6], (num_layers, d_model, 4 * d_model),
                                jnp.float32, -k, k),
        # combined b_ih + b_hh, fused along 4D.
        b=jax.random.uniform(ks[7], (num_layers, 1, 4 * d_model),
                             jnp.float32, -k, k),
        fc_b=0.01 * jax.random.normal(ks[8], (1, vocab_size), jnp.float32),
    )


def lstm_lm_forward(token_ids, params):
    """token_ids: (B, T) int32 -> logits (B, T, V) float32 (sample=False path)."""
    B, T = token_ids.shape
    V, D = params['emb'].shape

    Bp = ((B + 7) // 8) * 8          # pad batch to a full sublane group
    Vp = ((V + 127) // 128) * 128    # pad vocab so the logits store is lane-dense

    # Glue: embedding gather + sqrt(d_model) scale; go time-major, pad batch, flatten.
    emb = params['emb'][token_ids] * math.sqrt(D)                 # (B, T, D) f32
    emb_t = jnp.transpose(emb, (1, 0, 2))                         # (T, B, D)
    emb_t = jnp.pad(emb_t, ((0, 0), (0, Bp - B), (0, 0)))         # (T, Bp, D)
    emb_flat = emb_t.reshape(T * Bp, D).astype(jnp.bfloat16)

    # bf16 matmul operands; biases / LN params stay f32. Weight tying: fc = emb.T.
    w_ih = params['w_ih'].astype(jnp.bfloat16)
    w_hh = params['w_hh'].astype(jnp.bfloat16)
    fc_wt = jnp.pad(params['emb'].T, ((0, 0), (0, Vp - V))).astype(jnp.bfloat16)
    fc_b = jnp.pad(params['fc_b'], ((0, 0), (0, Vp - V)))

    vspec = pl.BlockSpec(memory_space=pltpu.MemorySpace.VMEM)
    kern = functools.partial(lstm_lm_kernel, seq_len=T, batch_pad=Bp)
    # TODO(synk): at production sizes (D=512+, V=32k+), tile fc_wt/logits over a
    # grid and stream per-layer LSTM weights from HBM instead of this no-grid
    # all-in-VMEM layout (required on v7x's 64 MiB VMEM; also enables 2nd TC).
    logits2d = pl.pallas_call(
        kern,
        out_shape=jax.ShapeDtypeStruct((T * Bp, Vp), jnp.float32),
        in_specs=[vspec] * 10,
        out_specs=vspec,
        scratch_shapes=[
            pltpu.VMEM((T * Bp, D), jnp.bfloat16),      # current layer activations
            pltpu.VMEM((T * Bp, 4 * D), jnp.float32),   # hoisted x @ W_ih + b
        ],
        compiler_params=pltpu.CompilerParams(
            vmem_limit_bytes=32 * 1024 * 1024),
    )(emb_flat, params['pre_g'], params['pre_b'],
      w_ih, w_hh, params['b'],
      params['post_g'], params['post_b'],
      fc_wt, fc_b)

    logits = logits2d.reshape(T, Bp, Vp)[:, :B, :V]               # drop padding
    return jnp.transpose(logits, (1, 0, 2))                       # (B, T, V)


def reference_forward(token_ids, params):
    """Pure-JAX f32 reference mirroring the PyTorch module (eval mode)."""
    V, D = params['emb'].shape
    L = params['w_ih'].shape[0]

    def ln(v, g, b):
        mu = v.mean(-1, keepdims=True)
        var = ((v - mu) ** 2).mean(-1, keepdims=True)
        return (v - mu) / jnp.sqrt(var + 1e-5) * g + b

    x = params['emb'][token_ids] * math.sqrt(D)                   # (B, T, D)
    x = ln(x, params['pre_g'][0], params['pre_b'][0])
    B, T, _ = x.shape
    for l in range(L):
        h = jnp.zeros((B, D), jnp.float32)
        c = jnp.zeros((B, D), jnp.float32)
        outs = []
        for t in range(T):
            xt = x[:, t, :]
            gates = xt @ params['w_ih'][l] + h @ params['w_hh'][l] + params['b'][l]
            i = jax.nn.sigmoid(gates[:, 0 * D:1 * D])
            f = jax.nn.sigmoid(gates[:, 1 * D:2 * D])
            g = jnp.tanh(gates[:, 2 * D:3 * D])
            o = jax.nn.sigmoid(gates[:, 3 * D:4 * D])
            c = f * c + i * g
            h = o * jnp.tanh(c)
            outs.append(h)
        x = jnp.stack(outs, axis=1)
    x = ln(x, params['post_g'][0], params['post_b'][0])
    return x @ params['emb'].T + params['fc_b'][0]


if __name__ == "__main__":
    # Small, module-consistent shapes.
    VOCAB, D_MODEL, NUM_LAYERS = 64, 32, 2
    B, T = 2, 8

    root = jax.random.PRNGKey(0)
    kp, kx = jax.random.split(root)
    params = init_params(kp, VOCAB, D_MODEL, NUM_LAYERS)
    token_ids = jax.random.randint(kx, (B, T), 0, VOCAB, dtype=jnp.int32)

    logits = jax.block_until_ready(lstm_lm_forward(token_ids, params))
    assert logits.shape == (B, T, VOCAB) and logits.dtype == jnp.float32

    ref = jax.block_until_ready(reference_forward(token_ids, params))
    # bf16 matmul operands vs f32 reference -> slightly loosened tolerance.
    np.testing.assert_allclose(np.asarray(logits), np.asarray(ref),
                               atol=5e-2, rtol=5e-2)

    # TODO(synk): sample=True path (softmax + multinomial) and .prompt() loop are
    # host-side autoregressive control flow, not part of the kernel hot path.
    print("KERNEL_OK")
</pallas_src>

<mosaic_0001>
module attributes {stable_mosaic.version = 11 : i64} {
  func.func @lstm_lm_kernel(%arg0: memref<64x32xbf16, #tpu.memory_space<vmem>>, %arg1: memref<1x32xf32, #tpu.memory_space<vmem>>, %arg2: memref<1x32xf32, #tpu.memory_space<vmem>>, %arg3: memref<2x32x128xbf16, #tpu.memory_space<vmem>>, %arg4: memref<2x32x128xbf16, #tpu.memory_space<vmem>>, %arg5: memref<2x1x128xf32, #tpu.memory_space<vmem>>, %arg6: memref<1x32xf32, #tpu.memory_space<vmem>>, %arg7: memref<1x32xf32, #tpu.memory_space<vmem>>, %arg8: memref<32x128xbf16, #tpu.memory_space<vmem>>, %arg9: memref<1x128xf32, #tpu.memory_space<vmem>>, %arg10: memref<64x128xf32, #tpu.memory_space<vmem>>, %arg11: memref<64x32xbf16, #tpu.memory_space<vmem>>, %arg12: memref<64x128xf32, #tpu.memory_space<vmem>>) attributes {dimension_semantics = [], scalar_prefetch = 0 : i64, scratch_operands = 2 : i64, tpu.core_type = #tpu.core_type<tc>} {
    %c0 = arith.constant 0 : index
    %c0_0 = arith.constant 0 : index
    %0 = vector.load %arg0[%c0, %c0_0] : memref<64x32xbf16, #tpu.memory_space<vmem>>, vector<64x32xbf16>
    %1 = arith.extf %0 : vector<64x32xbf16> to vector<64x32xf32>
    %c0_1 = arith.constant 0 : index
    %c0_2 = arith.constant 0 : index
    %2 = vector.load %arg1[%c0_1, %c0_2] : memref<1x32xf32, #tpu.memory_space<vmem>>, vector<1x32xf32>
    %c0_3 = arith.constant 0 : index
    %c0_4 = arith.constant 0 : index
    %3 = vector.load %arg2[%c0_3, %c0_4] : memref<1x32xf32, #tpu.memory_space<vmem>>, vector<1x32xf32>
    %cst = arith.constant dense<0.000000e+00> : vector<64xf32>
    %4 = vector.multi_reduction <add>, %1, %cst [1] : vector<64x32xf32> to vector<64xf32>
    %5 = vector.shape_cast %4 : vector<64xf32> to vector<64x1xf32>
    %cst_5 = arith.constant 3.200000e+01 : f32
    %6 = vector.broadcast %cst_5 : f32 to vector<64x1xf32>
    %7 = arith.divf %5, %6 : vector<64x1xf32>
    %8 = vector.broadcast %7 : vector<64x1xf32> to vector<64x32xf32>
    %9 = arith.subf %1, %8 : vector<64x32xf32>
    %10 = arith.mulf %9, %9 : vector<64x32xf32>
    %cst_6 = arith.constant dense<0.000000e+00> : vector<64xf32>
    %11 = vector.multi_reduction <add>, %10, %cst_6 [1] : vector<64x32xf32> to vector<64xf32>
    %12 = vector.shape_cast %11 : vector<64xf32> to vector<64x1xf32>
    %cst_7 = arith.constant 3.200000e+01 : f32
    %13 = vector.broadcast %cst_7 : f32 to vector<64x1xf32>
    %14 = arith.divf %12, %13 : vector<64x1xf32>
    %15 = vector.broadcast %7 : vector<64x1xf32> to vector<64x32xf32>
    %16 = arith.subf %1, %15 : vector<64x32xf32>
    %cst_8 = arith.constant 9.99999974E-6 : f32
    %17 = vector.broadcast %cst_8 : f32 to vector<64x1xf32>
    %18 = arith.addf %14, %17 : vector<64x1xf32>
    %19 = math.rsqrt %18 : vector<64x1xf32>
    %20 = vector.broadcast %19 : vector<64x1xf32> to vector<64x32xf32>
    %21 = arith.mulf %16, %20 : vector<64x32xf32>
    %22 = vector.broadcast %2 : vector<1x32xf32> to vector<64x32xf32>
    %23 = arith.mulf %21, %22 : vector<64x32xf32>
    %24 = vector.broadcast %3 : vector<1x32xf32> to vector<64x32xf32>
    %25 = arith.addf %23, %24 : vector<64x32xf32>
    %26 = arith.truncf %25 : vector<64x32xf32> to vector<64x32xbf16>
    %c0_9 = arith.constant 0 : index
    %c0_10 = arith.constant 0 : index
    %27 = vector.load %arg11[%c0_9, %c0_10] : memref<64x32xbf16, #tpu.memory_space<vmem>>, vector<64x32xbf16>
    tpu.vector_store %arg11[%c0_9, %c0_10], %26 {strides = array<i32>} : memref<64x32xbf16, #tpu.memory_space<vmem>>, vector<64x32xbf16>,
    %c0_11 = arith.constant 0 : index
    %c0_12 = arith.constant 0 : index
    %28 = vector.load %arg11[%c0_11, %c0_12] : memref<64x32xbf16, #tpu.memory_space<vmem>>, vector<64x32xbf16>
    %c0_13 = arith.constant 0 : index
    %c0_14 = arith.constant 0 : index
    %c0_15 = arith.constant 0 : index
    %29 = vector.load %arg3[%c0_13, %c0_14, %c0_15] : memref<2x32x128xbf16, #tpu.memory_space<vmem>>, vector<1x32x128xbf16>
    %30 = vector.shape_cast %29 : vector<1x32x128xbf16> to vector<32x128xbf16>
    %cst_16 = arith.constant dense<0.000000e+00> : vector<64x128xf32>
    %31 = tpu.matmul %28, %30, %cst_16 {dimension_numbers = #tpu.dot_dimension_numbers<[1], [0], [0], [1], [0, 0, 1, 1], [], []>} : vector<64x32xbf16>, vector<32x128xbf16>, vector<64x128xf32> -> vector<64x128xf32>
    %c0_17 = arith.constant 0 : index
    %c0_18 = arith.constant 0 : index
    %c0_19 = arith.constant 0 : index
    %32 = vector.load %arg5[%c0_17, %c0_18, %c0_19] : memref<2x1x128xf32, #tpu.memory_space<vmem>>, vector<1x1x128xf32>
    %33 = vector.shape_cast %32 : vector<1x1x128xf32> to vector<1x128xf32>
    %34 = vector.broadcast %33 : vector<1x128xf32> to vector<64x128xf32>
    %35 = arith.addf %31, %34 : vector<64x128xf32>
    %c0_20 = arith.constant 0 : index
    %c0_21 = arith.constant 0 : index
    %36 = vector.load %arg12[%c0_20, %c0_21] : memref<64x128xf32, #tpu.memory_space<vmem>>, vector<64x128xf32>
    tpu.vector_store %arg12[%c0_20, %c0_21], %35 {strides = array<i32>} : memref<64x128xf32, #tpu.memory_space<vmem>>, vector<64x128xf32>,
    %c0_22 = arith.constant 0 : index
    %c0_23 = arith.constant 0 : index
    %c0_24 = arith.constant 0 : index
    %37 = vector.load %arg4[%c0_22, %c0_23, %c0_24] : memref<2x32x128xbf16, #tpu.memory_space<vmem>>, vector<1x32x128xbf16>
    %38 = vector.shape_cast %37 : vector<1x32x128xbf16> to vector<32x128xbf16>
    %cst_25 = arith.constant 0.000000e+00 : f32
    %39 = vector.broadcast %cst_25 : f32 to vector<8x32xf32>
    %cst_26 = arith.constant 0.000000e+00 : f32
    %40 = vector.broadcast %cst_26 : f32 to vector<8x32xf32>
    %c0_i32 = arith.constant 0 : i32
    %c8_i32 = arith.constant 8 : i32
    %41 = arith.muli %c0_i32, %c8_i32 : i32
    %42 = tpu.assume_multiple %41, 8 : i32
    %43 = arith.index_cast %42 : i32 to index
    %c0_27 = arith.constant 0 : index
    %44 = vector.load %arg12[%43, %c0_27] : memref<64x128xf32, #tpu.memory_space<vmem>>, vector<8x128xf32>
    %45 = arith.truncf %39 : vector<8x32xf32> to vector<8x32xbf16>
    %cst_28 = arith.constant dense<0.000000e+00> : vector<8x128xf32>
    %46 = tpu.matmul %45, %38, %cst_28 {dimension_numbers = #tpu.dot_dimension_numbers<[1], [0], [0], [1], [0, 0, 1, 1], [], []>} : vector<8x32xbf16>, vector<32x128xbf16>, vector<8x128xf32> -> vector<8x128xf32>
    %47 = arith.addf %44, %46 : vector<8x128xf32>
    %48 = vector.extract_strided_slice %47 {offsets = [0, 0], sizes = [8, 32], strides = [1, 1]} : vector<8x128xf32> to vector<8x32xf32>
    %49 = arith.negf %48 : vector<8x32xf32>
    %50 = math.exp %49 : vector<8x32xf32>
    %cst_29 = arith.constant 1.000000e+00 : f32
    %51 = vector.broadcast %cst_29 : f32 to vector<8x32xf32>
    %52 = arith.addf %51, %50 : vector<8x32xf32>
    %53 = arith.divf %51, %52 : vector<8x32xf32>
    %54 = vector.extract_strided_slice %47 {offsets = [0, 32], sizes = [8, 32], strides = [1, 1]} : vector<8x128xf32> to vector<8x32xf32>
    %55 = arith.negf %54 : vector<8x32xf32>
    %56 = math.exp %55 : vector<8x32xf32>
    %cst_30 = arith.constant 1.000000e+00 : f32
    %57 = vector.broadcast %cst_30 : f32 to vector<8x32xf32>
    %58 = arith.addf %57, %56 : vector<8x32xf32>
    %59 = arith.divf %57, %58 : vector<8x32xf32>
    %60 = vector.extract_strided_slice %47 {offsets = [0, 64], sizes = [8, 32], strides = [1, 1]} : vector<8x128xf32> to vector<8x32xf32>
    %61 = math.tanh %60 : vector<8x32xf32>
    %62 = vector.extract_strided_slice %47 {offsets = [0, 96], sizes = [8, 32], strides = [1, 1]} : vector<8x128xf32> to vector<8x32xf32>
    %63 = arith.negf %62 : vector<8x32xf32>
    %64 = math.exp %63 : vector<8x32xf32>
    %cst_31 = arith.constant 1.000000e+00 : f32
    %65 = vector.broadcast %cst_31 : f32 to vector<8x32xf32>
    %66 = arith.addf %65, %64 : vector<8x32xf32>
    %67 = arith.divf %65, %66 : vector<8x32xf32>
    %68 = arith.mulf %59, %40 : vector<8x32xf32>
    %69 = arith.mulf %53, %61 : vector<8x32xf32>
    %70 = arith.addf %68, %69 : vector<8x32xf32>
    %71 = math.tanh %70 : vector<8x32xf32>
    %72 = arith.mulf %67, %71 : vector<8x32xf32>
    %73 = arith.truncf %72 : vector<8x32xf32> to vector<8x32xbf16>
    %74 = arith.index_cast %42 : i32 to index
    %c0_32 = arith.constant 0 : index
    %75 = vector.load %arg11[%74, %c0_32] : memref<64x32xbf16, #tpu.memory_space<vmem>>, vector<8x32xbf16>
    tpu.vector_store %arg11[%74, %c0_32], %73 {strides = array<i32>} : memref<64x32xbf16, #tpu.memory_space<vmem>>, vector<8x32xbf16>,
    %c1_i32 = arith.constant 1 : i32
    %c8_i32_33 = arith.constant 8 : i32
    %76 = arith.muli %c1_i32, %c8_i32_33 : i32
    %77 = tpu.assume_multiple %76, 8 : i32
    %78 = arith.index_cast %77 : i32 to index
    %c0_34 = arith.constant 0 : index
    %79 = vector.load %arg12[%78, %c0_34] : memref<64x128xf32, #tpu.memory_space<vmem>>, vector<8x128xf32>
    %80 = arith.truncf %72 : vector<8x32xf32> to vector<8x32xbf16>
    %cst_35 = arith.constant dense<0.000000e+00> : vector<8x128xf32>
    %81 = tpu.matmul %80, %38, %cst_35 {dimension_numbers = #tpu.dot_dimension_numbers<[1], [0], [0], [1], [0, 0, 1, 1], [], []>} : vector<8x32xbf16>, vector<32x128xbf16>, vector<8x128xf32> -> vector<8x128xf32>
    %82 = arith.addf %79, %81 : vector<8x128xf32>
    %83 = vector.extract_strided_slice %82 {offsets = [0, 0], sizes = [8, 32], strides = [1, 1]} : vector<8x128xf32> to vector<8x32xf32>
    %84 = arith.negf %83 : vector<8x32xf32>
    %85 = math.exp %84 : vector<8x32xf32>
    %cst_36 = arith.constant 1.000000e+00 : f32
    %86 = vector.broadcast %cst_36 : f32 to vector<8x32xf32>
    %87 = arith.addf %86, %85 : vector<8x32xf32>
    %88 = arith.divf %86, %87 : vector<8x32xf32>
    %89 = vector.extract_strided_slice %82 {offsets = [0, 32], sizes = [8, 32], strides = [1, 1]} : vector<8x128xf32> to vector<8x32xf32>
    %90 = arith.negf %89 : vector<8x32xf32>
    %91 = math.exp %90 : vector<8x32xf32>
    %cst_37 = arith.constant 1.000000e+00 : f32
    %92 = vector.broadcast %cst_37 : f32 to vector<8x32xf32>
    %93 = arith.addf %92, %91 : vector<8x32xf32>
    %94 = arith.divf %92, %93 : vector<8x32xf32>
    %95 = vector.extract_strided_slice %82 {offsets = [0, 64], sizes = [8, 32], strides = [1, 1]} : vector<8x128xf32> to vector<8x32xf32>
    %96 = math.tanh %95 : vector<8x32xf32>
    %97 = vector.extract_strided_slice %82 {offsets = [0, 96], sizes = [8, 32], strides = [1, 1]} : vector<8x128xf32> to vector<8x32xf32>
    %98 = arith.negf %97 : vector<8x32xf32>
    %99 = math.exp %98 : vector<8x32xf32>
    %cst_38 = arith.constant 1.000000e+00 : f32
    %100 = vector.broadcast %cst_38 : f32 to vector<8x32xf32>
    %101 = arith.addf %100, %99 : vector<8x32xf32>
    %102 = arith.divf %100, %101 : vector<8x32xf32>
    %103 = arith.mulf %94, %70 : vector<8x32xf32>
    %104 = arith.mulf %88, %96 : vector<8x32xf32>
    %105 = arith.addf %103, %104 : vector<8x32xf32>
    %106 = math.tanh %105 : vector<8x32xf32>
    %107 = arith.mulf %102, %106 : vector<8x32xf32>
    %108 = arith.truncf %107 : vector<8x32xf32> to vector<8x32xbf16>
    %109 = arith.index_cast %77 : i32 to index
    %c0_39 = arith.constant 0 : index
    %110 = vector.load %arg11[%109, %c0_39] : memref<64x32xbf16, #tpu.memory_space<vmem>>, vector<8x32xbf16>
    tpu.vector_store %arg11[%109, %c0_39], %108 {strides = array<i32>} : memref<64x32xbf16, #tpu.memory_space<vmem>>, vector<8x32xbf16>,
    %c2_i32 = arith.constant 2 : i32
    %c8_i32_40 = arith.constant 8 : i32
    %111 = arith.muli %c2_i32, %c8_i32_40 : i32
    %112 = tpu.assume_multiple %111, 8 : i32
    %113 = arith.index_cast %112 : i32 to index
    %c0_41 = arith.constant 0 : index
    %114 = vector.load %arg12[%113, %c0_41] : memref<64x128xf32, #tpu.memory_space<vmem>>, vector<8x128xf32>
    %115 = arith.truncf %107 : vector<8x32xf32> to vector<8x32xbf16>
    %cst_42 = arith.constant dense<0.000000e+00> : vector<8x128xf32>
    %116 = tpu.matmul %115, %38, %cst_42 {dimension_numbers = #tpu.dot_dimension_numbers<[1], [0], [0], [1], [0, 0, 1, 1], [], []>} : vector<8x32xbf16>, vector<32x128xbf16>, vector<8x128xf32> -> vector<8x128xf32>
    %117 = arith.addf %114, %116 : vector<8x128xf32>
    %118 = vector.extract_strided_slice %117 {offsets = [0, 0], sizes = [8, 32], strides = [1, 1]} : vector<8x128xf32> to vector<8x32xf32>
    %119 = arith.negf %118 : vector<8x32xf32>
    %120 = math.exp %119 : vector<8x32xf32>
    %cst_43 = arith.constant 1.000000e+00 : f32
    %121 = vector.broadcast %cst_43 : f32 to vector<8x32xf32>
    %122 = arith.addf %121, %120 : vector<8x32xf32>
    %123 = arith.divf %121, %122 : vector<8x32xf32>
    %124 = vector.extract_strided_slice %117 {offsets = [0, 32], sizes = [8, 32], strides = [1, 1]} : vector<8x128xf32> to vector<8x32xf32>
    %125 = arith.negf %124 : vector<8x32xf32>
    %126 = math.exp %125 : vector<8x32xf32>
    %cst_44 = arith.constant 1.000000e+00 : f32
    %127 = vector.broadcast %cst_44 : f32 to vector<8x32xf32>
    %128 = arith.addf %127, %126 : vector<8x32xf32>
    %129 = arith.divf %127, %128 : vector<8x32xf32>
    %130 = vector.extract_strided_slice %117 {offsets = [0, 64], sizes = [8, 32], strides = [1, 1]} : vector<8x128xf32> to vector<8x32xf32>
    %131 = math.tanh %130 : vector<8x32xf32>
    %132 = vector.extract_strided_slice %117 {offsets = [0, 96], sizes = [8, 32], strides = [1, 1]} : vector<8x128xf32> to vector<8x32xf32>
    %133 = arith.negf %132 : vector<8x32xf32>
    %134 = math.exp %133 : vector<8x32xf32>
    %cst_45 = arith.constant 1.000000e+00 : f32
    %135 = vector.broadcast %cst_45 : f32 to vector<8x32xf32>
    %136 = arith.addf %135, %134 : vector<8x32xf32>
    %137 = arith.divf %135, %136 : vector<8x32xf32>
    %138 = arith.mulf %129, %105 : vector<8x32xf32>
    %139 = arith.mulf %123, %131 : vector<8x32xf32>
    %140 = arith.addf %138, %139 : vector<8x32xf32>
    %141 = math.tanh %140 : vector<8x32xf32>
    %142 = arith.mulf %137, %141 : vector<8x32xf32>
    %143 = arith.truncf %142 : vector<8x32xf32> to vector<8x32xbf16>
    %144 = arith.index_cast %112 : i32 to index
    %c0_46 = arith.constant 0 : index
    %145 = vector.load %arg11[%144, %c0_46] : memref<64x32xbf16, #tpu.memory_space<vmem>>, vector<8x32xbf16>
    tpu.vector_store %arg11[%144, %c0_46], %143 {strides = array<i32>} : memref<64x32xbf16, #tpu.memory_space<vmem>>, vector<8x32xbf16>,
    %c3_i32 = arith.constant 3 : i32
    %c8_i32_47 = arith.constant 8 : i32
    %146 = arith.muli %c3_i32, %c8_i32_47 : i32
    %147 = tpu.assume_multiple %146, 8 : i32
    %148 = arith.index_cast %147 : i32 to index
    %c0_48 = arith.constant 0 : index
    %149 = vector.load %arg12[%148, %c0_48] : memref<64x128xf32, #tpu.memory_space<vmem>>, vector<8x128xf32>
    %150 = arith.truncf %142 : vector<8x32xf32> to vector<8x32xbf16>
    %cst_49 = arith.constant dense<0.000000e+00> : vector<8x128xf32>
    %151 = tpu.matmul %150, %38, %cst_49 {dimension_numbers = #tpu.dot_dimension_numbers<[1], [0], [0], [1], [0, 0, 1, 1], [], []>} : vector<8x32xbf16>, vector<32x128xbf16>, vector<8x128xf32> -> vector<8x128xf32>
    %152 = arith.addf %149, %151 : vector<8x128xf32>
    %153 = vector.extract_strided_slice %152 {offsets = [0, 0], sizes = [8, 32], strides = [1, 1]} : vector<8x128xf32> to vector<8x32xf32>
    %154 = arith.negf %153 : vector<8x32xf32>
    %155 = math.exp %154 : vector<8x32xf32>
    %cst_50 = arith.constant 1.000000e+00 : f32
    %156 = vector.broadcast %cst_50 : f32 to vector<8x32xf32>
    %157 = arith.addf %156, %155 : vector<8x32xf32>
    %158 = arith.divf %156, %157 : vector<8x32xf32>
    %159 = vector.extract_strided_slice %152 {offsets = [0, 32], sizes = [8, 32], strides = [1, 1]} : vector<8x128xf32> to vector<8x32xf32>
    %160 = arith.negf %159 : vector<8x32xf32>
    %161 = math.exp %160 : vector<8x32xf32>
    %cst_51 = arith.constant 1.000000e+00 : f32
    %162 = vector.broadcast %cst_51 : f32 to vector<8x32xf32>
    %163 = arith.addf %162, %161 : vector<8x32xf32>
    %164 = arith.divf %162, %163 : vector<8x32xf32>
    %165 = vector.extract_strided_slice %152 {offsets = [0, 64], sizes = [8, 32], strides = [1, 1]} : vector<8x128xf32> to vector<8x32xf32>
    %166 = math.tanh %165 : vector<8x32xf32>
    %167 = vector.extract_strided_slice %152 {offsets = [0, 96], sizes = [8, 32], strides = [1, 1]} : vector<8x128xf32> to vector<8x32xf32>
    %168 = arith.negf %167 : vector<8x32xf32>
    %169 = math.exp %168 : vector<8x32xf32>
    %cst_52 = arith.constant 1.000000e+00 : f32
    %170 = vector.broadcast %cst_52 : f32 to vector<8x32xf32>
    %171 = arith.addf %170, %169 : vector<8x32xf32>
    %172 = arith.divf %170, %171 : vector<8x32xf32>
    %173 = arith.mulf %164, %140 : vector<8x32xf32>
    %174 = arith.mulf %158, %166 : vector<8x32xf32>
    %175 = arith.addf %173, %174 : vector<8x32xf32>
    %176 = math.tanh %175 : vector<8x32xf32>
    %177 = arith.mulf %172, %176 : vector<8x32xf32>
    %178 = arith.truncf %177 : vector<8x32xf32> to vector<8x32xbf16>
    %179 = arith.index_cast %147 : i32 to index
    %c0_53 = arith.constant 0 : index
    %180 = vector.load %arg11[%179, %c0_53] : memref<64x32xbf16, #tpu.memory_space<vmem>>, vector<8x32xbf16>
    tpu.vector_store %arg11[%179, %c0_53], %178 {strides = array<i32>} : memref<64x32xbf16, #tpu.memory_space<vmem>>, vector<8x32xbf16>,
    %c4_i32 = arith.constant 4 : i32
    %c8_i32_54 = arith.constant 8 : i32
    %181 = arith.muli %c4_i32, %c8_i32_54 : i32
    %182 = tpu.assume_multiple %181, 8 : i32
    %183 = arith.index_cast %182 : i32 to index
    %c0_55 = arith.constant 0 : index
    %184 = vector.load %arg12[%183, %c0_55] : memref<64x128xf32, #tpu.memory_space<vmem>>, vector<8x128xf32>
    %185 = arith.truncf %177 : vector<8x32xf32> to vector<8x32xbf16>
    %cst_56 = arith.constant dense<0.000000e+00> : vector<8x128xf32>
    %186 = tpu.matmul %185, %38, %cst_56 {dimension_numbers = #tpu.dot_dimension_numbers<[1], [0], [0], [1], [0, 0, 1, 1], [], []>} : vector<8x32xbf16>, vector<32x128xbf16>, vector<8x128xf32> -> vector<8x128xf32>
    %187 = arith.addf %184, %186 : vector<8x128xf32>
    %188 = vector.extract_strided_slice %187 {offsets = [0, 0], sizes = [8, 32], strides = [1, 1]} : vector<8x128xf32> to vector<8x32xf32>
    %189 = arith.negf %188 : vector<8x32xf32>
    %190 = math.exp %189 : vector<8x32xf32>
    %cst_57 = arith.constant 1.000000e+00 : f32
    %191 = vector.broadcast %cst_57 : f32 to vector<8x32xf32>
    %192 = arith.addf %191, %190 : vector<8x32xf32>
    %193 = arith.divf %191, %192 : vector<8x32xf32>
    %194 = vector.extract_strided_slice %187 {offsets = [0, 32], sizes = [8, 32], strides = [1, 1]} : vector<8x128xf32> to vector<8x32xf32>
    %195 = arith.negf %194 : vector<8x32xf32>
    %196 = math.exp %195 : vector<8x32xf32>
    %cst_58 = arith.constant 1.000000e+00 : f32
    %197 = vector.broadcast %cst_58 : f32 to vector<8x32xf32>
    %198 = arith.addf %197, %196 : vector<8x32xf32>
    %199 = arith.divf %197, %198 : vector<8x32xf32>
    %200 = vector.extract_strided_slice %187 {offsets = [0, 64], sizes = [8, 32], strides = [1, 1]} : vector<8x128xf32> to vector<8x32xf32>
    %201 = math.tanh %200 : vector<8x32xf32>
    %202 = vector.extract_strided_slice %187 {offsets = [0, 96], sizes = [8, 32], strides = [1, 1]} : vector<8x128xf32> to vector<8x32xf32>
    %203 = arith.negf %202 : vector<8x32xf32>
    %204 = math.exp %203 : vector<8x32xf32>
    %cst_59 = arith.constant 1.000000e+00 : f32
    %205 = vector.broadcast %cst_59 : f32 to vector<8x32xf32>
    %206 = arith.addf %205, %204 : vector<8x32xf32>
    %207 = arith.divf %205, %206 : vector<8x32xf32>
    %208 = arith.mulf %199, %175 : vector<8x32xf32>
    %209 = arith.mulf %193, %201 : vector<8x32xf32>
    %210 = arith.addf %208, %209 : vector<8x32xf32>
    %211 = math.tanh %210 : vector<8x32xf32>
    %212 = arith.mulf %207, %211 : vector<8x32xf32>
    %213 = arith.truncf %212 : vector<8x32xf32> to vector<8x32xbf16>
    %214 = arith.index_cast %182 : i32 to index
    %c0_60 = arith.constant 0 : index
    %215 = vector.load %arg11[%214, %c0_60] : memref<64x32xbf16, #tpu.memory_space<vmem>>, vector<8x32xbf16>
    tpu.vector_store %arg11[%214, %c0_60], %213 {strides = array<i32>} : memref<64x32xbf16, #tpu.memory_space<vmem>>, vector<8x32xbf16>,
    %c5_i32 = arith.constant 5 : i32
    %c8_i32_61 = arith.constant 8 : i32
    %216 = arith.muli %c5_i32, %c8_i32_61 : i32
    %217 = tpu.assume_multiple %216, 8 : i32
    %218 = arith.index_cast %217 : i32 to index
    %c0_62 = arith.constant 0 : index
    %219 = vector.load %arg12[%218, %c0_62] : memref<64x128xf32, #tpu.memory_space<vmem>>, vector<8x128xf32>
    %220 = arith.truncf %212 : vector<8x32xf32> to vector<8x32xbf16>
    %cst_63 = arith.constant dense<0.000000e+00> : vector<8x128xf32>
    %221 = tpu.matmul %220, %38, %cst_63 {dimension_numbers = #tpu.dot_dimension_numbers<[1], [0], [0], [1], [0, 0, 1, 1], [], []>} : vector<8x32xbf16>, vector<32x128xbf16>, vector<8x128xf32> -> vector<8x128xf32>
    %222 = arith.addf %219, %221 : vector<8x128xf32>
    %223 = vector.extract_strided_slice %222 {offsets = [0, 0], sizes = [8, 32], strides = [1, 1]} : vector<8x128xf32> to vector<8x32xf32>
    %224 = arith.negf %223 : vector<8x32xf32>
    %225 = math.exp %224 : vector<8x32xf32>
    %cst_64 = arith.constant 1.000000e+00 : f32
    %226 = vector.broadcast %cst_64 : f32 to vector<8x32xf32>
    %227 = arith.addf %226, %225 : vector<8x32xf32>
    %228 = arith.divf %226, %227 : vector<8x32xf32>
    %229 = vector.extract_strided_slice %222 {offsets = [0, 32], sizes = [8, 32], strides = [1, 1]} : vector<8x128xf32> to vector<8x32xf32>
    %230 = arith.negf %229 : vector<8x32xf32>
    %231 = math.exp %230 : vector<8x32xf32>
    %cst_65 = arith.constant 1.000000e+00 : f32
    %232 = vector.broadcast %cst_65 : f32 to vector<8x32xf32>
    %233 = arith.addf %232, %231 : vector<8x32xf32>
    %234 = arith.divf %232, %233 : vector<8x32xf32>
    %235 = vector.extract_strided_slice %222 {offsets = [0, 64], sizes = [8, 32], strides = [1, 1]} : vector<8x128xf32> to vector<8x32xf32>
    %236 = math.tanh %235 : vector<8x32xf32>
    %237 = vector.extract_strided_slice %222 {offsets = [0, 96], sizes = [8, 32], strides = [1, 1]} : vector<8x128xf32> to vector<8x32xf32>
    %238 = arith.negf %237 : vector<8x32xf32>
    %239 = math.exp %238 : vector<8x32xf32>
    %cst_66 = arith.constant 1.000000e+00 : f32
    %240 = vector.broadcast %cst_66 : f32 to vector<8x32xf32>
    %241 = arith.addf %240, %239 : vector<8x32xf32>
    %242 = arith.divf %240, %241 : vector<8x32xf32>
    %243 = arith.mulf %234, %210 : vector<8x32xf32>
    %244 = arith.mulf %228, %236 : vector<8x32xf32>
    %245 = arith.addf %243, %244 : vector<8x32xf32>
    %246 = math.tanh %245 : vector<8x32xf32>
    %247 = arith.mulf %242, %246 : vector<8x32xf32>
    %248 = arith.truncf %247 : vector<8x32xf32> to vector<8x32xbf16>
    %249 = arith.index_cast %217 : i32 to index
    %c0_67 = arith.constant 0 : index
    %250 = vector.load %arg11[%249, %c0_67] : memref<64x32xbf16, #tpu.memory_space<vmem>>, vector<8x32xbf16>
    tpu.vector_store %arg11[%249, %c0_67], %248 {strides = array<i32>} : memref<64x32xbf16, #tpu.memory_space<vmem>>, vector<8x32xbf16>,
    %c6_i32 = arith.constant 6 : i32
    %c8_i32_68 = arith.constant 8 : i32
    %251 = arith.muli %c6_i32, %c8_i32_68 : i32
    %252 = tpu.assume_multiple %251, 8 : i32
    %253 = arith.index_cast %252 : i32 to index
    %c0_69 = arith.constant 0 : index
    %254 = vector.load %arg12[%253, %c0_69] : memref<64x128xf32, #tpu.memory_space<vmem>>, vector<8x128xf32>
    %255 = arith.truncf %247 : vector<8x32xf32> to vector<8x32xbf16>
    %cst_70 = arith.constant dense<0.000000e+00> : vector<8x128xf32>
    %256 = tpu.matmul %255, %38, %cst_70 {dimension_numbers = #tpu.dot_dimension_numbers<[1], [0], [0], [1], [0, 0, 1, 1], [], []>} : vector<8x32xbf16>, vector<32x128xbf16>, vector<8x128xf32> -> vector<8x128xf32>
    %257 = arith.addf %254, %256 : vector<8x128xf32>
    %258 = vector.extract_strided_slice %257 {offsets = [0, 0], sizes = [8, 32], strides = [1, 1]} : vector<8x128xf32> to vector<8x32xf32>
    %259 = arith.negf %258 : vector<8x32xf32>
    %260 = math.exp %259 : vector<8x32xf32>
    %cst_71 = arith.constant 1.000000e+00 : f32
    %261 = vector.broadcast %cst_71 : f32 to vector<8x32xf32>
    %262 = arith.addf %261, %260 : vector<8x32xf32>
    %263 = arith.divf %261, %262 : vector<8x32xf32>
    %264 = vector.extract_strided_slice %257 {offsets = [0, 32], sizes = [8, 32], strides = [1, 1]} : vector<8x128xf32> to vector<8x32xf32>
    %265 = arith.negf %264 : vector<8x32xf32>
    %266 = math.exp %265 : vector<8x32xf32>
    %cst_72 = arith.constant 1.000000e+00 : f32
    %267 = vector.broadcast %cst_72 : f32 to vector<8x32xf32>
    %268 = arith.addf %267, %266 : vector<8x32xf32>
    %269 = arith.divf %267, %268 : vector<8x32xf32>
    %270 = vector.extract_strided_slice %257 {offsets = [0, 64], sizes = [8, 32], strides = [1, 1]} : vector<8x128xf32> to vector<8x32xf32>
    %271 = math.tanh %270 : vector<8x32xf32>
    %272 = vector.extract_strided_slice %257 {offsets = [0, 96], sizes = [8, 32], strides = [1, 1]} : vector<8x128xf32> to vector<8x32xf32>
    %273 = arith.negf %272 : vector<8x32xf32>
    %274 = math.exp %273 : vector<8x32xf32>
    %cst_73 = arith.constant 1.000000e+00 : f32
    %275 = vector.broadcast %cst_73 : f32 to vector<8x32xf32>
    %276 = arith.addf %275, %274 : vector<8x32xf32>
    %277 = arith.divf %275, %276 : vector<8x32xf32>
    %278 = arith.mulf %269, %245 : vector<8x32xf32>
    %279 = arith.mulf %263, %271 : vector<8x32xf32>
    %280 = arith.addf %278, %279 : vector<8x32xf32>
    %281 = math.tanh %280 : vector<8x32xf32>
    %282 = arith.mulf %277, %281 : vector<8x32xf32>
    %283 = arith.truncf %282 : vector<8x32xf32> to vector<8x32xbf16>
    %284 = arith.index_cast %252 : i32 to index
    %c0_74 = arith.constant 0 : index
    %285 = vector.load %arg11[%284, %c0_74] : memref<64x32xbf16, #tpu.memory_space<vmem>>, vector<8x32xbf16>
    tpu.vector_store %arg11[%284, %c0_74], %283 {strides = array<i32>} : memref<64x32xbf16, #tpu.memory_space<vmem>>, vector<8x32xbf16>,
    %c7_i32 = arith.constant 7 : i32
    %c8_i32_75 = arith.constant 8 : i32
    %286 = arith.muli %c7_i32, %c8_i32_75 : i32
    %287 = tpu.assume_multiple %286, 8 : i32
    %288 = arith.index_cast %287 : i32 to index
    %c0_76 = arith.constant 0 : index
    %289 = vector.load %arg12[%288, %c0_76] : memref<64x128xf32, #tpu.memory_space<vmem>>, vector<8x128xf32>
    %290 = arith.truncf %282 : vector<8x32xf32> to vector<8x32xbf16>
    %cst_77 = arith.constant dense<0.000000e+00> : vector<8x128xf32>
    %291 = tpu.matmul %290, %38, %cst_77 {dimension_numbers = #tpu.dot_dimension_numbers<[1], [0], [0], [1], [0, 0, 1, 1], [], []>} : vector<8x32xbf16>, vector<32x128xbf16>, vector<8x128xf32> -> vector<8x128xf32>
    %292 = arith.addf %289, %291 : vector<8x128xf32>
    %293 = vector.extract_strided_slice %292 {offsets = [0, 0], sizes = [8, 32], strides = [1, 1]} : vector<8x128xf32> to vector<8x32xf32>
    %294 = arith.negf %293 : vector<8x32xf32>
    %295 = math.exp %294 : vector<8x32xf32>
    %cst_78 = arith.constant 1.000000e+00 : f32
    %296 = vector.broadcast %cst_78 : f32 to vector<8x32xf32>
    %297 = arith.addf %296, %295 : vector<8x32xf32>
    %298 = arith.divf %296, %297 : vector<8x32xf32>
    %299 = vector.extract_strided_slice %292 {offsets = [0, 32], sizes = [8, 32], strides = [1, 1]} : vector<8x128xf32> to vector<8x32xf32>
    %300 = arith.negf %299 : vector<8x32xf32>
    %301 = math.exp %300 : vector<8x32xf32>
    %cst_79 = arith.constant 1.000000e+00 : f32
    %302 = vector.broadcast %cst_79 : f32 to vector<8x32xf32>
    %303 = arith.addf %302, %301 : vector<8x32xf32>
    %304 = arith.divf %302, %303 : vector<8x32xf32>
    %305 = vector.extract_strided_slice %292 {offsets = [0, 64], sizes = [8, 32], strides = [1, 1]} : vector<8x128xf32> to vector<8x32xf32>
    %306 = math.tanh %305 : vector<8x32xf32>
    %307 = vector.extract_strided_slice %292 {offsets = [0, 96], sizes = [8, 32], strides = [1, 1]} : vector<8x128xf32> to vector<8x32xf32>
    %308 = arith.negf %307 : vector<8x32xf32>
    %309 = math.exp %308 : vector<8x32xf32>
    %cst_80 = arith.constant 1.000000e+00 : f32
    %310 = vector.broadcast %cst_80 : f32 to vector<8x32xf32>
    %311 = arith.addf %310, %309 : vector<8x32xf32>
    %312 = arith.divf %310, %311 : vector<8x32xf32>
    %313 = arith.mulf %304, %280 : vector<8x32xf32>
    %314 = arith.mulf %298, %306 : vector<8x32xf32>
    %315 = arith.addf %313, %314 : vector<8x32xf32>
    %316 = math.tanh %315 : vector<8x32xf32>
    %317 = arith.mulf %312, %316 : vector<8x32xf32>
    %318 = arith.truncf %317 : vector<8x32xf32> to vector<8x32xbf16>
    %319 = arith.index_cast %287 : i32 to index
    %c0_81 = arith.constant 0 : index
    %320 = vector.load %arg11[%319, %c0_81] : memref<64x32xbf16, #tpu.memory_space<vmem>>, vector<8x32xbf16>
    tpu.vector_store %arg11[%319, %c0_81], %318 {strides = array<i32>} : memref<64x32xbf16, #tpu.memory_space<vmem>>, vector<8x32xbf16>,
    %c8_i32_82 = arith.constant 8 : i32
    %c0_83 = arith.constant 0 : index
    %c0_84 = arith.constant 0 : index
    %321 = vector.load %arg11[%c0_83, %c0_84] : memref<64x32xbf16, #tpu.memory_space<vmem>>, vector<64x32xbf16>
    %c1 = arith.constant 1 : index
    %c0_85 = arith.constant 0 : index
    %c0_86 = arith.constant 0 : index
    %322 = vector.load %arg3[%c1, %c0_85, %c0_86] : memref<2x32x128xbf16, #tpu.memory_space<vmem>>, vector<1x32x128xbf16>
    %323 = vector.shape_cast %322 : vector<1x32x128xbf16> to vector<32x128xbf16>
    %cst_87 = arith.constant dense<0.000000e+00> : vector<64x128xf32>
    %324 = tpu.matmul %321, %323, %cst_87 {dimension_numbers = #tpu.dot_dimension_numbers<[1], [0], [0], [1], [0, 0, 1, 1], [], []>} : vector<64x32xbf16>, vector<32x128xbf16>, vector<64x128xf32> -> vector<64x128xf32>
    %c1_88 = arith.constant 1 : index
    %c0_89 = arith.constant 0 : index
    %c0_90 = arith.constant 0 : index
    %325 = vector.load %arg5[%c1_88, %c0_89, %c0_90] : memref<2x1x128xf32, #tpu.memory_space<vmem>>, vector<1x1x128xf32>
    %326 = vector.shape_cast %325 : vector<1x1x128xf32> to vector<1x128xf32>
    %327 = vector.broadcast %326 : vector<1x128xf32> to vector<64x128xf32>
    %328 = arith.addf %324, %327 : vector<64x128xf32>
    %c0_91 = arith.constant 0 : index
    %c0_92 = arith.constant 0 : index
    %329 = vector.load %arg12[%c0_91, %c0_92] : memref<64x128xf32, #tpu.memory_space<vmem>>, vector<64x128xf32>
    tpu.vector_store %arg12[%c0_91, %c0_92], %328 {strides = array<i32>} : memref<64x128xf32, #tpu.memory_space<vmem>>, vector<64x128xf32>,
    %c1_93 = arith.constant 1 : index
    %c0_94 = arith.constant 0 : index
    %c0_95 = arith.constant 0 : index
    %330 = vector.load %arg4[%c1_93, %c0_94, %c0_95] : memref<2x32x128xbf16, #tpu.memory_space<vmem>>, vector<1x32x128xbf16>
    %331 = vector.shape_cast %330 : vector<1x32x128xbf16> to vector<32x128xbf16>
    %cst_96 = arith.constant 0.000000e+00 : f32
    %332 = vector.broadcast %cst_96 : f32 to vector<8x32xf32>
    %cst_97 = arith.constant 0.000000e+00 : f32
    %333 = vector.broadcast %cst_97 : f32 to vector<8x32xf32>
    %c0_i32_98 = arith.constant 0 : i32
    %c8_i32_99 = arith.constant 8 : i32
    %334 = arith.muli %c0_i32_98, %c8_i32_99 : i32
    %335 = tpu.assume_multiple %334, 8 : i32
    %336 = arith.index_cast %335 : i32 to index
    %c0_100 = arith.constant 0 : index
    %337 = vector.load %arg12[%336, %c0_100] : memref<64x128xf32, #tpu.memory_space<vmem>>, vector<8x128xf32>
    %338 = arith.truncf %332 : vector<8x32xf32> to vector<8x32xbf16>
    %cst_101 = arith.constant dense<0.000000e+00> : vector<8x128xf32>
    %339 = tpu.matmul %338, %331, %cst_101 {dimension_numbers = #tpu.dot_dimension_numbers<[1], [0], [0], [1], [0, 0, 1, 1], [], []>} : vector<8x32xbf16>, vector<32x128xbf16>, vector<8x128xf32> -> vector<8x128xf32>
    %340 = arith.addf %337, %339 : vector<8x128xf32>
    %341 = vector.extract_strided_slice %340 {offsets = [0, 0], sizes = [8, 32], strides = [1, 1]} : vector<8x128xf32> to vector<8x32xf32>
    %342 = arith.negf %341 : vector<8x32xf32>
    %343 = math.exp %342 : vector<8x32xf32>
    %cst_102 = arith.constant 1.000000e+00 : f32
    %344 = vector.broadcast %cst_102 : f32 to vector<8x32xf32>
    %345 = arith.addf %344, %343 : vector<8x32xf32>
    %346 = arith.divf %344, %345 : vector<8x32xf32>
    %347 = vector.extract_strided_slice %340 {offsets = [0, 32], sizes = [8, 32], strides = [1, 1]} : vector<8x128xf32> to vector<8x32xf32>
    %348 = arith.negf %347 : vector<8x32xf32>
    %349 = math.exp %348 : vector<8x32xf32>
    %cst_103 = arith.constant 1.000000e+00 : f32
    %350 = vector.broadcast %cst_103 : f32 to vector<8x32xf32>
    %351 = arith.addf %350, %349 : vector<8x32xf32>
    %352 = arith.divf %350, %351 : vector<8x32xf32>
    %353 = vector.extract_strided_slice %340 {offsets = [0, 64], sizes = [8, 32], strides = [1, 1]} : vector<8x128xf32> to vector<8x32xf32>
    %354 = math.tanh %353 : vector<8x32xf32>
    %355 = vector.extract_strided_slice %340 {offsets = [0, 96], sizes = [8, 32], strides = [1, 1]} : vector<8x128xf32> to vector<8x32xf32>
    %356 = arith.negf %355 : vector<8x32xf32>
    %357 = math.exp %356 : vector<8x32xf32>
    %cst_104 = arith.constant 1.000000e+00 : f32
    %358 = vector.broadcast %cst_104 : f32 to vector<8x32xf32>
    %359 = arith.addf %358, %357 : vector<8x32xf32>
    %360 = arith.divf %358, %359 : vector<8x32xf32>
    %361 = arith.mulf %352, %333 : vector<8x32xf32>
    %362 = arith.mulf %346, %354 : vector<8x32xf32>
    %363 = arith.addf %361, %362 : vector<8x32xf32>
    %364 = math.tanh %363 : vector<8x32xf32>
    %365 = arith.mulf %360, %364 : vector<8x32xf32>
    %366 = arith.truncf %365 : vector<8x32xf32> to vector<8x32xbf16>
    %367 = arith.index_cast %335 : i32 to index
    %c0_105 = arith.constant 0 : index
    %368 = vector.load %arg11[%367, %c0_105] : memref<64x32xbf16, #tpu.memory_space<vmem>>, vector<8x32xbf16>
    tpu.vector_store %arg11[%367, %c0_105], %366 {strides = array<i32>} : memref<64x32xbf16, #tpu.memory_space<vmem>>, vector<8x32xbf16>,
    %c1_i32_106 = arith.constant 1 : i32
    %c8_i32_107 = arith.constant 8 : i32
    %369 = arith.muli %c1_i32_106, %c8_i32_107 : i32
    %370 = tpu.assume_multiple %369, 8 : i32
    %371 = arith.index_cast %370 : i32 to index
    %c0_108 = arith.constant 0 : index
    %372 = vector.load %arg12[%371, %c0_108] : memref<64x128xf32, #tpu.memory_space<vmem>>, vector<8x128xf32>
    %373 = arith.truncf %365 : vector<8x32xf32> to vector<8x32xbf16>
    %cst_109 = arith.constant dense<0.000000e+00> : vector<8x128xf32>
    %374 = tpu.matmul %373, %331, %cst_109 {dimension_numbers = #tpu.dot_dimension_numbers<[1], [0], [0], [1], [0, 0, 1, 1], [], []>} : vector<8x32xbf16>, vector<32x128xbf16>, vector<8x128xf32> -> vector<8x128xf32>
    %375 = arith.addf %372, %374 : vector<8x128xf32>
    %376 = vector.extract_strided_slice %375 {offsets = [0, 0], sizes = [8, 32], strides = [1, 1]} : vector<8x128xf32> to vector<8x32xf32>
    %377 = arith.negf %376 : vector<8x32xf32>
    %378 = math.exp %377 : vector<8x32xf32>
    %cst_110 = arith.constant 1.000000e+00 : f32
    %379 = vector.broadcast %cst_110 : f32 to vector<8x32xf32>
    %380 = arith.addf %379, %378 : vector<8x32xf32>
    %381 = arith.divf %379, %380 : vector<8x32xf32>
    %382 = vector.extract_strided_slice %375 {offsets = [0, 32], sizes = [8, 32], strides = [1, 1]} : vector<8x128xf32> to vector<8x32xf32>
    %383 = arith.negf %382 : vector<8x32xf32>
    %384 = math.exp %383 : vector<8x32xf32>
    %cst_111 = arith.constant 1.000000e+00 : f32
    %385 = vector.broadcast %cst_111 : f32 to vector<8x32xf32>
    %386 = arith.addf %385, %384 : vector<8x32xf32>
    %387 = arith.divf %385, %386 : vector<8x32xf32>
    %388 = vector.extract_strided_slice %375 {offsets = [0, 64], sizes = [8, 32], strides = [1, 1]} : vector<8x128xf32> to vector<8x32xf32>
    %389 = math.tanh %388 : vector<8x32xf32>
    %390 = vector.extract_strided_slice %375 {offsets = [0, 96], sizes = [8, 32], strides = [1, 1]} : vector<8x128xf32> to vector<8x32xf32>
    %391 = arith.negf %390 : vector<8x32xf32>
    %392 = math.exp %391 : vector<8x32xf32>
    %cst_112 = arith.constant 1.000000e+00 : f32
    %393 = vector.broadcast %cst_112 : f32 to vector<8x32xf32>
    %394 = arith.addf %393, %392 : vector<8x32xf32>
    %395 = arith.divf %393, %394 : vector<8x32xf32>
    %396 = arith.mulf %387, %363 : vector<8x32xf32>
    %397 = arith.mulf %381, %389 : vector<8x32xf32>
    %398 = arith.addf %396, %397 : vector<8x32xf32>
    %399 = math.tanh %398 : vector<8x32xf32>
    %400 = arith.mulf %395, %399 : vector<8x32xf32>
    %401 = arith.truncf %400 : vector<8x32xf32> to vector<8x32xbf16>
    %402 = arith.index_cast %370 : i32 to index
    %c0_113 = arith.constant 0 : index
    %403 = vector.load %arg11[%402, %c0_113] : memref<64x32xbf16, #tpu.memory_space<vmem>>, vector<8x32xbf16>
    tpu.vector_store %arg11[%402, %c0_113], %401 {strides = array<i32>} : memref<64x32xbf16, #tpu.memory_space<vmem>>, vector<8x32xbf16>,
    %c2_i32_114 = arith.constant 2 : i32
    %c8_i32_115 = arith.constant 8 : i32
    %404 = arith.muli %c2_i32_114, %c8_i32_115 : i32
    %405 = tpu.assume_multiple %404, 8 : i32
    %406 = arith.index_cast %405 : i32 to index
    %c0_116 = arith.constant 0 : index
    %407 = vector.load %arg12[%406, %c0_116] : memref<64x128xf32, #tpu.memory_space<vmem>>, vector<8x128xf32>
    %408 = arith.truncf %400 : vector<8x32xf32> to vector<8x32xbf16>
    %cst_117 = arith.constant dense<0.000000e+00> : vector<8x128xf32>
    %409 = tpu.matmul %408, %331, %cst_117 {dimension_numbers = #tpu.dot_dimension_numbers<[1], [0], [0], [1], [0, 0, 1, 1], [], []>} : vector<8x32xbf16>, vector<32x128xbf16>, vector<8x128xf32> -> vector<8x128xf32>
    %410 = arith.addf %407, %409 : vector<8x128xf32>
    %411 = vector.extract_strided_slice %410 {offsets = [0, 0], sizes = [8, 32], strides = [1, 1]} : vector<8x128xf32> to vector<8x32xf32>
    %412 = arith.negf %411 : vector<8x32xf32>
    %413 = math.exp %412 : vector<8x32xf32>
    %cst_118 = arith.constant 1.000000e+00 : f32
    %414 = vector.broadcast %cst_118 : f32 to vector<8x32xf32>
    %415 = arith.addf %414, %413 : vector<8x32xf32>
    %416 = arith.divf %414, %415 : vector<8x32xf32>
    %417 = vector.extract_strided_slice %410 {offsets = [0, 32], sizes = [8, 32], strides = [1, 1]} : vector<8x128xf32> to vector<8x32xf32>
    %418 = arith.negf %417 : vector<8x32xf32>
    %419 = math.exp %418 : vector<8x32xf32>
    %cst_119 = arith.constant 1.000000e+00 : f32
    %420 = vector.broadcast %cst_119 : f32 to vector<8x32xf32>
    %421 = arith.addf %420, %419 : vector<8x32xf32>
    %422 = arith.divf %420, %421 : vector<8x32xf32>
    %423 = vector.extract_strided_slice %410 {offsets = [0, 64], sizes = [8, 32], strides = [1, 1]} : vector<8x128xf32> to vector<8x32xf32>
    %424 = math.tanh %423 : vector<8x32xf32>
    %425 = vector.extract_strided_slice %410 {offsets = [0, 96], sizes = [8, 32], strides = [1, 1]} : vector<8x128xf32> to vector<8x32xf32>
    %426 = arith.negf %425 : vector<8x32xf32>
    %427 = math.exp %426 : vector<8x32xf32>
    %cst_120 = arith.constant 1.000000e+00 : f32
    %428 = vector.broadcast %cst_120 : f32 to vector<8x32xf32>
    %429 = arith.addf %428, %427 : vector<8x32xf32>
    %430 = arith.divf %428, %429 : vector<8x32xf32>
    %431 = arith.mulf %422, %398 : vector<8x32xf32>
    %432 = arith.mulf %416, %424 : vector<8x32xf32>
    %433 = arith.addf %431, %432 : vector<8x32xf32>
    %434 = math.tanh %433 : vector<8x32xf32>
    %435 = arith.mulf %430, %434 : vector<8x32xf32>
    %436 = arith.truncf %435 : vector<8x32xf32> to vector<8x32xbf16>
    %437 = arith.index_cast %405 : i32 to index
    %c0_121 = arith.constant 0 : index
    %438 = vector.load %arg11[%437, %c0_121] : memref<64x32xbf16, #tpu.memory_space<vmem>>, vector<8x32xbf16>
    tpu.vector_store %arg11[%437, %c0_121], %436 {strides = array<i32>} : memref<64x32xbf16, #tpu.memory_space<vmem>>, vector<8x32xbf16>,
    %c3_i32_122 = arith.constant 3 : i32
    %c8_i32_123 = arith.constant 8 : i32
    %439 = arith.muli %c3_i32_122, %c8_i32_123 : i32
    %440 = tpu.assume_multiple %439, 8 : i32
    %441 = arith.index_cast %440 : i32 to index
    %c0_124 = arith.constant 0 : index
    %442 = vector.load %arg12[%441, %c0_124] : memref<64x128xf32, #tpu.memory_space<vmem>>, vector<8x128xf32>
    %443 = arith.truncf %435 : vector<8x32xf32> to vector<8x32xbf16>
    %cst_125 = arith.constant dense<0.000000e+00> : vector<8x128xf32>
    %444 = tpu.matmul %443, %331, %cst_125 {dimension_numbers = #tpu.dot_dimension_numbers<[1], [0], [0], [1], [0, 0, 1, 1], [], []>} : vector<8x32xbf16>, vector<32x128xbf16>, vector<8x128xf32> -> vector<8x128xf32>
    %445 = arith.addf %442, %444 : vector<8x128xf32>
    %446 = vector.extract_strided_slice %445 {offsets = [0, 0], sizes = [8, 32], strides = [1, 1]} : vector<8x128xf32> to vector<8x32xf32>
    %447 = arith.negf %446 : vector<8x32xf32>
    %448 = math.exp %447 : vector<8x32xf32>
    %cst_126 = arith.constant 1.000000e+00 : f32
    %449 = vector.broadcast %cst_126 : f32 to vector<8x32xf32>
    %450 = arith.addf %449, %448 : vector<8x32xf32>
    %451 = arith.divf %449, %450 : vector<8x32xf32>
    %452 = vector.extract_strided_slice %445 {offsets = [0, 32], sizes = [8, 32], strides = [1, 1]} : vector<8x128xf32> to vector<8x32xf32>
    %453 = arith.negf %452 : vector<8x32xf32>
    %454 = math.exp %453 : vector<8x32xf32>
    %cst_127 = arith.constant 1.000000e+00 : f32
    %455 = vector.broadcast %cst_127 : f32 to vector<8x32xf32>
    %456 = arith.addf %455, %454 : vector<8x32xf32>
    %457 = arith.divf %455, %456 : vector<8x32xf32>
    %458 = vector.extract_strided_slice %445 {offsets = [0, 64], sizes = [8, 32], strides = [1, 1]} : vector<8x128xf32> to vector<8x32xf32>
    %459 = math.tanh %458 : vector<8x32xf32>
    %460 = vector.extract_strided_slice %445 {offsets = [0, 96], sizes = [8, 32], strides = [1, 1]} : vector<8x128xf32> to vector<8x32xf32>
    %461 = arith.negf %460 : vector<8x32xf32>
    %462 = math.exp %461 : vector<8x32xf32>
    %cst_128 = arith.constant 1.000000e+00 : f32
    %463 = vector.broadcast %cst_128 : f32 to vector<8x32xf32>
    %464 = arith.addf %463, %462 : vector<8x32xf32>
    %465 = arith.divf %463, %464 : vector<8x32xf32>
    %466 = arith.mulf %457, %433 : vector<8x32xf32>
    %467 = arith.mulf %451, %459 : vector<8x32xf32>
    %468 = arith.addf %466, %467 : vector<8x32xf32>
    %469 = math.tanh %468 : vector<8x32xf32>
    %470 = arith.mulf %465, %469 : vector<8x32xf32>
    %471 = arith.truncf %470 : vector<8x32xf32> to vector<8x32xbf16>
    %472 = arith.index_cast %440 : i32 to index
    %c0_129 = arith.constant 0 : index
    %473 = vector.load %arg11[%472, %c0_129] : memref<64x32xbf16, #tpu.memory_space<vmem>>, vector<8x32xbf16>
    tpu.vector_store %arg11[%472, %c0_129], %471 {strides = array<i32>} : memref<64x32xbf16, #tpu.memory_space<vmem>>, vector<8x32xbf16>,
    %c4_i32_130 = arith.constant 4 : i32
    %c8_i32_131 = arith.constant 8 : i32
    %474 = arith.muli %c4_i32_130, %c8_i32_131 : i32
    %475 = tpu.assume_multiple %474, 8 : i32
    %476 = arith.index_cast %475 : i32 to index
    %c0_132 = arith.constant 0 : index
    %477 = vector.load %arg12[%476, %c0_132] : memref<64x128xf32, #tpu.memory_space<vmem>>, vector<8x128xf32>
    %478 = arith.truncf %470 : vector<8x32xf32> to vector<8x32xbf16>
    %cst_133 = arith.constant dense<0.000000e+00> : vector<8x128xf32>
    %479 = tpu.matmul %478, %331, %cst_133 {dimension_numbers = #tpu.dot_dimension_numbers<[1], [0], [0], [1], [0, 0, 1, 1], [], []>} : vector<8x32xbf16>, vector<32x128xbf16>, vector<8x128xf32> -> vector<8x128xf32>
    %480 = arith.addf %477, %479 : vector<8x128xf32>
    %481 = vector.extract_strided_slice %480 {offsets = [0, 0], sizes = [8, 32], strides = [1, 1]} : vector<8x128xf32> to vector<8x32xf32>
    %482 = arith.negf %481 : vector<8x32xf32>
    %483 = math.exp %482 : vector<8x32xf32>
    %cst_134 = arith.constant 1.000000e+00 : f32
    %484 = vector.broadcast %cst_134 : f32 to vector<8x32xf32>
    %485 = arith.addf %484, %483 : vector<8x32xf32>
    %486 = arith.divf %484, %485 : vector<8x32xf32>
    %487 = vector.extract_strided_slice %480 {offsets = [0, 32], sizes = [8, 32], strides = [1, 1]} : vector<8x128xf32> to vector<8x32xf32>
    %488 = arith.negf %487 : vector<8x32xf32>
    %489 = math.exp %488 : vector<8x32xf32>
    %cst_135 = arith.constant 1.000000e+00 : f32
    %490 = vector.broadcast %cst_135 : f32 to vector<8x32xf32>
    %491 = arith.addf %490, %489 : vector<8x32xf32>
    %492 = arith.divf %490, %491 : vector<8x32xf32>
    %493 = vector.extract_strided_slice %480 {offsets = [0, 64], sizes = [8, 32], strides = [1, 1]} : vector<8x128xf32> to vector<8x32xf32>
    %494 = math.tanh %493 : vector<8x32xf32>
    %495 = vector.extract_strided_slice %480 {offsets = [0, 96], sizes = [8, 32], strides = [1, 1]} : vector<8x128xf32> to vector<8x32xf32>
    %496 = arith.negf %495 : vector<8x32xf32>
    %497 = math.exp %496 : vector<8x32xf32>
    %cst_136 = arith.constant 1.000000e+00 : f32
    %498 = vector.broadcast %cst_136 : f32 to vector<8x32xf32>
    %499 = arith.addf %498, %497 : vector<8x32xf32>
    %500 = arith.divf %498, %499 : vector<8x32xf32>
    %501 = arith.mulf %492, %468 : vector<8x32xf32>
    %502 = arith.mulf %486, %494 : vector<8x32xf32>
    %503 = arith.addf %501, %502 : vector<8x32xf32>
    %504 = math.tanh %503 : vector<8x32xf32>
    %505 = arith.mulf %500, %504 : vector<8x32xf32>
    %506 = arith.truncf %505 : vector<8x32xf32> to vector<8x32xbf16>
    %507 = arith.index_cast %475 : i32 to index
    %c0_137 = arith.constant 0 : index
    %508 = vector.load %arg11[%507, %c0_137] : memref<64x32xbf16, #tpu.memory_space<vmem>>, vector<8x32xbf16>
    tpu.vector_store %arg11[%507, %c0_137], %506 {strides = array<i32>} : memref<64x32xbf16, #tpu.memory_space<vmem>>, vector<8x32xbf16>,
    %c5_i32_138 = arith.constant 5 : i32
    %c8_i32_139 = arith.constant 8 : i32
    %509 = arith.muli %c5_i32_138, %c8_i32_139 : i32
    %510 = tpu.assume_multiple %509, 8 : i32
    %511 = arith.index_cast %510 : i32 to index
    %c0_140 = arith.constant 0 : index
    %512 = vector.load %arg12[%511, %c0_140] : memref<64x128xf32, #tpu.memory_space<vmem>>, vector<8x128xf32>
    %513 = arith.truncf %505 : vector<8x32xf32> to vector<8x32xbf16>
    %cst_141 = arith.constant dense<0.000000e+00> : vector<8x128xf32>
    %514 = tpu.matmul %513, %331, %cst_141 {dimension_numbers = #tpu.dot_dimension_numbers<[1], [0], [0], [1], [0, 0, 1, 1], [], []>} : vector<8x32xbf16>, vector<32x128xbf16>, vector<8x128xf32> -> vector<8x128xf32>
    %515 = arith.addf %512, %514 : vector<8x128xf32>
    %516 = vector.extract_strided_slice %515 {offsets = [0, 0], sizes = [8, 32], strides = [1, 1]} : vector<8x128xf32> to vector<8x32xf32>
    %517 = arith.negf %516 : vector<8x32xf32>
    %518 = math.exp %517 : vector<8x32xf32>
    %cst_142 = arith.constant 1.000000e+00 : f32
    %519 = vector.broadcast %cst_142 : f32 to vector<8x32xf32>
    %520 = arith.addf %519, %518 : vector<8x32xf32>
    %521 = arith.divf %519, %520 : vector<8x32xf32>
    %522 = vector.extract_strided_slice %515 {offsets = [0, 32], sizes = [8, 32], strides = [1, 1]} : vector<8x128xf32> to vector<8x32xf32>
    %523 = arith.negf %522 : vector<8x32xf32>
    %524 = math.exp %523 : vector<8x32xf32>
    %cst_143 = arith.constant 1.000000e+00 : f32
    %525 = vector.broadcast %cst_143 : f32 to vector<8x32xf32>
    %526 = arith.addf %525, %524 : vector<8x32xf32>
    %527 = arith.divf %525, %526 : vector<8x32xf32>
    %528 = vector.extract_strided_slice %515 {offsets = [0, 64], sizes = [8, 32], strides = [1, 1]} : vector<8x128xf32> to vector<8x32xf32>
    %529 = math.tanh %528 : vector<8x32xf32>
    %530 = vector.extract_strided_slice %515 {offsets = [0, 96], sizes = [8, 32], strides = [1, 1]} : vector<8x128xf32> to vector<8x32xf32>
    %531 = arith.negf %530 : vector<8x32xf32>
    %532 = math.exp %531 : vector<8x32xf32>
    %cst_144 = arith.constant 1.000000e+00 : f32
    %533 = vector.broadcast %cst_144 : f32 to vector<8x32xf32>
    %534 = arith.addf %533, %532 : vector<8x32xf32>
    %535 = arith.divf %533, %534 : vector<8x32xf32>
    %536 = arith.mulf %527, %503 : vector<8x32xf32>
    %537 = arith.mulf %521, %529 : vector<8x32xf32>
    %538 = arith.addf %536, %537 : vector<8x32xf32>
    %539 = math.tanh %538 : vector<8x32xf32>
    %540 = arith.mulf %535, %539 : vector<8x32xf32>
    %541 = arith.truncf %540 : vector<8x32xf32> to vector<8x32xbf16>
    %542 = arith.index_cast %510 : i32 to index
    %c0_145 = arith.constant 0 : index
    %543 = vector.load %arg11[%542, %c0_145] : memref<64x32xbf16, #tpu.memory_space<vmem>>, vector<8x32xbf16>
    tpu.vector_store %arg11[%542, %c0_145], %541 {strides = array<i32>} : memref<64x32xbf16, #tpu.memory_space<vmem>>, vector<8x32xbf16>,
    %c6_i32_146 = arith.constant 6 : i32
    %c8_i32_147 = arith.constant 8 : i32
    %544 = arith.muli %c6_i32_146, %c8_i32_147 : i32
    %545 = tpu.assume_multiple %544, 8 : i32
    %546 = arith.index_cast %545 : i32 to index
    %c0_148 = arith.constant 0 : index
    %547 = vector.load %arg12[%546, %c0_148] : memref<64x128xf32, #tpu.memory_space<vmem>>, vector<8x128xf32>
    %548 = arith.truncf %540 : vector<8x32xf32> to vector<8x32xbf16>
    %cst_149 = arith.constant dense<0.000000e+00> : vector<8x128xf32>
    %549 = tpu.matmul %548, %331, %cst_149 {dimension_numbers = #tpu.dot_dimension_numbers<[1], [0], [0], [1], [0, 0, 1, 1], [], []>} : vector<8x32xbf16>, vector<32x128xbf16>, vector<8x128xf32> -> vector<8x128xf32>
    %550 = arith.addf %547, %549 : vector<8x128xf32>
    %551 = vector.extract_strided_slice %550 {offsets = [0, 0], sizes = [8, 32], strides = [1, 1]} : vector<8x128xf32> to vector<8x32xf32>
    %552 = arith.negf %551 : vector<8x32xf32>
    %553 = math.exp %552 : vector<8x32xf32>
    %cst_150 = arith.constant 1.000000e+00 : f32
    %554 = vector.broadcast %cst_150 : f32 to vector<8x32xf32>
    %555 = arith.addf %554, %553 : vector<8x32xf32>
    %556 = arith.divf %554, %555 : vector<8x32xf32>
    %557 = vector.extract_strided_slice %550 {offsets = [0, 32], sizes = [8, 32], strides = [1, 1]} : vector<8x128xf32> to vector<8x32xf32>
    %558 = arith.negf %557 : vector<8x32xf32>
    %559 = math.exp %558 : vector<8x32xf32>
    %cst_151 = arith.constant 1.000000e+00 : f32
    %560 = vector.broadcast %cst_151 : f32 to vector<8x32xf32>
    %561 = arith.addf %560, %559 : vector<8x32xf32>
    %562 = arith.divf %560, %561 : vector<8x32xf32>
    %563 = vector.extract_strided_slice %550 {offsets = [0, 64], sizes = [8, 32], strides = [1, 1]} : vector<8x128xf32> to vector<8x32xf32>
    %564 = math.tanh %563 : vector<8x32xf32>
    %565 = vector.extract_strided_slice %550 {offsets = [0, 96], sizes = [8, 32], strides = [1, 1]} : vector<8x128xf32> to vector<8x32xf32>
    %566 = arith.negf %565 : vector<8x32xf32>
    %567 = math.exp %566 : vector<8x32xf32>
    %cst_152 = arith.constant 1.000000e+00 : f32
    %568 = vector.broadcast %cst_152 : f32 to vector<8x32xf32>
    %569 = arith.addf %568, %567 : vector<8x32xf32>
    %570 = arith.divf %568, %569 : vector<8x32xf32>
    %571 = arith.mulf %562, %538 : vector<8x32xf32>
    %572 = arith.mulf %556, %564 : vector<8x32xf32>
    %573 = arith.addf %571, %572 : vector<8x32xf32>
    %574 = math.tanh %573 : vector<8x32xf32>
    %575 = arith.mulf %570, %574 : vector<8x32xf32>
    %576 = arith.truncf %575 : vector<8x32xf32> to vector<8x32xbf16>
    %577 = arith.index_cast %545 : i32 to index
    %c0_153 = arith.constant 0 : index
    %578 = vector.load %arg11[%577, %c0_153] : memref<64x32xbf16, #tpu.memory_space<vmem>>, vector<8x32xbf16>
    tpu.vector_store %arg11[%577, %c0_153], %576 {strides = array<i32>} : memref<64x32xbf16, #tpu.memory_space<vmem>>, vector<8x32xbf16>,
    %c7_i32_154 = arith.constant 7 : i32
    %c8_i32_155 = arith.constant 8 : i32
    %579 = arith.muli %c7_i32_154, %c8_i32_155 : i32
    %580 = tpu.assume_multiple %579, 8 : i32
    %581 = arith.index_cast %580 : i32 to index
    %c0_156 = arith.constant 0 : index
    %582 = vector.load %arg12[%581, %c0_156] : memref<64x128xf32, #tpu.memory_space<vmem>>, vector<8x128xf32>
    %583 = arith.truncf %575 : vector<8x32xf32> to vector<8x32xbf16>
    %cst_157 = arith.constant dense<0.000000e+00> : vector<8x128xf32>
    %584 = tpu.matmul %583, %331, %cst_157 {dimension_numbers = #tpu.dot_dimension_numbers<[1], [0], [0], [1], [0, 0, 1, 1], [], []>} : vector<8x32xbf16>, vector<32x128xbf16>, vector<8x128xf32> -> vector<8x128xf32>
    %585 = arith.addf %582, %584 : vector<8x128xf32>
    %586 = vector.extract_strided_slice %585 {offsets = [0, 0], sizes = [8, 32], strides = [1, 1]} : vector<8x128xf32> to vector<8x32xf32>
    %587 = arith.negf %586 : vector<8x32xf32>
    %588 = math.exp %587 : vector<8x32xf32>
    %cst_158 = arith.constant 1.000000e+00 : f32
    %589 = vector.broadcast %cst_158 : f32 to vector<8x32xf32>
    %590 = arith.addf %589, %588 : vector<8x32xf32>
    %591 = arith.divf %589, %590 : vector<8x32xf32>
    %592 = vector.extract_strided_slice %585 {offsets = [0, 32], sizes = [8, 32], strides = [1, 1]} : vector<8x128xf32> to vector<8x32xf32>
    %593 = arith.negf %592 : vector<8x32xf32>
    %594 = math.exp %593 : vector<8x32xf32>
    %cst_159 = arith.constant 1.000000e+00 : f32
    %595 = vector.broadcast %cst_159 : f32 to vector<8x32xf32>
    %596 = arith.addf %595, %594 : vector<8x32xf32>
    %597 = arith.divf %595, %596 : vector<8x32xf32>
    %598 = vector.extract_strided_slice %585 {offsets = [0, 64], sizes = [8, 32], strides = [1, 1]} : vector<8x128xf32> to vector<8x32xf32>
    %599 = math.tanh %598 : vector<8x32xf32>
    %600 = vector.extract_strided_slice %585 {offsets = [0, 96], sizes = [8, 32], strides = [1, 1]} : vector<8x128xf32> to vector<8x32xf32>
    %601 = arith.negf %600 : vector<8x32xf32>
    %602 = math.exp %601 : vector<8x32xf32>
    %cst_160 = arith.constant 1.000000e+00 : f32
    %603 = vector.broadcast %cst_160 : f32 to vector<8x32xf32>
    %604 = arith.addf %603, %602 : vector<8x32xf32>
    %605 = arith.divf %603, %604 : vector<8x32xf32>
    %606 = arith.mulf %597, %573 : vector<8x32xf32>
    %607 = arith.mulf %591, %599 : vector<8x32xf32>
    %608 = arith.addf %606, %607 : vector<8x32xf32>
    %609 = math.tanh %608 : vector<8x32xf32>
    %610 = arith.mulf %605, %609 : vector<8x32xf32>
    %611 = arith.truncf %610 : vector<8x32xf32> to vector<8x32xbf16>
    %612 = arith.index_cast %580 : i32 to index
    %c0_161 = arith.constant 0 : index
    %613 = vector.load %arg11[%612, %c0_161] : memref<64x32xbf16, #tpu.memory_space<vmem>>, vector<8x32xbf16>
    tpu.vector_store %arg11[%612, %c0_161], %611 {strides = array<i32>} : memref<64x32xbf16, #tpu.memory_space<vmem>>, vector<8x32xbf16>,
    %c8_i32_162 = arith.constant 8 : i32
    %c0_163 = arith.constant 0 : index
    %c0_164 = arith.constant 0 : index
    %614 = vector.load %arg11[%c0_163, %c0_164] : memref<64x32xbf16, #tpu.memory_space<vmem>>, vector<64x32xbf16>
    %615 = arith.extf %614 : vector<64x32xbf16> to vector<64x32xf32>
    %c0_165 = arith.constant 0 : index
    %c0_166 = arith.constant 0 : index
    %616 = vector.load %arg6[%c0_165, %c0_166] : memref<1x32xf32, #tpu.memory_space<vmem>>, vector<1x32xf32>
    %c0_167 = arith.constant 0 : index
    %c0_168 = arith.constant 0 : index
    %617 = vector.load %arg7[%c0_167, %c0_168] : memref<1x32xf32, #tpu.memory_space<vmem>>, vector<1x32xf32>
    %cst_169 = arith.constant dense<0.000000e+00> : vector<64xf32>
    %618 = vector.multi_reduction <add>, %615, %cst_169 [1] : vector<64x32xf32> to vector<64xf32>
    %619 = vector.shape_cast %618 : vector<64xf32> to vector<64x1xf32>
    %cst_170 = arith.constant 3.200000e+01 : f32
    %620 = vector.broadcast %cst_170 : f32 to vector<64x1xf32>
    %621 = arith.divf %619, %620 : vector<64x1xf32>
    %622 = vector.broadcast %621 : vector<64x1xf32> to vector<64x32xf32>
    %623 = arith.subf %615, %622 : vector<64x32xf32>
    %624 = arith.mulf %623, %623 : vector<64x32xf32>
    %cst_171 = arith.constant dense<0.000000e+00> : vector<64xf32>
    %625 = vector.multi_reduction <add>, %624, %cst_171 [1] : vector<64x32xf32> to vector<64xf32>
    %626 = vector.shape_cast %625 : vector<64xf32> to vector<64x1xf32>
    %cst_172 = arith.constant 3.200000e+01 : f32
    %627 = vector.broadcast %cst_172 : f32 to vector<64x1xf32>
    %628 = arith.divf %626, %627 : vector<64x1xf32>
    %629 = vector.broadcast %621 : vector<64x1xf32> to vector<64x32xf32>
    %630 = arith.subf %615, %629 : vector<64x32xf32>
    %cst_173 = arith.constant 9.99999974E-6 : f32
    %631 = vector.broadcast %cst_173 : f32 to vector<64x1xf32>
    %632 = arith.addf %628, %631 : vector<64x1xf32>
    %633 = math.rsqrt %632 : vector<64x1xf32>
    %634 = vector.broadcast %633 : vector<64x1xf32> to vector<64x32xf32>
    %635 = arith.mulf %630, %634 : vector<64x32xf32>
    %636 = vector.broadcast %616 : vector<1x32xf32> to vector<64x32xf32>
    %637 = arith.mulf %635, %636 : vector<64x32xf32>
    %638 = vector.broadcast %617 : vector<1x32xf32> to vector<64x32xf32>
    %639 = arith.addf %637, %638 : vector<64x32xf32>
    %640 = arith.truncf %639 : vector<64x32xf32> to vector<64x32xbf16>
    %c0_174 = arith.constant 0 : index
    %c0_175 = arith.constant 0 : index
    %641 = vector.load %arg8[%c0_174, %c0_175] : memref<32x128xbf16, #tpu.memory_space<vmem>>, vector<32x128xbf16>
    %cst_176 = arith.constant dense<0.000000e+00> : vector<64x128xf32>
    %642 = tpu.matmul %640, %641, %cst_176 {dimension_numbers = #tpu.dot_dimension_numbers<[1], [0], [0], [1], [0, 0, 1, 1], [], []>} : vector<64x32xbf16>, vector<32x128xbf16>, vector<64x128xf32> -> vector<64x128xf32>
    %c0_177 = arith.constant 0 : index
    %c0_178 = arith.constant 0 : index
    %643 = vector.load %arg9[%c0_177, %c0_178] : memref<1x128xf32, #tpu.memory_space<vmem>>, vector<1x128xf32>
    %644 = vector.broadcast %643 : vector<1x128xf32> to vector<64x128xf32>
    %645 = arith.addf %642, %644 : vector<64x128xf32>
    %c0_179 = arith.constant 0 : index
    %c0_180 = arith.constant 0 : index
    %646 = vector.load %arg10[%c0_179, %c0_180] : memref<64x128xf32, #tpu.memory_space<vmem>>, vector<64x128xf32>
    tpu.vector_store %arg10[%c0_179, %c0_180], %645 {strides = array<i32>} : memref<64x128xf32, #tpu.memory_space<vmem>>, vector<64x128xf32>,
    return
  }
}

</mosaic_0001>

<llo_original>
// kernel: tpu_custom_call.1
$region0: #{tpu_custom_call.1}
  #allocation0 [shape = 'u32[]', space=smem, size = 0x4, offset = 0x4, fixed_abs, tag = 'smem constant byte address 0x4 - core index']
  #allocation1 [shape = 'u32[144,128]{1,0:T(1,128)}', space=vmem, size = 0x12000, scoped, tag = 'internal scratch']
  #allocation2 [shape = 'bf16[64,32]{1,0:T(8,128)(2,1)}', space=vmem, size = 0x4000, scoped, tag = 'scratch operand']
  #allocation3 [shape = 'f32[64,128]{1,0:T(8,128)}', space=vmem, size = 0x8000, scoped, tag = 'scratch operand']
  %s0 = inlined_call_operand.vmem [shape: bf16[64,32], index: 0, kind: input, shape index: {}]
  %s1 = inlined_call_operand.vmem [shape: f32[1,32], index: 1, kind: input, shape index: {}]
  %s2 = inlined_call_operand.vmem [shape: f32[1,32], index: 2, kind: input, shape index: {}]
  %s3 = inlined_call_operand.vmem [shape: bf16[2,32,128], index: 3, kind: input, shape index: {}]
  %s4 = inlined_call_operand.hbm [shape: bf16[2,32,128], index: 4, kind: input, shape index: {}]
  %s5 = inlined_call_operand.vmem [shape: f32[2,1,128], index: 5, kind: input, shape index: {}]
  %s6 = inlined_call_operand.vmem [shape: f32[1,32], index: 6, kind: input, shape index: {}]
  %s7 = inlined_call_operand.vmem [shape: f32[1,32], index: 7, kind: input, shape index: {}]
  %s8 = inlined_call_operand.vmem [shape: bf16[32,128], index: 8, kind: input, shape index: {}]
  %s9 = inlined_call_operand.vmem [shape: f32[1,128], index: 9, kind: input, shape index: {}]
  %s10 = inlined_call_operand.hbm [shape: f32[64,128], index: 10, kind: output, shape index: {}]
  %s11 = sld [smem:[#allocation0]]
  $region54: #{tpu_custom_call.1} parent=0
    _
  %s13 = ssub.s32 1, %s11
  %s14 = scalar_select 0, %s13, %s11
  $region1: #{tpu_custom_call.1} parent=0
    #allocation4 [shape = 'u8[16384]{0}', space=vmem, size = 0x4000, scoped, tag = 'input window, operand 4, single buffered']
    #allocation5 [shape = 's32[1]{0}', space=sflag, size = 0x4, scoped, tag = 'scoped memory for tpu_custom_call.1']
    #allocation6 [shape = 's32[1]{0}', space=sflag, size = 0x4, scoped, tag = 'scoped memory for tpu_custom_call.1']
    #allocation7 [shape = 'u8[32768]{0}', space=vmem, size = 0x8000, scoped, tag = 'output window, operand 0, single buffered']
    %15 = vsyncpa [#allocation5], 0
    %16 = vsyncpa [#allocation6], 0
    // Predicated region
    $region2: #{tpu_custom_call.1} parent=1 // pred_check
      _
    $region3: #{tpu_custom_call.1} parent=1 // pred_check_branch
      %18 = sbr.rel (0) target = $region5
    $region4: #{tpu_custom_call.1} parent=1 // pred_region
      _
    $region5: #{tpu_custom_call.1} parent=1 // pred_fallthru
      _
    // Predicated region
    $region6: #{tpu_custom_call.1} parent=1 // pred_check
      _
    $region7: #{tpu_custom_call.1} parent=1 // pred_check_branch
      %20 = sbr.rel (0) target = $region9
    $region8: #{tpu_custom_call.1} parent=1 // pred_region
      _
    $region9: #{tpu_custom_call.1} parent=1 // pred_fallthru
      _
    // Predicated region
    $region10: #{tpu_custom_call.1} parent=1 // pred_check
      _
    $region11: #{tpu_custom_call.1} parent=1 // pred_check_branch
      %22 = sbr.rel (0) target = $region13
    $region12: #{tpu_custom_call.1} parent=1 // pred_region
      _
    $region13: #{tpu_custom_call.1} parent=1 // pred_fallthru
      _
    // Predicated region
    $region14: #{tpu_custom_call.1} parent=1 // pred_check
      _
    $region15: #{tpu_custom_call.1} parent=1 // pred_check_branch
      %24 = sbr.rel (0) target = $region17
    $region16: #{tpu_custom_call.1} parent=1 // pred_region
      _
    $region17: #{tpu_custom_call.1} parent=1 // pred_fallthru
      _
    // Predicated region
    $region18: #{tpu_custom_call.1} parent=1 // pred_check
      _
    $region19: #{tpu_custom_call.1} parent=1 // pred_check_branch
      %26 = sbr.rel (0) target = $region21
    $region20: #{tpu_custom_call.1} parent=1 // pred_region
      %s28 = ssub.s32 512, 512
      %29 = vsyncadd [#allocation5], %s28
      %s30 = sshll.u32 [#allocation4], 4
      %s31 = int_to_ptr.vmem [resolvable:$true] %s30
      %36 = dma.hbm_to_vmem [thread:$0]  %s4, 512, %s31, [#allocation5], 64, 64, 4
    $region21: #{tpu_custom_call.1} parent=1 // pred_fallthru
      _
    // Predicated region
    $region22: #{tpu_custom_call.1} parent=1 // pred_check
      _
    $region23: #{tpu_custom_call.1} parent=1 // pred_check_branch
      %38 = sbr.rel (0) target = $region25
    $region24: #{tpu_custom_call.1} parent=1 // pred_region
      _
    $region25: #{tpu_custom_call.1} parent=1 // pred_fallthru
      _
    // Predicated region
    $region26: #{tpu_custom_call.1} parent=1 // pred_check
      _
    $region27: #{tpu_custom_call.1} parent=1 // pred_check_branch
      %40 = sbr.rel (0) target = $region29
    $region28: #{tpu_custom_call.1} parent=1 // pred_region
      _
    $region29: #{tpu_custom_call.1} parent=1 // pred_fallthru
      _
    // Predicated region
    $region30: #{tpu_custom_call.1} parent=1 // pred_check
      _
    $region31: #{tpu_custom_call.1} parent=1 // pred_check_branch
      %42 = sbr.rel (0) target = $region33
    $region32: #{tpu_custom_call.1} parent=1 // pred_region
      _
    $region33: #{tpu_custom_call.1} parent=1 // pred_fallthru
      _
    // Predicated region
    $region34: #{tpu_custom_call.1} parent=1 // pred_check
      _
    $region35: #{tpu_custom_call.1} parent=1 // pred_check_branch
      %44 = sbr.rel (0) target = $region37
    $region36: #{tpu_custom_call.1} parent=1 // pred_region
      _
    $region37: #{tpu_custom_call.1} parent=1 // pred_fallthru
      _
    // Predicated region
    $region38: #{tpu_custom_call.1} parent=1 // pred_check
      _
    $region39: #{tpu_custom_call.1} parent=1 // pred_check_branch
      %46 = sbr.rel (0) target = $region41
    $region40: #{tpu_custom_call.1} parent=1 // pred_region
      _
    $region41: #{tpu_custom_call.1} parent=1 // pred_fallthru
      _
    // Predicated region
    $region42: #{tpu_custom_call.1} parent=1 // pred_check
      _
    $region43: #{tpu_custom_call.1} parent=1 // pred_check_branch
      %48 = sbr.rel (0) target = $region45
    $region44: #{tpu_custom_call.1} parent=1 // pred_region
      %49 = dma.done [#allocation5], 512
    $region45: #{tpu_custom_call.1} parent=1 // pred_fallthru
      _
    %v51 = vld [vmem:[%s0] sm:$0xf]
    %v52 = vld [vmem:[%s0 + $0x4] sm:$0xf]
    %v53 = vld [vmem:[%s0 + $0x8] sm:$0xf]
    %v54 = vld [vmem:[%s0 + $0xc] sm:$0xf]
    %v55 = vld [vmem:[%s0 + $0x10] sm:$0xf]
    %v56 = vld [vmem:[%s0 + $0x14] sm:$0xf]
    %v57 = vld [vmem:[%s0 + $0x18] sm:$0xf]
    %v58 = vld [vmem:[%s0 + $0x1c] sm:$0xf]
    %v59 = vunpack.c.l.bf16 %v51
    %v60 = vunpack.c.l.bf16 %v52
    %v61 = vunpack.c.l.bf16 %v53
    %v62 = vunpack.c.l.bf16 %v54
    %v63 = vunpack.c.l.bf16 %v55
    %v64 = vunpack.c.l.bf16 %v56
    %v65 = vunpack.c.l.bf16 %v57
    %v66 = vunpack.c.l.bf16 %v58
    %v67 = vld [vmem:[%s1] sm:$0x1]
    %v68 = vld [vmem:[%s2] sm:$0x1]
    %vm69 = vcmask 261120
    %v70 = vsel %vm69, %v59, 0.0
    %71 = vadd.xlane.f32.xlu0 %v70
    %v72 = vpop.xlane.xlu0 %71
    %v73 = vsel %vm69, %v60, 0.0
    %74 = vadd.xlane.f32.xlu0 %v73
    %v75 = vpop.xlane.xlu0 %74
    %v76 = vsel %vm69, %v61, 0.0
    %77 = vadd.xlane.f32.xlu0 %v76
    %v78 = vpop.xlane.xlu0 %77
    %v79 = vsel %vm69, %v62, 0.0
    %80 = vadd.xlane.f32.xlu0 %v79
    %v81 = vpop.xlane.xlu0 %80
    %v82 = vsel %vm69, %v63, 0.0
    %83 = vadd.xlane.f32.xlu0 %v82
    %v84 = vpop.xlane.xlu0 %83
    %v85 = vsel %vm69, %v64, 0.0
    %86 = vadd.xlane.f32.xlu0 %v85
    %v87 = vpop.xlane.xlu0 %86
    %v88 = vsel %vm69, %v65, 0.0
    %89 = vadd.xlane.f32.xlu0 %v88
    %v90 = vpop.xlane.xlu0 %89
    %v91 = vsel %vm69, %v66, 0.0
    %92 = vadd.xlane.f32.xlu0 %v91
    %v93 = vpop.xlane.xlu0 %92
    %v94 = vrcp.pop 32.0
    %v95 = vmul.f32 %v72, %v94
    %v96 = vmul.f32 %v75, %v94
    %v97 = vmul.f32 %v78, %v94
    %v98 = vmul.f32 %v81, %v94
    %v99 = vmul.f32 %v84, %v94
    %v100 = vmul.f32 %v87, %v94
    %v101 = vmul.f32 %v90, %v94
    %v102 = vmul.f32 %v93, %v94
    %v103 = vsub.f32 %v59, %v95
    %v104 = vsub.f32 %v60, %v96
    %v105 = vsub.f32 %v61, %v97
    %v106 = vsub.f32 %v62, %v98
    %v107 = vsub.f32 %v63, %v99
    %v108 = vsub.f32 %v64, %v100
    %v109 = vsub.f32 %v65, %v101
    %v110 = vsub.f32 %v66, %v102
    %v111 = vmul.f32 %v103, %v103
    %v112 = vmul.f32 %v104, %v104
    %v113 = vmul.f32 %v105, %v105
    %v114 = vmul.f32 %v106, %v106
    %v115 = vmul.f32 %v107, %v107
    %v116 = vmul.f32 %v108, %v108
    %v117 = vmul.f32 %v109, %v109
    %v118 = vmul.f32 %v110, %v110
    %v119 = vsel %vm69, %v111, 0.0
    %120 = vadd.xlane.f32.xlu0 %v119
    %v121 = vpop.xlane.xlu0 %120
    %v122 = vsel %vm69, %v112, 0.0
    %123 = vadd.xlane.f32.xlu0 %v122
    %v124 = vpop.xlane.xlu0 %123
    %v125 = vsel %vm69, %v113, 0.0
    %126 = vadd.xlane.f32.xlu0 %v125
    %v127 = vpop.xlane.xlu0 %126
    %v128 = vsel %vm69, %v114, 0.0
    %129 = vadd.xlane.f32.xlu0 %v128
    %v130 = vpop.xlane.xlu0 %129
    %v131 = vsel %vm69, %v115, 0.0
    %132 = vadd.xlane.f32.xlu0 %v131
    %v133 = vpop.xlane.xlu0 %132
    %v134 = vsel %vm69, %v116, 0.0
    %135 = vadd.xlane.f32.xlu0 %v134
    %v136 = vpop.xlane.xlu0 %135
    %v137 = vsel %vm69, %v117, 0.0
    %138 = vadd.xlane.f32.xlu0 %v137
    %v139 = vpop.xlane.xlu0 %138
    %v140 = vsel %vm69, %v118, 0.0
    %141 = vadd.xlane.f32.xlu0 %v140
    %v142 = vpop.xlane.xlu0 %141
    %v143 = vmul.f32 %v121, %v94
    %v144 = vmul.f32 %v124, %v94
    %v145 = vmul.f32 %v127, %v94
    %v146 = vmul.f32 %v130, %v94
    %v147 = vmul.f32 %v133, %v94
    %v148 = vmul.f32 %v136, %v94
    %v149 = vmul.f32 %v139, %v94
    %v150 = vmul.f32 %v142, %v94
    %v151 = vadd.f32 %v143, 1e-05
    %v152 = vadd.f32 %v144, 1e-05
    %v153 = vadd.f32 %v145, 1e-05
    %v154 = vadd.f32 %v146, 1e-05
    %v155 = vadd.f32 %v147, 1e-05
    %v156 = vadd.f32 %v148, 1e-05
    %v157 = vadd.f32 %v149, 1e-05
    %v158 = vadd.f32 %v150, 1e-05
    %v159 = vrsqrt.pop %v151
    %v160 = vrsqrt.pop %v152
    %v161 = vrsqrt.pop %v153
    %v162 = vrsqrt.pop %v154
    %v163 = vrsqrt.pop %v155
    %v164 = vrsqrt.pop %v156
    %v165 = vrsqrt.pop %v157
    %v166 = vrsqrt.pop %v158
    %v167 = vmul.f32 %v103, %v159
    %v168 = vmul.f32 %v104, %v160
    %v169 = vmul.f32 %v105, %v161
    %v170 = vmul.f32 %v106, %v162
    %v171 = vmul.f32 %v107, %v163
    %v172 = vmul.f32 %v108, %v164
    %v173 = vmul.f32 %v109, %v165
    %v174 = vmul.f32 %v110, %v166
    %v176 = vlaneseq
    %v177 = vshrl.u32 %v176, 7
    %v178 = vsub.s32 0, %v177
    %v179 = vrot.slane %v67, %v178
    %v181 = vmul.f32 %v167, %v179
    %v182 = vmul.f32 %v168, %v179
    %v183 = vmul.f32 %v169, %v179
    %v184 = vmul.f32 %v170, %v179
    %v185 = vmul.f32 %v171, %v179
    %v186 = vmul.f32 %v172, %v179
    %v187 = vmul.f32 %v173, %v179
    %v188 = vmul.f32 %v174, %v179
    %v190 = vlaneseq
    %v191 = vshrl.u32 %v190, 7
    %v192 = vsub.s32 0, %v191
    %v193 = vrot.slane %v68, %v192
    %v195 = vadd.f32 %v181, %v193
    %v196 = vadd.f32 %v182, %v193
    %v197 = vadd.f32 %v183, %v193
    %v198 = vadd.f32 %v184, %v193
    %v199 = vadd.f32 %v185, %v193
    %v200 = vadd.f32 %v186, %v193
    %v201 = vadd.f32 %v187, %v193
    %v202 = vadd.f32 %v188, %v193
    %v203 = vpack.c.bf16 %v196, %v195
    %v204 = vpack.c.bf16 %v198, %v197
    %v205 = vpack.c.bf16 %v200, %v199
    %v206 = vpack.c.bf16 %v202, %v201
    %v211 = vunpack.c.l.b16 %v203
    %v212 = vunpack.c.h.b16 %v203
    %v213 = vunpack.c.l.b16 %v204
    %v214 = vunpack.c.h.b16 %v204
    %v215 = vunpack.c.l.b16 %v205
    %v216 = vunpack.c.h.b16 %v205
    %v217 = vunpack.c.l.b16 %v206
    %v218 = vunpack.c.h.b16 %v206
    %v219 = vpack.c.b16 %v211, %v211
    %v220 = vpack.c.b16 %v212, %v212
    %v221 = vpack.c.b16 %v213, %v213
    %v222 = vpack.c.b16 %v214, %v214
    %v223 = vpack.c.b16 %v215, %v215
    %v224 = vpack.c.b16 %v216, %v216
    %v225 = vpack.c.b16 %v217, %v217
    %v226 = vpack.c.b16 %v218, %v218
    %vm235 = vcmask 257024
    %236 = vst.msk [vmem:[#allocation2] sm:$0xf] %vm235, %v219
    %237 = vst.msk [vmem:[#allocation2 + $0x4] sm:$0xf] %vm235, %v220
    %238 = vst.msk [vmem:[#allocation2 + $0x8] sm:$0xf] %vm235, %v221
    %239 = vst.msk [vmem:[#allocation2 + $0xc] sm:$0xf] %vm235, %v222
    %240 = vst.msk [vmem:[#allocation2 + $0x10] sm:$0xf] %vm235, %v223
    %241 = vst.msk [vmem:[#allocation2 + $0x14] sm:$0xf] %vm235, %v224
    %242 = vst.msk [vmem:[#allocation2 + $0x18] sm:$0xf] %vm235, %v225
    %243 = vst.msk [vmem:[#allocation2 + $0x1c] sm:$0xf] %vm235, %v226
    %v244 = vld [vmem:[#allocation2] sm:$0xf]
    %v245 = vld [vmem:[#allocation2 + $0x4] sm:$0xf]
    %v246 = vld [vmem:[#allocation2 + $0x8] sm:$0xf]
    %v247 = vld [vmem:[#allocation2 + $0xc] sm:$0xf]
    %v248 = vld [vmem:[#allocation2 + $0x10] sm:$0xf]
    %v249 = vld [vmem:[#allocation2 + $0x14] sm:$0xf]
    %v250 = vld [vmem:[#allocation2 + $0x18] sm:$0xf]
    %v251 = vld [vmem:[#allocation2 + $0x1c] sm:$0xf]
    %v252 = vld [vmem:[%s3] sm:$0xf]
    %v253 = vld [vmem:[%s3 + $0x4] sm:$0xf]
    %v254 = vld [vmem:[%s3 + $0x8] sm:$0xf]
    %v255 = vld [vmem:[%s3 + $0xc] sm:$0xf]
    %v256 = vld [vmem:[%s5] sm:$0x1]
    %v258 = vlaneseq
    %v259 = vshrl.u32 %v258, 7
    %v260 = vsub.s32 0, %v259
    %v261 = vrot.slane %v256, %v260
    %v271 = vunpack.c.l.b16 %v244
    %v272 = vunpack.c.l.b16 %v245
    %v273 = vunpack.c.l.b16 %v246
    %v274 = vunpack.c.l.b16 %v247
    %v275 = vunpack.c.l.b16 %v248
    %v276 = vunpack.c.l.b16 %v249
    %v277 = vunpack.c.l.b16 %v250
    %v278 = vunpack.c.l.b16 %v251
    %v279 = vpack.c.b16 %v272, %v271
    %v280 = vpack.c.b16 %v274, %v273
    %v281 = vpack.c.b16 %v276, %v275
    %v282 = vpack.c.b16 %v278, %v277
    %v287 = vunpack.c.l.b16 %v252
    %v288 = vunpack.c.l.b16 %v253
    %v289 = vunpack.c.l.b16 %v254
    %v290 = vunpack.c.l.b16 %v255
    %v291 = vpack.c.b16 %v288, %v287
    %v292 = vpack.c.b16 %v290, %v289
    %v296 = vsel %vm69, %v279, 0
    %v299 = vsel %vm69, %v280, 0
    %v302 = vsel %vm69, %v281, 0
    %v305 = vsel %vm69, %v282, 0
    %307 = vmatprep.subr.bf16.mxu0 0
    %308 = vmatpush1.bf16.msra.mxu0 0
    %309 = vmatprep.subr.bf16.mxu0 0
    %310 = vmatpush1.bf16.msra.mxu0 0
    %311 = vmatprep.subr.bf16.mxu0 0
    %312 = vmatpush1.bf16.msra.mxu0 0
    %313 = vmatprep.subr.bf16.mxu0 0
    %314 = vmatpush1.bf16.msra.mxu0 0
    %315 = vmatprep.subr.bf16.mxu0 0
    %316 = vmatpush1.bf16.msra.mxu0 0
    %317 = vmatprep.subr.bf16.mxu0 0
    %318 = vmatpush1.bf16.msra.mxu0 0
    %319 = vmatprep.subr.bf16.mxu0 0
    %320 = vmatpush1.bf16.msra.mxu0 %v292
    %321 = vmatprep.subr.bf16.mxu0 0
    %322 = vmatpush1.bf16.msra.mxu0 %v291
    %323 = vmatprep.subr.bf16.mxu0 0
    %324 = vmatpush2.bf16.msra.mxu0 0
    %325 = vmatprep.subr.bf16.mxu0 0
    %326 = vmatpush2.bf16.msra.mxu0 0
    %327 = vmatprep.subr.bf16.mxu0 0
    %328 = vmatpush2.bf16.msra.mxu0 0
    %329 = vmatprep.subr.bf16.mxu0 0
    %330 = vmatpush2.bf16.msra.mxu0 0
    %331 = vmatprep.subr.bf16.mxu0 0
    %332 = vmatpush2.bf16.msra.mxu0 0
    %333 = vmatprep.subr.bf16.mxu0 0
    %334 = vmatpush2.bf16.msra.mxu0 0
    %335 = vmatprep.subr.bf16.mxu0 0
    %336 = vmatpush2.bf16.msra.mxu0 0
    %337 = vmatprep.subr.bf16.mxu0 0
    %338 = vmatpush2.bf16.msra.mxu0 0
    %339 = vmatprep.mubr.bf16.mxu0 0
    %340 = vmatmul.mubr.bf16.gmra.mxu0 %v296
    %v341 = vpop.f32.mrf.mxu0
    %v342 = vadd.f32 %v261, %v341
    %v343 = vpop.f32.mrf.mxu0
    %v344 = vpop.f32.mrf.mxu0
    %v345 = vadd.f32 %v261, %v344
    %v346 = vpop.f32.mrf.mxu0
    %347 = vmatprep.mubr.bf16.mxu0 0
    %348 = vmatmul.mubr.bf16.gmra.mxu0 %v299
    %v349 = vpop.f32.mrf.mxu0
    %v350 = vadd.f32 %v261, %v349
    %v351 = vpop.f32.mrf.mxu0
    %v352 = vpop.f32.mrf.mxu0
    %v353 = vadd.f32 %v261, %v352
    %v354 = vpop.f32.mrf.mxu0
    %355 = vmatprep.mubr.bf16.mxu0 0
    %356 = vmatmul.mubr.bf16.gmra.mxu0 %v302
    %v357 = vpop.f32.mrf.mxu0
    %v358 = vadd.f32 %v261, %v357
    %v359 = vpop.f32.mrf.mxu0
    %v360 = vpop.f32.mrf.mxu0
    %v361 = vadd.f32 %v261, %v360
    %v362 = vpop.f32.mrf.mxu0
    %363 = vmatprep.mubr.bf16.mxu0 0
    %364 = vmatmul.mubr.bf16.gmra.mxu0 %v305
    %v365 = vpop.f32.mrf.mxu0
    %v366 = vadd.f32 %v261, %v365
    %v367 = vpop.f32.mrf.mxu0
    %v368 = vpop.f32.mrf.mxu0
    %v369 = vadd.f32 %v261, %v368
    %v370 = vpop.f32.mrf.mxu0
    %371 = vdwg.mxu0
    %372 = vst [vmem:[#allocation3] sm:$0xff] %v342
    %373 = vst [vmem:[#allocation3 + $0x8] sm:$0xff] %v345
    %374 = vst [vmem:[#allocation3 + $0x10] sm:$0xff] %v350
    %375 = vst [vmem:[#allocation3 + $0x18] sm:$0xff] %v353
    %376 = vst [vmem:[#allocation3 + $0x20] sm:$0xff] %v358
    %377 = vst [vmem:[#allocation3 + $0x28] sm:$0xff] %v361
    %378 = vst [vmem:[#allocation3 + $0x30] sm:$0xff] %v366
    %379 = vst [vmem:[#allocation3 + $0x38] sm:$0xff] %v369
    %v380 = vld [vmem:[#allocation4] sm:$0xf]
    %v381 = vld [vmem:[#allocation4 + $0x4] sm:$0xf]
    %v382 = vld [vmem:[#allocation4 + $0x8] sm:$0xf]
    %v383 = vld [vmem:[#allocation4 + $0xc] sm:$0xf]
    %v384 = vld [vmem:[#allocation3] sm:$0xff]
    %v389 = vunpack.c.l.b16 %v380
    %v390 = vunpack.c.l.b16 %v381
    %v391 = vunpack.c.l.b16 %v382
    %v392 = vunpack.c.l.b16 %v383
    %v393 = vpack.c.b16 %v390, %v389
    %v394 = vpack.c.b16 %v392, %v391
    %v398 = vsel %vm69, 0, 0
    %400 = vmatprep.subr.bf16.mxu0 0
    %401 = vmatpush1.bf16.msra.mxu0 0
    %402 = vmatprep.subr.bf16.mxu0 0
    %403 = vmatpush1.bf16.msra.mxu0 0
    %404 = vmatprep.subr.bf16.mxu0 0
    %405 = vmatpush1.bf16.msra.mxu0 0
    %406 = vmatprep.subr.bf16.mxu0 0
    %407 = vmatpush1.bf16.msra.mxu0 0
    %408 = vmatprep.subr.bf16.mxu0 0
    %409 = vmatpush1.bf16.msra.mxu0 0
    %410 = vmatprep.subr.bf16.mxu0 0
    %411 = vmatpush1.bf16.msra.mxu0 0
    %412 = vmatprep.subr.bf16.mxu0 0
    %413 = vmatpush1.bf16.msra.mxu0 %v394
    %414 = vmatprep.subr.bf16.mxu0 0
    %415 = vmatpush1.bf16.msra.mxu0 %v393
    %416 = vmatprep.subr.bf16.mxu0 0
    %417 = vmatpush2.bf16.msra.mxu0 0
    %418 = vmatprep.subr.bf16.mxu0 0
    %419 = vmatpush2.bf16.msra.mxu0 0
    %420 = vmatprep.subr.bf16.mxu0 0
    %421 = vmatpush2.bf16.msra.mxu0 0
    %422 = vmatprep.subr.bf16.mxu0 0
    %423 = vmatpush2.bf16.msra.mxu0 0
    %424 = vmatprep.subr.bf16.mxu0 0
    %425 = vmatpush2.bf16.msra.mxu0 0
    %426 = vmatprep.subr.bf16.mxu0 0
    %427 = vmatpush2.bf16.msra.mxu0 0
    %428 = vmatprep.subr.bf16.mxu0 0
    %429 = vmatpush2.bf16.msra.mxu0 0
    %430 = vmatprep.subr.bf16.mxu0 0
    %431 = vmatpush2.bf16.msra.mxu0 0
    %432 = vmatprep.mubr.bf16.mxu0 0
    %433 = vmatmul.mubr.bf16.gmra.mxu0 %v398
    %v434 = vpop.f32.mrf.mxu0
    %v435 = vadd.f32 0.0, %v434
    %v436 = vpop.f32.mrf.mxu0
    %v437 = vpop.f32.mrf.mxu0
    %v438 = vpop.f32.mrf.mxu0
    %439 = vdwg.mxu0
    %v440 = vadd.f32 %v384, %v435
    %v441 = vxor.u32 %v440, 2147483648
    %v442 = vmul.f32 %v441, 1.442695
    %v443 = vpow.pop %v442
    %v444 = vadd.f32 %v443, 1.0
    %v445 = vrcp.pop %v444
    %v446 = vmul.f32 1.0, %v445
    %v447 = vtanh.pop %v440
    %v448 = vmul.f32 %v446, 0.0
    %450 = vrot.lane.b32.xlu0 %v447, 64
    %v451 = vpop.permute.xlu0 %450
    %v453 = vmul.f32 %v446, %v451
    %455 = vrot.lane.b32.xlu0 %v453, 32
    %v456 = vpop.permute.xlu0 %455
    %v458 = vadd.f32 %v448, %v456
    %v459 = vtanh.pop %v458
    %461 = vrot.lane.b32.xlu0 %v459, 64
    %v462 = vpop.permute.xlu0 %461
    %v464 = vmul.f32 %v446, %v462
    %v465 = vpack.c.bf16 %v464, %v464
    %v467 = vunpack.c.l.b16 %v465
    %v468 = vpack.c.b16 %v467, %v467
    %469 = vrot.lane.b32.xlu0 %v468, 32
    %v470 = vpop.permute.xlu0 %469
    %472 = vst.msk [vmem:[#allocation2] sm:$0xf] %vm235, %v470
    %s473 = scalar_lea.vmem [#allocation3], 8
    %v474 = vld [vmem:[%s473] sm:$0xff]
    %475 = vrot.lane.b32.xlu0 %v465, 32
    %v476 = vpop.permute.xlu0 %475
    %v478 = vsel %vm69, %v476, 0
    %480 = vmatprep.subr.bf16.mxu0 0
    %481 = vmatpush1.bf16.msra.mxu0 0
    %482 = vmatprep.subr.bf16.mxu0 0
    %483 = vmatpush1.bf16.msra.mxu0 0
    %484 = vmatprep.subr.bf16.mxu0 0
    %485 = vmatpush1.bf16.msra.mxu0 0
    %486 = vmatprep.subr.bf16.mxu0 0
    %487 = vmatpush1.bf16.msra.mxu0 0
    %488 = vmatprep.subr.bf16.mxu0 0
    %489 = vmatpush1.bf16.msra.mxu0 0
    %490 = vmatprep.subr.bf16.mxu0 0
    %491 = vmatpush1.bf16.msra.mxu0 0
    %492 = vmatprep.subr.bf16.mxu0 0
    %493 = vmatpush1.bf16.msra.mxu0 %v394
    %494 = vmatprep.subr.bf16.mxu0 0
    %495 = vmatpush1.bf16.msra.mxu0 %v393
    %496 = vmatprep.subr.bf16.mxu0 0
    %497 = vmatpush2.bf16.msra.mxu0 0
    %498 = vmatprep.subr.bf16.mxu0 0
    %499 = vmatpush2.bf16.msra.mxu0 0
    %500 = vmatprep.subr.bf16.mxu0 0
    %501 = vmatpush2.bf16.msra.mxu0 0
    %502 = vmatprep.subr.bf16.mxu0 0
    %503 = vmatpush2.bf16.msra.mxu0 0
    %504 = vmatprep.subr.bf16.mxu0 0
    %505 = vmatpush2.bf16.msra.mxu0 0
    %506 = vmatprep.subr.bf16.mxu0 0
    %507 = vmatpush2.bf16.msra.mxu0 0
    %508 = vmatprep.subr.bf16.mxu0 0
    %509 = vmatpush2.bf16.msra.mxu0 0
    %510 = vmatprep.subr.bf16.mxu0 0
    %511 = vmatpush2.bf16.msra.mxu0 0
    %512 = vmatprep.mubr.bf16.mxu0 0
    %513 = vmatmul.mubr.bf16.gmra.mxu0 %v478
    %v514 = vpop.f32.mrf.mxu0
    %v515 = vadd.f32 0.0, %v514
    %v516 = vpop.f32.mrf.mxu0
    %v517 = vpop.f32.mrf.mxu0
    %v518 = vpop.f32.mrf.mxu0
    %519 = vdwg.mxu0
    %v520 = vadd.f32 %v474, %v515
    %v521 = vxor.u32 %v520, 2147483648
    %v522 = vmul.f32 %v521, 1.442695
    %v523 = vpow.pop %v522
    %v524 = vadd.f32 %v523, 1.0
    %v525 = vrcp.pop %v524
    %v526 = vmul.f32 1.0, %v525
    %v527 = vtanh.pop %v520
    %v528 = vmul.f32 %v526, %v458
    %530 = vrot.lane.b32.xlu0 %v527, 64
    %v531 = vpop.permute.xlu0 %530
    %v533 = vmul.f32 %v526, %v531
    %535 = vrot.lane.b32.xlu0 %v533, 32
    %v536 = vpop.permute.xlu0 %535
    %v538 = vadd.f32 %v528, %v536
    %v539 = vtanh.pop %v538
    %541 = vrot.lane.b32.xlu0 %v539, 64
    %v542 = vpop.permute.xlu0 %541
    %v544 = vmul.f32 %v526, %v542
    %v545 = vpack.c.bf16 %v544, %v544
    %v547 = vunpack.c.l.b16 %v545
    %v548 = vpack.c.b16 %v547, %v547
    %549 = vrot.lane.b32.xlu0 %v548, 32
    %v550 = vpop.permute.xlu0 %549
    %s552 = scalar_lea.vmem [#allocation2], 4
    %553 = vst.msk [vmem:[%s552] sm:$0xf] %vm235, %v550
    %s554 = scalar_lea.vmem [#allocation3], 16
    %v555 = vld [vmem:[%s554] sm:$0xff]
    %556 = vrot.lane.b32.xlu0 %v545, 32
    %v557 = vpop.permute.xlu0 %556
    %v559 = vsel %vm69, %v557, 0
    %561 = vmatprep.subr.bf16.mxu0 0
    %562 = vmatpush1.bf16.msra.mxu0 0
    %563 = vmatprep.subr.bf16.mxu0 0
    %564 = vmatpush1.bf16.msra.mxu0 0
    %565 = vmatprep.subr.bf16.mxu0 0
    %566 = vmatpush1.bf16.msra.mxu0 0
    %567 = vmatprep.subr.bf16.mxu0 0
    %568 = vmatpush1.bf16.msra.mxu0 0
    %569 = vmatprep.subr.bf16.mxu0 0
    %570 = vmatpush1.bf16.msra.mxu0 0
    %571 = vmatprep.subr.bf16.mxu0 0
    %572 = vmatpush1.bf16.msra.mxu0 0
    %573 = vmatprep.subr.bf16.mxu0 0
    %574 = vmatpush1.bf16.msra.mxu0 %v394
    %575 = vmatprep.subr.bf16.mxu0 0
    %576 = vmatpush1.bf16.msra.mxu0 %v393
    %577 = vmatprep.subr.bf16.mxu0 0
    %578 = vmatpush2.bf16.msra.mxu0 0
    %579 = vmatprep.subr.bf16.mxu0 0
    %580 = vmatpush2.bf16.msra.mxu0 0
    %581 = vmatprep.subr.bf16.mxu0 0
    %582 = vmatpush2.bf16.msra.mxu0 0
    %583 = vmatprep.subr.bf16.mxu0 0
    %584 = vmatpush2.bf16.msra.mxu0 0
    %585 = vmatprep.subr.bf16.mxu0 0
    %586 = vmatpush2.bf16.msra.mxu0 0
    %587 = vmatprep.subr.bf16.mxu0 0
    %588 = vmatpush2.bf16.msra.mxu0 0
    %589 = vmatprep.subr.bf16.mxu0 0
    %590 = vmatpush2.bf16.msra.mxu0 0
    %591 = vmatprep.subr.bf16.mxu0 0
    %592 = vmatpush2.bf16.msra.mxu0 0
    %593 = vmatprep.mubr.bf16.mxu0 0
    %594 = vmatmul.mubr.bf16.gmra.mxu0 %v559
    %v595 = vpop.f32.mrf.mxu0
    %v596 = vadd.f32 0.0, %v595
    %v597 = vpop.f32.mrf.mxu0
    %v598 = vpop.f32.mrf.mxu0
    %v599 = vpop.f32.mrf.mxu0
    %600 = vdwg.mxu0
    %v601 = vadd.f32 %v555, %v596
    %v602 = vxor.u32 %v601, 2147483648
    %v603 = vmul.f32 %v602, 1.442695
    %v604 = vpow.pop %v603
    %v605 = vadd.f32 %v604, 1.0
    %v606 = vrcp.pop %v605
    %v607 = vmul.f32 1.0, %v606
    %v608 = vtanh.pop %v601
    %v609 = vmul.f32 %v607, %v538
    %611 = vrot.lane.b32.xlu0 %v608, 64
    %v612 = vpop.permute.xlu0 %611
    %v614 = vmul.f32 %v607, %v612
    %616 = vrot.lane.b32.xlu0 %v614, 32
    %v617 = vpop.permute.xlu0 %616
    %v619 = vadd.f32 %v609, %v617
    %v620 = vtanh.pop %v619
    %622 = vrot.lane.b32.xlu0 %v620, 64
    %v623 = vpop.permute.xlu0 %622
    %v625 = vmul.f32 %v607, %v623
    %v626 = vpack.c.bf16 %v625, %v625
    %v628 = vunpack.c.l.b16 %v626
    %v629 = vpack.c.b16 %v628, %v628
    %630 = vrot.lane.b32.xlu0 %v629, 32
    %v631 = vpop.permute.xlu0 %630
    %s633 = scalar_lea.vmem [#allocation2], 8
    %634 = vst.msk [vmem:[%s633] sm:$0xf] %vm235, %v631
    %s635 = scalar_lea.vmem [#allocation3], 24
    %v636 = vld [vmem:[%s635] sm:$0xff]
    %637 = vrot.lane.b32.xlu0 %v626, 32
    %v638 = vpop.permute.xlu0 %637
    %v640 = vsel %vm69, %v638, 0
    %642 = vmatprep.subr.bf16.mxu0 0
    %643 = vmatpush1.bf16.msra.mxu0 0
    %644 = vmatprep.subr.bf16.mxu0 0
    %645 = vmatpush1.bf16.msra.mxu0 0
    %646 = vmatprep.subr.bf16.mxu0 0
    %647 = vmatpush1.bf16.msra.mxu0 0
    %648 = vmatprep.subr.bf16.mxu0 0
    %649 = vmatpush1.bf16.msra.mxu0 0
    %650 = vmatprep.subr.bf16.mxu0 0
    %651 = vmatpush1.bf16.msra.mxu0 0
    %652 = vmatprep.subr.bf16.mxu0 0
    %653 = vmatpush1.bf16.msra.mxu0 0
    %654 = vmatprep.subr.bf16.mxu0 0
    %655 = vmatpush1.bf16.msra.mxu0 %v394
    %656 = vmatprep.subr.bf16.mxu0 0
    %657 = vmatpush1.bf16.msra.mxu0 %v393
    %658 = vmatprep.subr.bf16.mxu0 0
    %659 = vmatpush2.bf16.msra.mxu0 0
    %660 = vmatprep.subr.bf16.mxu0 0
    %661 = vmatpush2.bf16.msra.mxu0 0
    %662 = vmatprep.subr.bf16.mxu0 0
    %663 = vmatpush2.bf16.msra.mxu0 0
    %664 = vmatprep.subr.bf16.mxu0 0
    %665 = vmatpush2.bf16.msra.mxu0 0
    %666 = vmatprep.subr.bf16.mxu0 0
    %667 = vmatpush2.bf16.msra.mxu0 0
    %668 = vmatprep.subr.bf16.mxu0 0
    %669 = vmatpush2.bf16.msra.mxu0 0
    %670 = vmatprep.subr.bf16.mxu0 0
    %671 = vmatpush2.bf16.msra.mxu0 0
    %672 = vmatprep.subr.bf16.mxu0 0
    %673 = vmatpush2.bf16.msra.mxu0 0
    %674 = vmatprep.mubr.bf16.mxu0 0
    %675 = vmatmul.mubr.bf16.gmra.mxu0 %v640
    %v676 = vpop.f32.mrf.mxu0
    %v677 = vadd.f32 0.0, %v676
    %v678 = vpop.f32.mrf.mxu0
    %v679 = vpop.f32.mrf.mxu0
    %v680 = vpop.f32.mrf.mxu0
    %681 = vdwg.mxu0
    %v682 = vadd.f32 %v636, %v677
    %v683 = vxor.u32 %v682, 2147483648
    %v684 = vmul.f32 %v683, 1.442695
    %v685 = vpow.pop %v684
    %v686 = vadd.f32 %v685, 1.0
    %v687 = vrcp.pop %v686
    %v688 = vmul.f32 1.0, %v687
    %v689 = vtanh.pop %v682
    %v690 = vmul.f32 %v688, %v619
    %692 = vrot.lane.b32.xlu0 %v689, 64
    %v693 = vpop.permute.xlu0 %692
    %v695 = vmul.f32 %v688, %v693
    %697 = vrot.lane.b32.xlu0 %v695, 32
    %v698 = vpop.permute.xlu0 %697
    %v700 = vadd.f32 %v690, %v698
    %v701 = vtanh.pop %v700
    %703 = vrot.lane.b32.xlu0 %v701, 64
    %v704 = vpop.permute.xlu0 %703
    %v706 = vmul.f32 %v688, %v704
    %v707 = vpack.c.bf16 %v706, %v706
    %v709 = vunpack.c.l.b16 %v707
    %v710 = vpack.c.b16 %v709, %v709
    %711 = vrot.lane.b32.xlu0 %v710, 32
    %v712 = vpop.permute.xlu0 %711
    %s714 = scalar_lea.vmem [#allocation2], 12
    %715 = vst.msk [vmem:[%s714] sm:$0xf] %vm235, %v712
    %s716 = scalar_lea.vmem [#allocation3], 32
    %v717 = vld [vmem:[%s716] sm:$0xff]
    %718 = vrot.lane.b32.xlu0 %v707, 32
    %v719 = vpop.permute.xlu0 %718
    %v721 = vsel %vm69, %v719, 0
    %723 = vmatprep.subr.bf16.mxu0 0
    %724 = vmatpush1.bf16.msra.mxu0 0
    %725 = vmatprep.subr.bf16.mxu0 0
    %726 = vmatpush1.bf16.msra.mxu0 0
    %727 = vmatprep.subr.bf16.mxu0 0
    %728 = vmatpush1.bf16.msra.mxu0 0
    %729 = vmatprep.subr.bf16.mxu0 0
    %730 = vmatpush1.bf16.msra.mxu0 0
    %731 = vmatprep.subr.bf16.mxu0 0
    %732 = vmatpush1.bf16.msra.mxu0 0
    %733 = vmatprep.subr.bf16.mxu0 0
    %734 = vmatpush1.bf16.msra.mxu0 0
    %735 = vmatprep.subr.bf16.mxu0 0
    %736 = vmatpush1.bf16.msra.mxu0 %v394
    %737 = vmatprep.subr.bf16.mxu0 0
    %738 = vmatpush1.bf16.msra.mxu0 %v393
    %739 = vmatprep.subr.bf16.mxu0 0
    %740 = vmatpush2.bf16.msra.mxu0 0
    %741 = vmatprep.subr.bf16.mxu0 0
    %742 = vmatpush2.bf16.msra.mxu0 0
    %743 = vmatprep.subr.bf16.mxu0 0
    %744 = vmatpush2.bf16.msra.mxu0 0
    %745 = vmatprep.subr.bf16.mxu0 0
    %746 = vmatpush2.bf16.msra.mxu0 0
    %747 = vmatprep.subr.bf16.mxu0 0
    %748 = vmatpush2.bf16.msra.mxu0 0
    %749 = vmatprep.subr.bf16.mxu0 0
    %750 = vmatpush2.bf16.msra.mxu0 0
    %751 = vmatprep.subr.bf16.mxu0 0
    %752 = vmatpush2.bf16.msra.mxu0 0
    %753 = vmatprep.subr.bf16.mxu0 0
    %754 = vmatpush2.bf16.msra.mxu0 0
    %755 = vmatprep.mubr.bf16.mxu0 0
    %756 = vmatmul.mubr.bf16.gmra.mxu0 %v721
    %v757 = vpop.f32.mrf.mxu0
    %v758 = vadd.f32 0.0, %v757
    %v759 = vpop.f32.mrf.mxu0
    %v760 = vpop.f32.mrf.mxu0
    %v761 = vpop.f32.mrf.mxu0
    %762 = vdwg.mxu0
    %v763 = vadd.f32 %v717, %v758
    %v764 = vxor.u32 %v763, 2147483648
    %v765 = vmul.f32 %v764, 1.442695
    %v766 = vpow.pop %v765
    %v767 = vadd.f32 %v766, 1.0
    %v768 = vrcp.pop %v767
    %v769 = vmul.f32 1.0, %v768
    %v770 = vtanh.pop %v763
    %v771 = vmul.f32 %v769, %v700
    %773 = vrot.lane.b32.xlu0 %v770, 64
    %v774 = vpop.permute.xlu0 %773
    %v776 = vmul.f32 %v769, %v774
    %778 = vrot.lane.b32.xlu0 %v776, 32
    %v779 = vpop.permute.xlu0 %778
    %v781 = vadd.f32 %v771, %v779
    %v782 = vtanh.pop %v781
    %784 = vrot.lane.b32.xlu0 %v782, 64
    %v785 = vpop.permute.xlu0 %784
    %v787 = vmul.f32 %v769, %v785
    %v788 = vpack.c.bf16 %v787, %v787
    %v790 = vunpack.c.l.b16 %v788
    %v791 = vpack.c.b16 %v790, %v790
    %792 = vrot.lane.b32.xlu0 %v791, 32
    %v793 = vpop.permute.xlu0 %792
    %s795 = scalar_lea.vmem [#allocation2], 16
    %796 = vst.msk [vmem:[%s795] sm:$0xf] %vm235, %v793
    %s797 = scalar_lea.vmem [#allocation3], 40
    %v798 = vld [vmem:[%s797] sm:$0xff]
    %799 = vrot.lane.b32.xlu0 %v788, 32
    %v800 = vpop.permute.xlu0 %799
    %v802 = vsel %vm69, %v800, 0
    %804 = vmatprep.subr.bf16.mxu0 0
    %805 = vmatpush1.bf16.msra.mxu0 0
    %806 = vmatprep.subr.bf16.mxu0 0
    %807 = vmatpush1.bf16.msra.mxu0 0
    %808 = vmatprep.subr.bf16.mxu0 0
    %809 = vmatpush1.bf16.msra.mxu0 0
    %810 = vmatprep.subr.bf16.mxu0 0
    %811 = vmatpush1.bf16.msra.mxu0 0
    %812 = vmatprep.subr.bf16.mxu0 0
    %813 = vmatpush1.bf16.msra.mxu0 0
    %814 = vmatprep.subr.bf16.mxu0 0
    %815 = vmatpush1.bf16.msra.mxu0 0
    %816 = vmatprep.subr.bf16.mxu0 0
    %817 = vmatpush1.bf16.msra.mxu0 %v394
    %818 = vmatprep.subr.bf16.mxu0 0
    %819 = vmatpush1.bf16.msra.mxu0 %v393
    %820 = vmatprep.subr.bf16.mxu0 0
    %821 = vmatpush2.bf16.msra.mxu0 0
    %822 = vmatprep.subr.bf16.mxu0 0
    %823 = vmatpush2.bf16.msra.mxu0 0
    %824 = vmatprep.subr.bf16.mxu0 0
    %825 = vmatpush2.bf16.msra.mxu0 0
    %826 = vmatprep.subr.bf16.mxu0 0
    %827 = vmatpush2.bf16.msra.mxu0 0
    %828 = vmatprep.subr.bf16.mxu0 0
    %829 = vmatpush2.bf16.msra.mxu0 0
    %830 = vmatprep.subr.bf16.mxu0 0
    %831 = vmatpush2.bf16.msra.mxu0 0
    %832 = vmatprep.subr.bf16.mxu0 0
    %833 = vmatpush2.bf16.msra.mxu0 0
    %834 = vmatprep.subr.bf16.mxu0 0
    %835 = vmatpush2.bf16.msra.mxu0 0
    %836 = vmatprep.mubr.bf16.mxu0 0
    %837 = vmatmul.mubr.bf16.gmra.mxu0 %v802
    %v838 = vpop.f32.mrf.mxu0
    %v839 = vadd.f32 0.0, %v838
    %v840 = vpop.f32.mrf.mxu0
    %v841 = vpop.f32.mrf.mxu0
    %v842 = vpop.f32.mrf.mxu0
    %843 = vdwg.mxu0
    %v844 = vadd.f32 %v798, %v839
    %v845 = vxor.u32 %v844, 2147483648
    %v846 = vmul.f32 %v845, 1.442695
    %v847 = vpow.pop %v846
    %v848 = vadd.f32 %v847, 1.0
    %v849 = vrcp.pop %v848
    %v850 = vmul.f32 1.0, %v849
    %v851 = vtanh.pop %v844
    %v852 = vmul.f32 %v850, %v781
    %854 = vrot.lane.b32.xlu0 %v851, 64
    %v855 = vpop.permute.xlu0 %854
    %v857 = vmul.f32 %v850, %v855
    %859 = vrot.lane.b32.xlu0 %v857, 32
    %v860 = vpop.permute.xlu0 %859
    %v862 = vadd.f32 %v852, %v860
    %v863 = vtanh.pop %v862
    %865 = vrot.lane.b32.xlu0 %v863, 64
    %v866 = vpop.permute.xlu0 %865
    %v868 = vmul.f32 %v850, %v866
    %v869 = vpack.c.bf16 %v868, %v868
    %v871 = vunpack.c.l.b16 %v869
    %v872 = vpack.c.b16 %v871, %v871
    %873 = vrot.lane.b32.xlu0 %v872, 32
    %v874 = vpop.permute.xlu0 %873
    %s876 = scalar_lea.vmem [#allocation2], 20
    %877 = vst.msk [vmem:[%s876] sm:$0xf] %vm235, %v874
    %s878 = scalar_lea.vmem [#allocation3], 48
    %v879 = vld [vmem:[%s878] sm:$0xff]
    %880 = vrot.lane.b32.xlu0 %v869, 32
    %v881 = vpop.permute.xlu0 %880
    %v883 = vsel %vm69, %v881, 0
    %885 = vmatprep.subr.bf16.mxu0 0
    %886 = vmatpush1.bf16.msra.mxu0 0
    %887 = vmatprep.subr.bf16.mxu0 0
    %888 = vmatpush1.bf16.msra.mxu0 0
    %889 = vmatprep.subr.bf16.mxu0 0
    %890 = vmatpush1.bf16.msra.mxu0 0
    %891 = vmatprep.subr.bf16.mxu0 0
    %892 = vmatpush1.bf16.msra.mxu0 0
    %893 = vmatprep.subr.bf16.mxu0 0
    %894 = vmatpush1.bf16.msra.mxu0 0
    %895 = vmatprep.subr.bf16.mxu0 0
    %896 = vmatpush1.bf16.msra.mxu0 0
    %897 = vmatprep.subr.bf16.mxu0 0
    %898 = vmatpush1.bf16.msra.mxu0 %v394
    %899 = vmatprep.subr.bf16.mxu0 0
    %900 = vmatpush1.bf16.msra.mxu0 %v393
    %901 = vmatprep.subr.bf16.mxu0 0
    %902 = vmatpush2.bf16.msra.mxu0 0
    %903 = vmatprep.subr.bf16.mxu0 0
    %904 = vmatpush2.bf16.msra.mxu0 0
    %905 = vmatprep.subr.bf16.mxu0 0
    %906 = vmatpush2.bf16.msra.mxu0 0
    %907 = vmatprep.subr.bf16.mxu0 0
    %908 = vmatpush2.bf16.msra.mxu0 0
    %909 = vmatprep.subr.bf16.mxu0 0
    %910 = vmatpush2.bf16.msra.mxu0 0
    %911 = vmatprep.subr.bf16.mxu0 0
    %912 = vmatpush2.bf16.msra.mxu0 0
    %913 = vmatprep.subr.bf16.mxu0 0
    %914 = vmatpush2.bf16.msra.mxu0 0
    %915 = vmatprep.subr.bf16.mxu0 0
    %916 = vmatpush2.bf16.msra.mxu0 0
    %917 = vmatprep.mubr.bf16.mxu0 0
    %918 = vmatmul.mubr.bf16.gmra.mxu0 %v883
    %v919 = vpop.f32.mrf.mxu0
    %v920 = vadd.f32 0.0, %v919
    %v921 = vpop.f32.mrf.mxu0
    %v922 = vpop.f32.mrf.mxu0
    %v923 = vpop.f32.mrf.mxu0
    %924 = vdwg.mxu0
    %v925 = vadd.f32 %v879, %v920
    %v926 = vxor.u32 %v925, 2147483648
    %v927 = vmul.f32 %v926, 1.442695
    %v928 = vpow.pop %v927
    %v929 = vadd.f32 %v928, 1.0
    %v930 = vrcp.pop %v929
    %v931 = vmul.f32 1.0, %v930
    %v932 = vtanh.pop %v925
    %v933 = vmul.f32 %v931, %v862
    %935 = vrot.lane.b32.xlu0 %v932, 64
    %v936 = vpop.permute.xlu0 %935
    %v938 = vmul.f32 %v931, %v936
    %940 = vrot.lane.b32.xlu0 %v938, 32
    %v941 = vpop.permute.xlu0 %940
    %v943 = vadd.f32 %v933, %v941
    %v944 = vtanh.pop %v943
    %946 = vrot.lane.b32.xlu0 %v944, 64
    %v947 = vpop.permute.xlu0 %946
    %v949 = vmul.f32 %v931, %v947
    %v950 = vpack.c.bf16 %v949, %v949
    %v952 = vunpack.c.l.b16 %v950
    %v953 = vpack.c.b16 %v952, %v952
    %954 = vrot.lane.b32.xlu0 %v953, 32
    %v955 = vpop.permute.xlu0 %954
    %s957 = scalar_lea.vmem [#allocation2], 24
    %958 = vst.msk [vmem:[%s957] sm:$0xf] %vm235, %v955
    %s959 = scalar_lea.vmem [#allocation3], 56
    %v960 = vld [vmem:[%s959] sm:$0xff]
    %961 = vrot.lane.b32.xlu0 %v950, 32
    %v962 = vpop.permute.xlu0 %961
    %v964 = vsel %vm69, %v962, 0
    %966 = vmatprep.subr.bf16.mxu0 0
    %967 = vmatpush1.bf16.msra.mxu0 0
    %968 = vmatprep.subr.bf16.mxu0 0
    %969 = vmatpush1.bf16.msra.mxu0 0
    %970 = vmatprep.subr.bf16.mxu0 0
    %971 = vmatpush1.bf16.msra.mxu0 0
    %972 = vmatprep.subr.bf16.mxu0 0
    %973 = vmatpush1.bf16.msra.mxu0 0
    %974 = vmatprep.subr.bf16.mxu0 0
    %975 = vmatpush1.bf16.msra.mxu0 0
    %976 = vmatprep.subr.bf16.mxu0 0
    %977 = vmatpush1.bf16.msra.mxu0 0
    %978 = vmatprep.subr.bf16.mxu0 0
    %979 = vmatpush1.bf16.msra.mxu0 %v394
    %980 = vmatprep.subr.bf16.mxu0 0
    %981 = vmatpush1.bf16.msra.mxu0 %v393
    %982 = vmatprep.subr.bf16.mxu0 0
    %983 = vmatpush2.bf16.msra.mxu0 0
    %984 = vmatprep.subr.bf16.mxu0 0
    %985 = vmatpush2.bf16.msra.mxu0 0
    %986 = vmatprep.subr.bf16.mxu0 0
    %987 = vmatpush2.bf16.msra.mxu0 0
    %988 = vmatprep.subr.bf16.mxu0 0
    %989 = vmatpush2.bf16.msra.mxu0 0
    %990 = vmatprep.subr.bf16.mxu0 0
    %991 = vmatpush2.bf16.msra.mxu0 0
    %992 = vmatprep.subr.bf16.mxu0 0
    %993 = vmatpush2.bf16.msra.mxu0 0
    %994 = vmatprep.subr.bf16.mxu0 0
    %995 = vmatpush2.bf16.msra.mxu0 0
    %996 = vmatprep.subr.bf16.mxu0 0
    %997 = vmatpush2.bf16.msra.mxu0 0
    %998 = vmatprep.mubr.bf16.mxu0 0
    %999 = vmatmul.mubr.bf16.gmra.mxu0 %v964
    %v1000 = vpop.f32.mrf.mxu0
    %v1001 = vadd.f32 0.0, %v1000
    %v1002 = vpop.f32.mrf.mxu0
    %v1003 = vpop.f32.mrf.mxu0
    %v1004 = vpop.f32.mrf.mxu0
    %1005 = vdwg.mxu0
    %v1006 = vadd.f32 %v960, %v1001
    %v1007 = vxor.u32 %v1006, 2147483648
    %v1008 = vmul.f32 %v1007, 1.442695
    %v1009 = vpow.pop %v1008
    %v1010 = vadd.f32 %v1009, 1.0
    %v1011 = vrcp.pop %v1010
    %v1012 = vmul.f32 1.0, %v1011
    %v1013 = vtanh.pop %v1006
    %v1014 = vmul.f32 %v1012, %v943
    %1016 = vrot.lane.b32.xlu0 %v1013, 64
    %v1017 = vpop.permute.xlu0 %1016
    %v1019 = vmul.f32 %v1012, %v1017
    %1021 = vrot.lane.b32.xlu0 %v1019, 32
    %v1022 = vpop.permute.xlu0 %1021
    %v1024 = vadd.f32 %v1014, %v1022
    %v1025 = vtanh.pop %v1024
    %1027 = vrot.lane.b32.xlu0 %v1025, 64
    %v1028 = vpop.permute.xlu0 %1027
    %v1030 = vmul.f32 %v1012, %v1028
    %v1031 = vpack.c.bf16 %v1030, %v1030
    %v1033 = vunpack.c.l.b16 %v1031
    %v1034 = vpack.c.b16 %v1033, %v1033
    %1035 = vrot.lane.b32.xlu0 %v1034, 32
    %v1036 = vpop.permute.xlu0 %1035
    %s1038 = scalar_lea.vmem [#allocation2], 28
    %1039 = vst.msk [vmem:[%s1038] sm:$0xf] %vm235, %v1036
    %v1040 = vld [vmem:[#allocation2] sm:$0xf]
    %v1041 = vld [vmem:[#allocation2 + $0x4] sm:$0xf]
    %v1042 = vld [vmem:[#allocation2 + $0x8] sm:$0xf]
    %v1043 = vld [vmem:[#allocation2 + $0xc] sm:$0xf]
    %v1044 = vld [vmem:[#allocation2 + $0x10] sm:$0xf]
    %v1045 = vld [vmem:[#allocation2 + $0x14] sm:$0xf]
    %v1046 = vld [vmem:[#allocation2 + $0x18] sm:$0xf]
    %v1047 = vld [vmem:[#allocation2 + $0x1c] sm:$0xf]
    %s1048 = scalar_lea.vmem %s3, 16
    %v1049 = vld [vmem:[%s1048] sm:$0xf]
    %v1050 = vld [vmem:[%s1048 + $0x4] sm:$0xf]
    %v1051 = vld [vmem:[%s1048 + $0x8] sm:$0xf]
    %v1052 = vld [vmem:[%s1048 + $0xc] sm:$0xf]
    %s1053 = scalar_lea.vmem %s5, 1
    %v1054 = vld [vmem:[%s1053] sm:$0x1]
    %v1056 = vlaneseq
    %v1057 = vshrl.u32 %v1056, 7
    %v1058 = vsub.s32 0, %v1057
    %v1059 = vrot.slane %v1054, %v1058
    %v1069 = vunpack.c.l.b16 %v1040
    %v1070 = vunpack.c.l.b16 %v1041
    %v1071 = vunpack.c.l.b16 %v1042
    %v1072 = vunpack.c.l.b16 %v1043
    %v1073 = vunpack.c.l.b16 %v1044
    %v1074 = vunpack.c.l.b16 %v1045
    %v1075 = vunpack.c.l.b16 %v1046
    %v1076 = vunpack.c.l.b16 %v1047
    %v1077 = vpack.c.b16 %v1070, %v1069
    %v1078 = vpack.c.b16 %v1072, %v1071
    %v1079 = vpack.c.b16 %v1074, %v1073
    %v1080 = vpack.c.b16 %v1076, %v1075
    %v1085 = vunpack.c.l.b16 %v1049
    %v1086 = vunpack.c.l.b16 %v1050
    %v1087 = vunpack.c.l.b16 %v1051
    %v1088 = vunpack.c.l.b16 %v1052
    %v1089 = vpack.c.b16 %v1086, %v1085
    %v1090 = vpack.c.b16 %v1088, %v1087
    %v1094 = vsel %vm69, %v1077, 0
    %v1097 = vsel %vm69, %v1078, 0
    %v1100 = vsel %vm69, %v1079, 0
    %v1103 = vsel %vm69, %v1080, 0
    %1105 = vmatprep.subr.bf16.mxu0 0
    %1106 = vmatpush1.bf16.msra.mxu0 0
    %1107 = vmatprep.subr.bf16.mxu0 0
    %1108 = vmatpush1.bf16.msra.mxu0 0
    %1109 = vmatprep.subr.bf16.mxu0 0
    %1110 = vmatpush1.bf16.msra.mxu0 0
    %1111 = vmatprep.subr.bf16.mxu0 0
    %1112 = vmatpush1.bf16.msra.mxu0 0
    %1113 = vmatprep.subr.bf16.mxu0 0
    %1114 = vmatpush1.bf16.msra.mxu0 0
    %1115 = vmatprep.subr.bf16.mxu0 0
    %1116 = vmatpush1.bf16.msra.mxu0 0
    %1117 = vmatprep.subr.bf16.mxu0 0
    %1118 = vmatpush1.bf16.msra.mxu0 %v1090
    %1119 = vmatprep.subr.bf16.mxu0 0
    %1120 = vmatpush1.bf16.msra.mxu0 %v1089
    %1121 = vmatprep.subr.bf16.mxu0 0
    %1122 = vmatpush2.bf16.msra.mxu0 0
    %1123 = vmatprep.subr.bf16.mxu0 0
    %1124 = vmatpush2.bf16.msra.mxu0 0
    %1125 = vmatprep.subr.bf16.mxu0 0
    %1126 = vmatpush2.bf16.msra.mxu0 0
    %1127 = vmatprep.subr.bf16.mxu0 0
    %1128 = vmatpush2.bf16.msra.mxu0 0
    %1129 = vmatprep.subr.bf16.mxu0 0
    %1130 = vmatpush2.bf16.msra.mxu0 0
    %1131 = vmatprep.subr.bf16.mxu0 0
    %1132 = vmatpush2.bf16.msra.mxu0 0
    %1133 = vmatprep.subr.bf16.mxu0 0
    %1134 = vmatpush2.bf16.msra.mxu0 0
    %1135 = vmatprep.subr.bf16.mxu0 0
    %1136 = vmatpush2.bf16.msra.mxu0 0
    %1137 = vmatprep.mubr.bf16.mxu0 0
    %1138 = vmatmul.mubr.bf16.gmra.mxu0 %v1094
    %v1139 = vpop.f32.mrf.mxu0
    %v1140 = vadd.f32 %v1059, %v1139
    %v1141 = vpop.f32.mrf.mxu0
    %v1142 = vpop.f32.mrf.mxu0
    %v1143 = vadd.f32 %v1059, %v1142
    %v1144 = vpop.f32.mrf.mxu0
    %1145 = vmatprep.mubr.bf16.mxu0 0
    %1146 = vmatmul.mubr.bf16.gmra.mxu0 %v1097
    %v1147 = vpop.f32.mrf.mxu0
    %v1148 = vadd.f32 %v1059, %v1147
    %v1149 = vpop.f32.mrf.mxu0
    %v1150 = vpop.f32.mrf.mxu0
    %v1151 = vadd.f32 %v1059, %v1150
    %v1152 = vpop.f32.mrf.mxu0
    %1153 = vmatprep.mubr.bf16.mxu0 0
    %1154 = vmatmul.mubr.bf16.gmra.mxu0 %v1100
    %v1155 = vpop.f32.mrf.mxu0
    %v1156 = vadd.f32 %v1059, %v1155
    %v1157 = vpop.f32.mrf.mxu0
    %v1158 = vpop.f32.mrf.mxu0
    %v1159 = vadd.f32 %v1059, %v1158
    %v1160 = vpop.f32.mrf.mxu0
    %1161 = vmatprep.mubr.bf16.mxu0 0
    %1162 = vmatmul.mubr.bf16.gmra.mxu0 %v1103
    %v1163 = vpop.f32.mrf.mxu0
    %v1164 = vadd.f32 %v1059, %v1163
    %v1165 = vpop.f32.mrf.mxu0
    %v1166 = vpop.f32.mrf.mxu0
    %v1167 = vadd.f32 %v1059, %v1166
    %v1168 = vpop.f32.mrf.mxu0
    %1169 = vdwg.mxu0
    %1170 = vst [vmem:[#allocation3] sm:$0xff] %v1140
    %1171 = vst [vmem:[#allocation3 + $0x8] sm:$0xff] %v1143
    %1172 = vst [vmem:[#allocation3 + $0x10] sm:$0xff] %v1148
    %1173 = vst [vmem:[#allocation3 + $0x18] sm:$0xff] %v1151
    %1174 = vst [vmem:[#allocation3 + $0x20] sm:$0xff] %v1156
    %1175 = vst [vmem:[#allocation3 + $0x28] sm:$0xff] %v1159
    %1176 = vst [vmem:[#allocation3 + $0x30] sm:$0xff] %v1164
    %1177 = vst [vmem:[#allocation3 + $0x38] sm:$0xff] %v1167
    %s1178 = scalar_lea.vmem [#allocation4], 16
    %v1179 = vld [vmem:[%s1178] sm:$0xf]
    %v1180 = vld [vmem:[%s1178 + $0x4] sm:$0xf]
    %v1181 = vld [vmem:[%s1178 + $0x8] sm:$0xf]
    %v1182 = vld [vmem:[%s1178 + $0xc] sm:$0xf]
    %v1183 = vld [vmem:[#allocation3] sm:$0xff]
    %v1188 = vunpack.c.l.b16 %v1179
    %v1189 = vunpack.c.l.b16 %v1180
    %v1190 = vunpack.c.l.b16 %v1181
    %v1191 = vunpack.c.l.b16 %v1182
    %v1192 = vpack.c.b16 %v1189, %v1188
    %v1193 = vpack.c.b16 %v1191, %v1190
    %1196 = vmatprep.subr.bf16.mxu0 0
    %1197 = vmatpush1.bf16.msra.mxu0 0
    %1198 = vmatprep.subr.bf16.mxu0 0
    %1199 = vmatpush1.bf16.msra.mxu0 0
    %1200 = vmatprep.subr.bf16.mxu0 0
    %1201 = vmatpush1.bf16.msra.mxu0 0
    %1202 = vmatprep.subr.bf16.mxu0 0
    %1203 = vmatpush1.bf16.msra.mxu0 0
    %1204 = vmatprep.subr.bf16.mxu0 0
    %1205 = vmatpush1.bf16.msra.mxu0 0
    %1206 = vmatprep.subr.bf16.mxu0 0
    %1207 = vmatpush1.bf16.msra.mxu0 0
    %1208 = vmatprep.subr.bf16.mxu0 0
    %1209 = vmatpush1.bf16.msra.mxu0 %v1193
    %1210 = vmatprep.subr.bf16.mxu0 0
    %1211 = vmatpush1.bf16.msra.mxu0 %v1192
    %1212 = vmatprep.subr.bf16.mxu0 0
    %1213 = vmatpush2.bf16.msra.mxu0 0
    %1214 = vmatprep.subr.bf16.mxu0 0
    %1215 = vmatpush2.bf16.msra.mxu0 0
    %1216 = vmatprep.subr.bf16.mxu0 0
    %1217 = vmatpush2.bf16.msra.mxu0 0
    %1218 = vmatprep.subr.bf16.mxu0 0
    %1219 = vmatpush2.bf16.msra.mxu0 0
    %1220 = vmatprep.subr.bf16.mxu0 0
    %1221 = vmatpush2.bf16.msra.mxu0 0
    %1222 = vmatprep.subr.bf16.mxu0 0
    %1223 = vmatpush2.bf16.msra.mxu0 0
    %1224 = vmatprep.subr.bf16.mxu0 0
    %1225 = vmatpush2.bf16.msra.mxu0 0
    %1226 = vmatprep.subr.bf16.mxu0 0
    %1227 = vmatpush2.bf16.msra.mxu0 0
    %1228 = vmatprep.mubr.bf16.mxu0 0
    %1229 = vmatmul.mubr.bf16.gmra.mxu0 %v398
    %v1230 = vpop.f32.mrf.mxu0
    %v1231 = vadd.f32 0.0, %v1230
    %v1232 = vpop.f32.mrf.mxu0
    %v1233 = vpop.f32.mrf.mxu0
    %v1234 = vpop.f32.mrf.mxu0
    %1235 = vdwg.mxu0
    %v1236 = vadd.f32 %v1183, %v1231
    %v1237 = vxor.u32 %v1236, 2147483648
    %v1238 = vmul.f32 %v1237, 1.442695
    %v1239 = vpow.pop %v1238
    %v1240 = vadd.f32 %v1239, 1.0
    %v1241 = vrcp.pop %v1240
    %v1242 = vmul.f32 1.0, %v1241
    %v1243 = vtanh.pop %v1236
    %v1244 = vmul.f32 %v1242, 0.0
    %1246 = vrot.lane.b32.xlu0 %v1243, 64
    %v1247 = vpop.permute.xlu0 %1246
    %v1249 = vmul.f32 %v1242, %v1247
    %1251 = vrot.lane.b32.xlu0 %v1249, 32
    %v1252 = vpop.permute.xlu0 %1251
    %v1254 = vadd.f32 %v1244, %v1252
    %v1255 = vtanh.pop %v1254
    %1257 = vrot.lane.b32.xlu0 %v1255, 64
    %v1258 = vpop.permute.xlu0 %1257
    %v1260 = vmul.f32 %v1242, %v1258
    %v1261 = vpack.c.bf16 %v1260, %v1260
    %v1263 = vunpack.c.l.b16 %v1261
    %v1264 = vpack.c.b16 %v1263, %v1263
    %1265 = vrot.lane.b32.xlu0 %v1264, 32
    %v1266 = vpop.permute.xlu0 %1265
    %1268 = vst.msk [vmem:[#allocation2] sm:$0xf] %vm235, %v1266
    %v1269 = vld [vmem:[%s473] sm:$0xff]
    %1270 = vrot.lane.b32.xlu0 %v1261, 32
    %v1271 = vpop.permute.xlu0 %1270
    %v1273 = vsel %vm69, %v1271, 0
    %1275 = vmatprep.subr.bf16.mxu0 0
    %1276 = vmatpush1.bf16.msra.mxu0 0
    %1277 = vmatprep.subr.bf16.mxu0 0
    %1278 = vmatpush1.bf16.msra.mxu0 0
    %1279 = vmatprep.subr.bf16.mxu0 0
    %1280 = vmatpush1.bf16.msra.mxu0 0
    %1281 = vmatprep.subr.bf16.mxu0 0
    %1282 = vmatpush1.bf16.msra.mxu0 0
    %1283 = vmatprep.subr.bf16.mxu0 0
    %1284 = vmatpush1.bf16.msra.mxu0 0
    %1285 = vmatprep.subr.bf16.mxu0 0
    %1286 = vmatpush1.bf16.msra.mxu0 0
    %1287 = vmatprep.subr.bf16.mxu0 0
    %1288 = vmatpush1.bf16.msra.mxu0 %v1193
    %1289 = vmatprep.subr.bf16.mxu0 0
    %1290 = vmatpush1.bf16.msra.mxu0 %v1192
    %1291 = vmatprep.subr.bf16.mxu0 0
    %1292 = vmatpush2.bf16.msra.mxu0 0
    %1293 = vmatprep.subr.bf16.mxu0 0
    %1294 = vmatpush2.bf16.msra.mxu0 0
    %1295 = vmatprep.subr.bf16.mxu0 0
    %1296 = vmatpush2.bf16.msra.mxu0 0
    %1297 = vmatprep.subr.bf16.mxu0 0
    %1298 = vmatpush2.bf16.msra.mxu0 0
    %1299 = vmatprep.subr.bf16.mxu0 0
    %1300 = vmatpush2.bf16.msra.mxu0 0
    %1301 = vmatprep.subr.bf16.mxu0 0
    %1302 = vmatpush2.bf16.msra.mxu0 0
    %1303 = vmatprep.subr.bf16.mxu0 0
    %1304 = vmatpush2.bf16.msra.mxu0 0
    %1305 = vmatprep.subr.bf16.mxu0 0
    %1306 = vmatpush2.bf16.msra.mxu0 0
    %1307 = vmatprep.mubr.bf16.mxu0 0
    %1308 = vmatmul.mubr.bf16.gmra.mxu0 %v1273
    %v1309 = vpop.f32.mrf.mxu0
    %v1310 = vadd.f32 0.0, %v1309
    %v1311 = vpop.f32.mrf.mxu0
    %v1312 = vpop.f32.mrf.mxu0
    %v1313 = vpop.f32.mrf.mxu0
    %1314 = vdwg.mxu0
    %v1315 = vadd.f32 %v1269, %v1310
    %v1316 = vxor.u32 %v1315, 2147483648
    %v1317 = vmul.f32 %v1316, 1.442695
    %v1318 = vpow.pop %v1317
    %v1319 = vadd.f32 %v1318, 1.0
    %v1320 = vrcp.pop %v1319
    %v1321 = vmul.f32 1.0, %v1320
    %v1322 = vtanh.pop %v1315
    %v1323 = vmul.f32 %v1321, %v1254
    %1325 = vrot.lane.b32.xlu0 %v1322, 64
    %v1326 = vpop.permute.xlu0 %1325
    %v1328 = vmul.f32 %v1321, %v1326
    %1330 = vrot.lane.b32.xlu0 %v1328, 32
    %v1331 = vpop.permute.xlu0 %1330
    %v1333 = vadd.f32 %v1323, %v1331
    %v1334 = vtanh.pop %v1333
    %1336 = vrot.lane.b32.xlu0 %v1334, 64
    %v1337 = vpop.permute.xlu0 %1336
    %v1339 = vmul.f32 %v1321, %v1337
    %v1340 = vpack.c.bf16 %v1339, %v1339
    %v1342 = vunpack.c.l.b16 %v1340
    %v1343 = vpack.c.b16 %v1342, %v1342
    %1344 = vrot.lane.b32.xlu0 %v1343, 32
    %v1345 = vpop.permute.xlu0 %1344
    %1347 = vst.msk [vmem:[%s552] sm:$0xf] %vm235, %v1345
    %v1348 = vld [vmem:[%s554] sm:$0xff]
    %1349 = vrot.lane.b32.xlu0 %v1340, 32
    %v1350 = vpop.permute.xlu0 %1349
    %v1352 = vsel %vm69, %v1350, 0
    %1354 = vmatprep.subr.bf16.mxu0 0
    %1355 = vmatpush1.bf16.msra.mxu0 0
    %1356 = vmatprep.subr.bf16.mxu0 0
    %1357 = vmatpush1.bf16.msra.mxu0 0
    %1358 = vmatprep.subr.bf16.mxu0 0
    %1359 = vmatpush1.bf16.msra.mxu0 0
    %1360 = vmatprep.subr.bf16.mxu0 0
    %1361 = vmatpush1.bf16.msra.mxu0 0
    %1362 = vmatprep.subr.bf16.mxu0 0
    %1363 = vmatpush1.bf16.msra.mxu0 0
    %1364 = vmatprep.subr.bf16.mxu0 0
    %1365 = vmatpush1.bf16.msra.mxu0 0
    %1366 = vmatprep.subr.bf16.mxu0 0
    %1367 = vmatpush1.bf16.msra.mxu0 %v1193
    %1368 = vmatprep.subr.bf16.mxu0 0
    %1369 = vmatpush1.bf16.msra.mxu0 %v1192
    %1370 = vmatprep.subr.bf16.mxu0 0
    %1371 = vmatpush2.bf16.msra.mxu0 0
    %1372 = vmatprep.subr.bf16.mxu0 0
    %1373 = vmatpush2.bf16.msra.mxu0 0
    %1374 = vmatprep.subr.bf16.mxu0 0
    %1375 = vmatpush2.bf16.msra.mxu0 0
    %1376 = vmatprep.subr.bf16.mxu0 0
    %1377 = vmatpush2.bf16.msra.mxu0 0
    %1378 = vmatprep.subr.bf16.mxu0 0
    %1379 = vmatpush2.bf16.msra.mxu0 0
    %1380 = vmatprep.subr.bf16.mxu0 0
    %1381 = vmatpush2.bf16.msra.mxu0 0
    %1382 = vmatprep.subr.bf16.mxu0 0
    %1383 = vmatpush2.bf16.msra.mxu0 0
    %1384 = vmatprep.subr.bf16.mxu0 0
    %1385 = vmatpush2.bf16.msra.mxu0 0
    %1386 = vmatprep.mubr.bf16.mxu0 0
    %1387 = vmatmul.mubr.bf16.gmra.mxu0 %v1352
    %v1388 = vpop.f32.mrf.mxu0
    %v1389 = vadd.f32 0.0, %v1388
    %v1390 = vpop.f32.mrf.mxu0
    %v1391 = vpop.f32.mrf.mxu0
    %v1392 = vpop.f32.mrf.mxu0
    %1393 = vdwg.mxu0
    %v1394 = vadd.f32 %v1348, %v1389
    %v1395 = vxor.u32 %v1394, 2147483648
    %v1396 = vmul.f32 %v1395, 1.442695
    %v1397 = vpow.pop %v1396
    %v1398 = vadd.f32 %v1397, 1.0
    %v1399 = vrcp.pop %v1398
    %v1400 = vmul.f32 1.0, %v1399
    %v1401 = vtanh.pop %v1394
    %v1402 = vmul.f32 %v1400, %v1333
    %1404 = vrot.lane.b32.xlu0 %v1401, 64
    %v1405 = vpop.permute.xlu0 %1404
    %v1407 = vmul.f32 %v1400, %v1405
    %1409 = vrot.lane.b32.xlu0 %v1407, 32
    %v1410 = vpop.permute.xlu0 %1409
    %v1412 = vadd.f32 %v1402, %v1410
    %v1413 = vtanh.pop %v1412
    %1415 = vrot.lane.b32.xlu0 %v1413, 64
    %v1416 = vpop.permute.xlu0 %1415
    %v1418 = vmul.f32 %v1400, %v1416
    %v1419 = vpack.c.bf16 %v1418, %v1418
    %v1421 = vunpack.c.l.b16 %v1419
    %v1422 = vpack.c.b16 %v1421, %v1421
    %1423 = vrot.lane.b32.xlu0 %v1422, 32
    %v1424 = vpop.permute.xlu0 %1423
    %1426 = vst.msk [vmem:[%s633] sm:$0xf] %vm235, %v1424
    %v1427 = vld [vmem:[%s635] sm:$0xff]
    %1428 = vrot.lane.b32.xlu0 %v1419, 32
    %v1429 = vpop.permute.xlu0 %1428
    %v1431 = vsel %vm69, %v1429, 0
    %1433 = vmatprep.subr.bf16.mxu0 0
    %1434 = vmatpush1.bf16.msra.mxu0 0
    %1435 = vmatprep.subr.bf16.mxu0 0
    %1436 = vmatpush1.bf16.msra.mxu0 0
    %1437 = vmatprep.subr.bf16.mxu0 0
    %1438 = vmatpush1.bf16.msra.mxu0 0
    %1439 = vmatprep.subr.bf16.mxu0 0
    %1440 = vmatpush1.bf16.msra.mxu0 0
    %1441 = vmatprep.subr.bf16.mxu0 0
    %1442 = vmatpush1.bf16.msra.mxu0 0
    %1443 = vmatprep.subr.bf16.mxu0 0
    %1444 = vmatpush1.bf16.msra.mxu0 0
    %1445 = vmatprep.subr.bf16.mxu0 0
    %1446 = vmatpush1.bf16.msra.mxu0 %v1193
    %1447 = vmatprep.subr.bf16.mxu0 0
    %1448 = vmatpush1.bf16.msra.mxu0 %v1192
    %1449 = vmatprep.subr.bf16.mxu0 0
    %1450 = vmatpush2.bf16.msra.mxu0 0
    %1451 = vmatprep.subr.bf16.mxu0 0
    %1452 = vmatpush2.bf16.msra.mxu0 0
    %1453 = vmatprep.subr.bf16.mxu0 0
    %1454 = vmatpush2.bf16.msra.mxu0 0
    %1455 = vmatprep.subr.bf16.mxu0 0
    %1456 = vmatpush2.bf16.msra.mxu0 0
    %1457 = vmatprep.subr.bf16.mxu0 0
    %1458 = vmatpush2.bf16.msra.mxu0 0
    %1459 = vmatprep.subr.bf16.mxu0 0
    %1460 = vmatpush2.bf16.msra.mxu0 0
    %1461 = vmatprep.subr.bf16.mxu0 0
    %1462 = vmatpush2.bf16.msra.mxu0 0
    %1463 = vmatprep.subr.bf16.mxu0 0
    %1464 = vmatpush2.bf16.msra.mxu0 0
    %1465 = vmatprep.mubr.bf16.mxu0 0
    %1466 = vmatmul.mubr.bf16.gmra.mxu0 %v1431
    %v1467 = vpop.f32.mrf.mxu0
    %v1468 = vadd.f32 0.0, %v1467
    %v1469 = vpop.f32.mrf.mxu0
    %v1470 = vpop.f32.mrf.mxu0
    %v1471 = vpop.f32.mrf.mxu0
    %1472 = vdwg.mxu0
    %v1473 = vadd.f32 %v1427, %v1468
    %v1474 = vxor.u32 %v1473, 2147483648
    %v1475 = vmul.f32 %v1474, 1.442695
    %v1476 = vpow.pop %v1475
    %v1477 = vadd.f32 %v1476, 1.0
    %v1478 = vrcp.pop %v1477
    %v1479 = vmul.f32 1.0, %v1478
    %v1480 = vtanh.pop %v1473
    %v1481 = vmul.f32 %v1479, %v1412
    %1483 = vrot.lane.b32.xlu0 %v1480, 64
    %v1484 = vpop.permute.xlu0 %1483
    %v1486 = vmul.f32 %v1479, %v1484
    %1488 = vrot.lane.b32.xlu0 %v1486, 32
    %v1489 = vpop.permute.xlu0 %1488
    %v1491 = vadd.f32 %v1481, %v1489
    %v1492 = vtanh.pop %v1491
    %1494 = vrot.lane.b32.xlu0 %v1492, 64
    %v1495 = vpop.permute.xlu0 %1494
    %v1497 = vmul.f32 %v1479, %v1495
    %v1498 = vpack.c.bf16 %v1497, %v1497
    %v1500 = vunpack.c.l.b16 %v1498
    %v1501 = vpack.c.b16 %v1500, %v1500
    %1502 = vrot.lane.b32.xlu0 %v1501, 32
    %v1503 = vpop.permute.xlu0 %1502
    %1505 = vst.msk [vmem:[%s714] sm:$0xf] %vm235, %v1503
    %v1506 = vld [vmem:[%s716] sm:$0xff]
    %1507 = vrot.lane.b32.xlu0 %v1498, 32
    %v1508 = vpop.permute.xlu0 %1507
    %v1510 = vsel %vm69, %v1508, 0
    %1512 = vmatprep.subr.bf16.mxu0 0
    %1513 = vmatpush1.bf16.msra.mxu0 0
    %1514 = vmatprep.subr.bf16.mxu0 0
    %1515 = vmatpush1.bf16.msra.mxu0 0
    %1516 = vmatprep.subr.bf16.mxu0 0
    %1517 = vmatpush1.bf16.msra.mxu0 0
    %1518 = vmatprep.subr.bf16.mxu0 0
    %1519 = vmatpush1.bf16.msra.mxu0 0
    %1520 = vmatprep.subr.bf16.mxu0 0
    %1521 = vmatpush1.bf16.msra.mxu0 0
    %1522 = vmatprep.subr.bf16.mxu0 0
    %1523 = vmatpush1.bf16.msra.mxu0 0
    %1524 = vmatprep.subr.bf16.mxu0 0
    %1525 = vmatpush1.bf16.msra.mxu0 %v1193
    %1526 = vmatprep.subr.bf16.mxu0 0
    %1527 = vmatpush1.bf16.msra.mxu0 %v1192
    %1528 = vmatprep.subr.bf16.mxu0 0
    %1529 = vmatpush2.bf16.msra.mxu0 0
    %1530 = vmatprep.subr.bf16.mxu0 0
    %1531 = vmatpush2.bf16.msra.mxu0 0
    %1532 = vmatprep.subr.bf16.mxu0 0
    %1533 = vmatpush2.bf16.msra.mxu0 0
    %1534 = vmatprep.subr.bf16.mxu0 0
    %1535 = vmatpush2.bf16.msra.mxu0 0
    %1536 = vmatprep.subr.bf16.mxu0 0
    %1537 = vmatpush2.bf16.msra.mxu0 0
    %1538 = vmatprep.subr.bf16.mxu0 0
    %1539 = vmatpush2.bf16.msra.mxu0 0
    %1540 = vmatprep.subr.bf16.mxu0 0
    %1541 = vmatpush2.bf16.msra.mxu0 0
    %1542 = vmatprep.subr.bf16.mxu0 0
    %1543 = vmatpush2.bf16.msra.mxu0 0
    %1544 = vmatprep.mubr.bf16.mxu0 0
    %1545 = vmatmul.mubr.bf16.gmra.mxu0 %v1510
    %v1546 = vpop.f32.mrf.mxu0
    %v1547 = vadd.f32 0.0, %v1546
    %v1548 = vpop.f32.mrf.mxu0
    %v1549 = vpop.f32.mrf.mxu0
    %v1550 = vpop.f32.mrf.mxu0
    %1551 = vdwg.mxu0
    %v1552 = vadd.f32 %v1506, %v1547
    %v1553 = vxor.u32 %v1552, 2147483648
    %v1554 = vmul.f32 %v1553, 1.442695
    %v1555 = vpow.pop %v1554
    %v1556 = vadd.f32 %v1555, 1.0
    %v1557 = vrcp.pop %v1556
    %v1558 = vmul.f32 1.0, %v1557
    %v1559 = vtanh.pop %v1552
    %v1560 = vmul.f32 %v1558, %v1491
    %1562 = vrot.lane.b32.xlu0 %v1559, 64
    %v1563 = vpop.permute.xlu0 %1562
    %v1565 = vmul.f32 %v1558, %v1563
    %1567 = vrot.lane.b32.xlu0 %v1565, 32
    %v1568 = vpop.permute.xlu0 %1567
    %v1570 = vadd.f32 %v1560, %v1568
    %v1571 = vtanh.pop %v1570
    %1573 = vrot.lane.b32.xlu0 %v1571, 64
    %v1574 = vpop.permute.xlu0 %1573
    %v1576 = vmul.f32 %v1558, %v1574
    %v1577 = vpack.c.bf16 %v1576, %v1576
    %v1579 = vunpack.c.l.b16 %v1577
    %v1580 = vpack.c.b16 %v1579, %v1579
    %1581 = vrot.lane.b32.xlu0 %v1580, 32
    %v1582 = vpop.permute.xlu0 %1581
    %1584 = vst.msk [vmem:[%s795] sm:$0xf] %vm235, %v1582
    %v1585 = vld [vmem:[%s797] sm:$0xff]
    %1586 = vrot.lane.b32.xlu0 %v1577, 32
    %v1587 = vpop.permute.xlu0 %1586
    %v1589 = vsel %vm69, %v1587, 0
    %1591 = vmatprep.subr.bf16.mxu0 0
    %1592 = vmatpush1.bf16.msra.mxu0 0
    %1593 = vmatprep.subr.bf16.mxu0 0
    %1594 = vmatpush1.bf16.msra.mxu0 0
    %1595 = vmatprep.subr.bf16.mxu0 0
    %1596 = vmatpush1.bf16.msra.mxu0 0
    %1597 = vmatprep.subr.bf16.mxu0 0
    %1598 = vmatpush1.bf16.msra.mxu0 0
    %1599 = vmatprep.subr.bf16.mxu0 0
    %1600 = vmatpush1.bf16.msra.mxu0 0
    %1601 = vmatprep.subr.bf16.mxu0 0
    %1602 = vmatpush1.bf16.msra.mxu0 0
    %1603 = vmatprep.subr.bf16.mxu0 0
    %1604 = vmatpush1.bf16.msra.mxu0 %v1193
    %1605 = vmatprep.subr.bf16.mxu0 0
    %1606 = vmatpush1.bf16.msra.mxu0 %v1192
    %1607 = vmatprep.subr.bf16.mxu0 0
    %1608 = vmatpush2.bf16.msra.mxu0 0
    %1609 = vmatprep.subr.bf16.mxu0 0
    %1610 = vmatpush2.bf16.msra.mxu0 0
    %1611 = vmatprep.subr.bf16.mxu0 0
    %1612 = vmatpush2.bf16.msra.mxu0 0
    %1613 = vmatprep.subr.bf16.mxu0 0
    %1614 = vmatpush2.bf16.msra.mxu0 0
    %1615 = vmatprep.subr.bf16.mxu0 0
    %1616 = vmatpush2.bf16.msra.mxu0 0
    %1617 = vmatprep.subr.bf16.mxu0 0
    %1618 = vmatpush2.bf16.msra.mxu0 0
    %1619 = vmatprep.subr.bf16.mxu0 0
    %1620 = vmatpush2.bf16.msra.mxu0 0
    %1621 = vmatprep.subr.bf16.mxu0 0
    %1622 = vmatpush2.bf16.msra.mxu0 0
    %1623 = vmatprep.mubr.bf16.mxu0 0
    %1624 = vmatmul.mubr.bf16.gmra.mxu0 %v1589
    %v1625 = vpop.f32.mrf.mxu0
    %v1626 = vadd.f32 0.0, %v1625
    %v1627 = vpop.f32.mrf.mxu0
    %v1628 = vpop.f32.mrf.mxu0
    %v1629 = vpop.f32.mrf.mxu0
    %1630 = vdwg.mxu0
    %v1631 = vadd.f32 %v1585, %v1626
    %v1632 = vxor.u32 %v1631, 2147483648
    %v1633 = vmul.f32 %v1632, 1.442695
    %v1634 = vpow.pop %v1633
    %v1635 = vadd.f32 %v1634, 1.0
    %v1636 = vrcp.pop %v1635
    %v1637 = vmul.f32 1.0, %v1636
    %v1638 = vtanh.pop %v1631
    %v1639 = vmul.f32 %v1637, %v1570
    %1641 = vrot.lane.b32.xlu0 %v1638, 64
    %v1642 = vpop.permute.xlu0 %1641
    %v1644 = vmul.f32 %v1637, %v1642
    %1646 = vrot.lane.b32.xlu0 %v1644, 32
    %v1647 = vpop.permute.xlu0 %1646
    %v1649 = vadd.f32 %v1639, %v1647
    %v1650 = vtanh.pop %v1649
    %1652 = vrot.lane.b32.xlu0 %v1650, 64
    %v1653 = vpop.permute.xlu0 %1652
    %v1655 = vmul.f32 %v1637, %v1653
    %v1656 = vpack.c.bf16 %v1655, %v1655
    %v1658 = vunpack.c.l.b16 %v1656
    %v1659 = vpack.c.b16 %v1658, %v1658
    %1660 = vrot.lane.b32.xlu0 %v1659, 32
    %v1661 = vpop.permute.xlu0 %1660
    %1663 = vst.msk [vmem:[%s876] sm:$0xf] %vm235, %v1661
    %v1664 = vld [vmem:[%s878] sm:$0xff]
    %1665 = vrot.lane.b32.xlu0 %v1656, 32
    %v1666 = vpop.permute.xlu0 %1665
    %v1668 = vsel %vm69, %v1666, 0
    %1670 = vmatprep.subr.bf16.mxu0 0
    %1671 = vmatpush1.bf16.msra.mxu0 0
    %1672 = vmatprep.subr.bf16.mxu0 0
    %1673 = vmatpush1.bf16.msra.mxu0 0
    %1674 = vmatprep.subr.bf16.mxu0 0
    %1675 = vmatpush1.bf16.msra.mxu0 0
    %1676 = vmatprep.subr.bf16.mxu0 0
    %1677 = vmatpush1.bf16.msra.mxu0 0
    %1678 = vmatprep.subr.bf16.mxu0 0
    %1679 = vmatpush1.bf16.msra.mxu0 0
    %1680 = vmatprep.subr.bf16.mxu0 0
    %1681 = vmatpush1.bf16.msra.mxu0 0
    %1682 = vmatprep.subr.bf16.mxu0 0
    %1683 = vmatpush1.bf16.msra.mxu0 %v1193
    %1684 = vmatprep.subr.bf16.mxu0 0
    %1685 = vmatpush1.bf16.msra.mxu0 %v1192
    %1686 = vmatprep.subr.bf16.mxu0 0
    %1687 = vmatpush2.bf16.msra.mxu0 0
    %1688 = vmatprep.subr.bf16.mxu0 0
    %1689 = vmatpush2.bf16.msra.mxu0 0
    %1690 = vmatprep.subr.bf16.mxu0 0
    %1691 = vmatpush2.bf16.msra.mxu0 0
    %1692 = vmatprep.subr.bf16.mxu0 0
    %1693 = vmatpush2.bf16.msra.mxu0 0
    %1694 = vmatprep.subr.bf16.mxu0 0
    %1695 = vmatpush2.bf16.msra.mxu0 0
    %1696 = vmatprep.subr.bf16.mxu0 0
    %1697 = vmatpush2.bf16.msra.mxu0 0
    %1698 = vmatprep.subr.bf16.mxu0 0
    %1699 = vmatpush2.bf16.msra.mxu0 0
    %1700 = vmatprep.subr.bf16.mxu0 0
    %1701 = vmatpush2.bf16.msra.mxu0 0
    %1702 = vmatprep.mubr.bf16.mxu0 0
    %1703 = vmatmul.mubr.bf16.gmra.mxu0 %v1668
    %v1704 = vpop.f32.mrf.mxu0
    %v1705 = vadd.f32 0.0, %v1704
    %v1706 = vpop.f32.mrf.mxu0
    %v1707 = vpop.f32.mrf.mxu0
    %v1708 = vpop.f32.mrf.mxu0
    %1709 = vdwg.mxu0
    %v1710 = vadd.f32 %v1664, %v1705
    %v1711 = vxor.u32 %v1710, 2147483648
    %v1712 = vmul.f32 %v1711, 1.442695
    %v1713 = vpow.pop %v1712
    %v1714 = vadd.f32 %v1713, 1.0
    %v1715 = vrcp.pop %v1714
    %v1716 = vmul.f32 1.0, %v1715
    %v1717 = vtanh.pop %v1710
    %v1718 = vmul.f32 %v1716, %v1649
    %1720 = vrot.lane.b32.xlu0 %v1717, 64
    %v1721 = vpop.permute.xlu0 %1720
    %v1723 = vmul.f32 %v1716, %v1721
    %1725 = vrot.lane.b32.xlu0 %v1723, 32
    %v1726 = vpop.permute.xlu0 %1725
    %v1728 = vadd.f32 %v1718, %v1726
    %v1729 = vtanh.pop %v1728
    %1731 = vrot.lane.b32.xlu0 %v1729, 64
    %v1732 = vpop.permute.xlu0 %1731
    %v1734 = vmul.f32 %v1716, %v1732
    %v1735 = vpack.c.bf16 %v1734, %v1734
    %v1737 = vunpack.c.l.b16 %v1735
    %v1738 = vpack.c.b16 %v1737, %v1737
    %1739 = vrot.lane.b32.xlu0 %v1738, 32
    %v1740 = vpop.permute.xlu0 %1739
    %1742 = vst.msk [vmem:[%s957] sm:$0xf] %vm235, %v1740
    %v1743 = vld [vmem:[%s959] sm:$0xff]
    %1744 = vrot.lane.b32.xlu0 %v1735, 32
    %v1745 = vpop.permute.xlu0 %1744
    %v1747 = vsel %vm69, %v1745, 0
    %1749 = vmatprep.subr.bf16.mxu0 0
    %1750 = vmatpush1.bf16.msra.mxu0 0
    %1751 = vmatprep.subr.bf16.mxu0 0
    %1752 = vmatpush1.bf16.msra.mxu0 0
    %1753 = vmatprep.subr.bf16.mxu0 0
    %1754 = vmatpush1.bf16.msra.mxu0 0
    %1755 = vmatprep.subr.bf16.mxu0 0
    %1756 = vmatpush1.bf16.msra.mxu0 0
    %1757 = vmatprep.subr.bf16.mxu0 0
    %1758 = vmatpush1.bf16.msra.mxu0 0
    %1759 = vmatprep.subr.bf16.mxu0 0
    %1760 = vmatpush1.bf16.msra.mxu0 0
    %1761 = vmatprep.subr.bf16.mxu0 0
    %1762 = vmatpush1.bf16.msra.mxu0 %v1193
    %1763 = vmatprep.subr.bf16.mxu0 0
    %1764 = vmatpush1.bf16.msra.mxu0 %v1192
    %1765 = vmatprep.subr.bf16.mxu0 0
    %1766 = vmatpush2.bf16.msra.mxu0 0
    %1767 = vmatprep.subr.bf16.mxu0 0
    %1768 = vmatpush2.bf16.msra.mxu0 0
    %1769 = vmatprep.subr.bf16.mxu0 0
    %1770 = vmatpush2.bf16.msra.mxu0 0
    %1771 = vmatprep.subr.bf16.mxu0 0
    %1772 = vmatpush2.bf16.msra.mxu0 0
    %1773 = vmatprep.subr.bf16.mxu0 0
    %1774 = vmatpush2.bf16.msra.mxu0 0
    %1775 = vmatprep.subr.bf16.mxu0 0
    %1776 = vmatpush2.bf16.msra.mxu0 0
    %1777 = vmatprep.subr.bf16.mxu0 0
    %1778 = vmatpush2.bf16.msra.mxu0 0
    %1779 = vmatprep.subr.bf16.mxu0 0
    %1780 = vmatpush2.bf16.msra.mxu0 0
    %1781 = vmatprep.mubr.bf16.mxu0 0
    %1782 = vmatmul.mubr.bf16.gmra.mxu0 %v1747
    %v1783 = vpop.f32.mrf.mxu0
    %v1784 = vadd.f32 0.0, %v1783
    %v1785 = vpop.f32.mrf.mxu0
    %v1786 = vpop.f32.mrf.mxu0
    %v1787 = vpop.f32.mrf.mxu0
    %1788 = vdwg.mxu0
    %v1789 = vadd.f32 %v1743, %v1784
    %v1790 = vxor.u32 %v1789, 2147483648
    %v1791 = vmul.f32 %v1790, 1.442695
    %v1792 = vpow.pop %v1791
    %v1793 = vadd.f32 %v1792, 1.0
    %v1794 = vrcp.pop %v1793
    %v1795 = vmul.f32 1.0, %v1794
    %v1796 = vtanh.pop %v1789
    %v1797 = vmul.f32 %v1795, %v1728
    %1799 = vrot.lane.b32.xlu0 %v1796, 64
    %v1800 = vpop.permute.xlu0 %1799
    %v1802 = vmul.f32 %v1795, %v1800
    %1804 = vrot.lane.b32.xlu0 %v1802, 32
    %v1805 = vpop.permute.xlu0 %1804
    %v1807 = vadd.f32 %v1797, %v1805
    %v1808 = vtanh.pop %v1807
    %1810 = vrot.lane.b32.xlu0 %v1808, 64
    %v1811 = vpop.permute.xlu0 %1810
    %v1813 = vmul.f32 %v1795, %v1811
    %v1814 = vpack.c.bf16 %v1813, %v1813
    %v1816 = vunpack.c.l.b16 %v1814
    %v1817 = vpack.c.b16 %v1816, %v1816
    %1818 = vrot.lane.b32.xlu0 %v1817, 32
    %v1819 = vpop.permute.xlu0 %1818
    %1821 = vst.msk [vmem:[%s1038] sm:$0xf] %vm235, %v1819
    %v1822 = vld [vmem:[#allocation2] sm:$0xf]
    %v1823 = vld [vmem:[#allocation2 + $0x4] sm:$0xf]
    %v1824 = vld [vmem:[#allocation2 + $0x8] sm:$0xf]
    %v1825 = vld [vmem:[#allocation2 + $0xc] sm:$0xf]
    %v1826 = vld [vmem:[#allocation2 + $0x10] sm:$0xf]
    %v1827 = vld [vmem:[#allocation2 + $0x14] sm:$0xf]
    %v1828 = vld [vmem:[#allocation2 + $0x18] sm:$0xf]
    %v1829 = vld [vmem:[#allocation2 + $0x1c] sm:$0xf]
    %v1830 = vunpack.c.l.bf16 %v1822
    %v1831 = vunpack.c.l.bf16 %v1823
    %v1832 = vunpack.c.l.bf16 %v1824
    %v1833 = vunpack.c.l.bf16 %v1825
    %v1834 = vunpack.c.l.bf16 %v1826
    %v1835 = vunpack.c.l.bf16 %v1827
    %v1836 = vunpack.c.l.bf16 %v1828
    %v1837 = vunpack.c.l.bf16 %v1829
    %v1838 = vld [vmem:[%s6] sm:$0x1]
    %v1839 = vld [vmem:[%s7] sm:$0x1]
    %v1840 = vsel %vm69, %v1830, 0.0
    %1841 = vadd.xlane.f32.xlu0 %v1840
    %v1842 = vpop.xlane.xlu0 %1841
    %v1843 = vsel %vm69, %v1831, 0.0
    %1844 = vadd.xlane.f32.xlu0 %v1843
    %v1845 = vpop.xlane.xlu0 %1844
    %v1846 = vsel %vm69, %v1832, 0.0
    %1847 = vadd.xlane.f32.xlu0 %v1846
    %v1848 = vpop.xlane.xlu0 %1847
    %v1849 = vsel %vm69, %v1833, 0.0
    %1850 = vadd.xlane.f32.xlu0 %v1849
    %v1851 = vpop.xlane.xlu0 %1850
    %v1852 = vsel %vm69, %v1834, 0.0
    %1853 = vadd.xlane.f32.xlu0 %v1852
    %v1854 = vpop.xlane.xlu0 %1853
    %v1855 = vsel %vm69, %v1835, 0.0
    %1856 = vadd.xlane.f32.xlu0 %v1855
    %v1857 = vpop.xlane.xlu0 %1856
    %v1858 = vsel %vm69, %v1836, 0.0
    %1859 = vadd.xlane.f32.xlu0 %v1858
    %v1860 = vpop.xlane.xlu0 %1859
    %v1861 = vsel %vm69, %v1837, 0.0
    %1862 = vadd.xlane.f32.xlu0 %v1861
    %v1863 = vpop.xlane.xlu0 %1862
    %v1864 = vmul.f32 %v1842, %v94
    %v1865 = vmul.f32 %v1845, %v94
    %v1866 = vmul.f32 %v1848, %v94
    %v1867 = vmul.f32 %v1851, %v94
    %v1868 = vmul.f32 %v1854, %v94
    %v1869 = vmul.f32 %v1857, %v94
    %v1870 = vmul.f32 %v1860, %v94
    %v1871 = vmul.f32 %v1863, %v94
    %v1872 = vsub.f32 %v1830, %v1864
    %v1873 = vsub.f32 %v1831, %v1865
    %v1874 = vsub.f32 %v1832, %v1866
    %v1875 = vsub.f32 %v1833, %v1867
    %v1876 = vsub.f32 %v1834, %v1868
    %v1877 = vsub.f32 %v1835, %v1869
    %v1878 = vsub.f32 %v1836, %v1870
    %v1879 = vsub.f32 %v1837, %v1871
    %v1880 = vmul.f32 %v1872, %v1872
    %v1881 = vmul.f32 %v1873, %v1873
    %v1882 = vmul.f32 %v1874, %v1874
    %v1883 = vmul.f32 %v1875, %v1875
    %v1884 = vmul.f32 %v1876, %v1876
    %v1885 = vmul.f32 %v1877, %v1877
    %v1886 = vmul.f32 %v1878, %v1878
    %v1887 = vmul.f32 %v1879, %v1879
    %v1888 = vsel %vm69, %v1880, 0.0
    %1889 = vadd.xlane.f32.xlu0 %v1888
    %v1890 = vpop.xlane.xlu0 %1889
    %v1891 = vsel %vm69, %v1881, 0.0
    %1892 = vadd.xlane.f32.xlu0 %v1891
    %v1893 = vpop.xlane.xlu0 %1892
    %v1894 = vsel %vm69, %v1882, 0.0
    %1895 = vadd.xlane.f32.xlu0 %v1894
    %v1896 = vpop.xlane.xlu0 %1895
    %v1897 = vsel %vm69, %v1883, 0.0
    %1898 = vadd.xlane.f32.xlu0 %v1897
    %v1899 = vpop.xlane.xlu0 %1898
    %v1900 = vsel %vm69, %v1884, 0.0
    %1901 = vadd.xlane.f32.xlu0 %v1900
    %v1902 = vpop.xlane.xlu0 %1901
    %v1903 = vsel %vm69, %v1885, 0.0
    %1904 = vadd.xlane.f32.xlu0 %v1903
    %v1905 = vpop.xlane.xlu0 %1904
    %v1906 = vsel %vm69, %v1886, 0.0
    %1907 = vadd.xlane.f32.xlu0 %v1906
    %v1908 = vpop.xlane.xlu0 %1907
    %v1909 = vsel %vm69, %v1887, 0.0
    %1910 = vadd.xlane.f32.xlu0 %v1909
    %v1911 = vpop.xlane.xlu0 %1910
    %v1912 = vmul.f32 %v1890, %v94
    %v1913 = vmul.f32 %v1893, %v94
    %v1914 = vmul.f32 %v1896, %v94
    %v1915 = vmul.f32 %v1899, %v94
    %v1916 = vmul.f32 %v1902, %v94
    %v1917 = vmul.f32 %v1905, %v94
    %v1918 = vmul.f32 %v1908, %v94
    %v1919 = vmul.f32 %v1911, %v94
    %v1920 = vadd.f32 %v1912, 1e-05
    %v1921 = vadd.f32 %v1913, 1e-05
    %v1922 = vadd.f32 %v1914, 1e-05
    %v1923 = vadd.f32 %v1915, 1e-05
    %v1924 = vadd.f32 %v1916, 1e-05
    %v1925 = vadd.f32 %v1917, 1e-05
    %v1926 = vadd.f32 %v1918, 1e-05
    %v1927 = vadd.f32 %v1919, 1e-05
    %v1928 = vrsqrt.pop %v1920
    %v1929 = vrsqrt.pop %v1921
    %v1930 = vrsqrt.pop %v1922
    %v1931 = vrsqrt.pop %v1923
    %v1932 = vrsqrt.pop %v1924
    %v1933 = vrsqrt.pop %v1925
    %v1934 = vrsqrt.pop %v1926
    %v1935 = vrsqrt.pop %v1927
    %v1936 = vmul.f32 %v1872, %v1928
    %v1937 = vmul.f32 %v1873, %v1929
    %v1938 = vmul.f32 %v1874, %v1930
    %v1939 = vmul.f32 %v1875, %v1931
    %v1940 = vmul.f32 %v1876, %v1932
    %v1941 = vmul.f32 %v1877, %v1933
    %v1942 = vmul.f32 %v1878, %v1934
    %v1943 = vmul.f32 %v1879, %v1935
    %v1945 = vlaneseq
    %v1946 = vshrl.u32 %v1945, 7
    %v1947 = vsub.s32 0, %v1946
    %v1948 = vrot.slane %v1838, %v1947
    %v1950 = vmul.f32 %v1936, %v1948
    %v1951 = vmul.f32 %v1937, %v1948
    %v1952 = vmul.f32 %v1938, %v1948
    %v1953 = vmul.f32 %v1939, %v1948
    %v1954 = vmul.f32 %v1940, %v1948
    %v1955 = vmul.f32 %v1941, %v1948
    %v1956 = vmul.f32 %v1942, %v1948
    %v1957 = vmul.f32 %v1943, %v1948
    %v1959 = vlaneseq
    %v1960 = vshrl.u32 %v1959, 7
    %v1961 = vsub.s32 0, %v1960
    %v1962 = vrot.slane %v1839, %v1961
    %v1964 = vadd.f32 %v1950, %v1962
    %v1965 = vadd.f32 %v1951, %v1962
    %v1966 = vadd.f32 %v1952, %v1962
    %v1967 = vadd.f32 %v1953, %v1962
    %v1968 = vadd.f32 %v1954, %v1962
    %v1969 = vadd.f32 %v1955, %v1962
    %v1970 = vadd.f32 %v1956, %v1962
    %v1971 = vadd.f32 %v1957, %v1962
    %v1972 = vpack.c.bf16 %v1965, %v1964
    %v1973 = vpack.c.bf16 %v1967, %v1966
    %v1974 = vpack.c.bf16 %v1969, %v1968
    %v1975 = vpack.c.bf16 %v1971, %v1970
    %v1976 = vld [vmem:[%s8] sm:$0xf]
    %v1977 = vld [vmem:[%s8 + $0x4] sm:$0xf]
    %v1978 = vld [vmem:[%s8 + $0x8] sm:$0xf]
    %v1979 = vld [vmem:[%s8 + $0xc] sm:$0xf]
    %v1980 = vld [vmem:[%s9] sm:$0x1]
    %v1982 = vlaneseq
    %v1983 = vshrl.u32 %v1982, 7
    %v1984 = vsub.s32 0, %v1983
    %v1985 = vrot.slane %v1980, %v1984
    %v1991 = vunpack.c.l.b16 %v1976
    %v1992 = vunpack.c.l.b16 %v1977
    %v1993 = vunpack.c.l.b16 %v1978
    %v1994 = vunpack.c.l.b16 %v1979
    %v1995 = vpack.c.b16 %v1992, %v1991
    %v1996 = vpack.c.b16 %v1994, %v1993
    %v2000 = vsel %vm69, %v1972, 0
    %v2003 = vsel %vm69, %v1973, 0
    %v2006 = vsel %vm69, %v1974, 0
    %v2009 = vsel %vm69, %v1975, 0
    %2011 = vmatprep.subr.bf16.mxu0 0
    %2012 = vmatpush1.bf16.msra.mxu0 0
    %2013 = vmatprep.subr.bf16.mxu0 0
    %2014 = vmatpush1.bf16.msra.mxu0 0
    %2015 = vmatprep.subr.bf16.mxu0 0
    %2016 = vmatpush1.bf16.msra.mxu0 0
    %2017 = vmatprep.subr.bf16.mxu0 0
    %2018 = vmatpush1.bf16.msra.mxu0 0
    %2019 = vmatprep.subr.bf16.mxu0 0
    %2020 = vmatpush1.bf16.msra.mxu0 0
    %2021 = vmatprep.subr.bf16.mxu0 0
    %2022 = vmatpush1.bf16.msra.mxu0 0
    %2023 = vmatprep.subr.bf16.mxu0 0
    %2024 = vmatpush1.bf16.msra.mxu0 %v1996
    %2025 = vmatprep.subr.bf16.mxu0 0
    %2026 = vmatpush1.bf16.msra.mxu0 %v1995
    %2027 = vmatprep.subr.bf16.mxu0 0
    %2028 = vmatpush2.bf16.msra.mxu0 0
    %2029 = vmatprep.subr.bf16.mxu0 0
    %2030 = vmatpush2.bf16.msra.mxu0 0
    %2031 = vmatprep.subr.bf16.mxu0 0
    %2032 = vmatpush2.bf16.msra.mxu0 0
    %2033 = vmatprep.subr.bf16.mxu0 0
    %2034 = vmatpush2.bf16.msra.mxu0 0
    %2035 = vmatprep.subr.bf16.mxu0 0
    %2036 = vmatpush2.bf16.msra.mxu0 0
    %2037 = vmatprep.subr.bf16.mxu0 0
    %2038 = vmatpush2.bf16.msra.mxu0 0
    %2039 = vmatprep.subr.bf16.mxu0 0
    %2040 = vmatpush2.bf16.msra.mxu0 0
    %2041 = vmatprep.subr.bf16.mxu0 0
    %2042 = vmatpush2.bf16.msra.mxu0 0
    %2043 = vmatprep.mubr.bf16.mxu0 0
    %2044 = vmatmul.mubr.bf16.gmra.mxu0 %v2000
    %v2045 = vpop.f32.mrf.mxu0
    %v2046 = vadd.f32 %v1985, %v2045
    %v2047 = vpop.f32.mrf.mxu0
    %v2048 = vpop.f32.mrf.mxu0
    %v2049 = vadd.f32 %v1985, %v2048
    %v2050 = vpop.f32.mrf.mxu0
    %2051 = vmatprep.mubr.bf16.mxu0 0
    %2052 = vmatmul.mubr.bf16.gmra.mxu0 %v2003
    %v2053 = vpop.f32.mrf.mxu0
    %v2054 = vadd.f32 %v1985, %v2053
    %v2055 = vpop.f32.mrf.mxu0
    %v2056 = vpop.f32.mrf.mxu0
    %v2057 = vadd.f32 %v1985, %v2056
    %v2058 = vpop.f32.mrf.mxu0
    %2059 = vmatprep.mubr.bf16.mxu0 0
    %2060 = vmatmul.mubr.bf16.gmra.mxu0 %v2006
    %v2061 = vpop.f32.mrf.mxu0
    %v2062 = vadd.f32 %v1985, %v2061
    %v2063 = vpop.f32.mrf.mxu0
    %v2064 = vpop.f32.mrf.mxu0
    %v2065 = vadd.f32 %v1985, %v2064
    %v2066 = vpop.f32.mrf.mxu0
    %2067 = vmatprep.mubr.bf16.mxu0 0
    %2068 = vmatmul.mubr.bf16.gmra.mxu0 %v2009
    %v2069 = vpop.f32.mrf.mxu0
    %v2070 = vadd.f32 %v1985, %v2069
    %v2071 = vpop.f32.mrf.mxu0
    %v2072 = vpop.f32.mrf.mxu0
    %v2073 = vadd.f32 %v1985, %v2072
    %v2074 = vpop.f32.mrf.mxu0
    %2075 = vdwg.mxu0
    %2076 = vst [vmem:[#allocation7] sm:$0xff] %v2046
    %2077 = vst [vmem:[#allocation7 + $0x8] sm:$0xff] %v2049
    %2078 = vst [vmem:[#allocation7 + $0x10] sm:$0xff] %v2054
    %2079 = vst [vmem:[#allocation7 + $0x18] sm:$0xff] %v2057
    %2080 = vst [vmem:[#allocation7 + $0x20] sm:$0xff] %v2062
    %2081 = vst [vmem:[#allocation7 + $0x28] sm:$0xff] %v2065
    %2082 = vst [vmem:[#allocation7 + $0x30] sm:$0xff] %v2070
    %2083 = vst [vmem:[#allocation7 + $0x38] sm:$0xff] %v2073
    // Predicated region
    $region46: #{tpu_custom_call.1} parent=1 // pred_check
      _
    $region47: #{tpu_custom_call.1} parent=1 // pred_check_branch
      %2085 = sbr.rel (0) target = $region49
    $region48: #{tpu_custom_call.1} parent=1 // pred_region
      %s2087 = ssub.s32 1024, 1024
      %2088 = vsyncadd [#allocation6], %s2087
      %s2089 = sshll.u32 [#allocation7], 4
      %s2090 = int_to_ptr.vmem [resolvable:$true] %s2089
      %2095 = dma.vmem_to_hbm [thread:$0]  %s2090, 1024, %s10, [#allocation6], 128, 128, 8
    $region49: #{tpu_custom_call.1} parent=1 // pred_fallthru
      _
    // Predicated region
    $region50: #{tpu_custom_call.1} parent=1 // pred_check
      _
    $region51: #{tpu_custom_call.1} parent=1 // pred_check_branch
      %2097 = sbr.rel (0) target = $region53
    $region52: #{tpu_custom_call.1} parent=1 // pred_region
      %2098 = dma.done [#allocation6], 1024
    $region53: #{tpu_custom_call.1} parent=1 // pred_fallthru
      _
    %2099 = vsyncpa [#allocation5], 1
    %2100 = vsyncpa [#allocation6], 1

</llo_original>
